<compile_context>
chip_gen: v5e
topology: v5e:2x2
jax: 0.10.0
libtpu: 0.0.40
codegen_flags: <defaults>
</compile_context>

<pallas_src>
import math
from functools import partial

import jax
import jax.numpy as jnp
from jax.experimental import pallas as pl
from jax.experimental.pallas import tpu as pltpu


# ----------------------------------------------------------------------------
# Fused kernel: conv_a + conv_pose + folded BN + sigmoid + SelfRouting2d (l=1)
# ----------------------------------------------------------------------------
def _capsnet_kernel(x_ref, wa_ref, wp_ref, a_scale_ref, a_shift_ref,
                    p_scale_ref, p_shift_ref, amask_ref,
                    w1_ref, w2_ref, b2_ref, aout_ref, pout_ref,
                    *, H, Wp, A, C, Bc, D):
    """One batch element per grid step.

    x_ref      : (1, Cin, (H+2)*Wp + 2) bf16  flattened zero-padded image
    wa_ref     : (9, A,   Cin) bf16           conv_a weights per 3x3 tap
    wp_ref     : (9, A*C, Cin) bf16           conv_pose weights per 3x3 tap
    a_scale/shift : (A, 1)   f32              folded BN (activation branch)
    p_scale/shift : (A*C, 1) f32              folded BN (pose branch)
    amask_ref  : (1, kke) f32                 1 at real pixels, 0 at junk cols
    w1_ref     : (A, C, D, Bc, kke) f32       W1[p*A+a, j*D+d, c] -> [a,c,d,j,pe]
    w2_ref     : (A, C, Bc, kke) f32          W2[p*A+a, j, c]     -> [a,c,j,pe]
    b2_ref     : (A, Bc, kke) f32             b2[0,0,p*A+a, j]    -> [a,j,pe]
    aout_ref   : (1, Bc, 1) f32               pout_ref : (1, Bc, D) f32
    """
    kke = H * Wp
    Cin = x_ref.shape[1]
    AC = A * C

    # ---- both 3x3 convs: 9 accumulated small MXU dots (one per tap) -------
    ya = jnp.zeros((A, kke), jnp.float32)
    yp = jnp.zeros((AC, kke), jnp.float32)
    for t in range(9):
        di, dj = divmod(t, 3)
        off = di * Wp + dj                          # static lane offset
        xt = x_ref[0, :, off:off + kke]             # (Cin, kke) bf16
        ya = ya + jnp.dot(wa_ref[t], xt, preferred_element_type=jnp.float32)
        yp = yp + jnp.dot(wp_ref[t], xt, preferred_element_type=jnp.float32)

    # folded BN; sigmoid only on the A activation rows; zero the junk columns
    act = jax.nn.sigmoid(ya * a_scale_ref[...] + a_shift_ref[...]) * amask_ref[...]
    pose = yp * p_scale_ref[...] + p_shift_ref[...]          # (A*C, kke)

    # ---- SelfRouting2d, kernel == full spatial extent (l == 1) ------------
    ar_acc = jnp.zeros((Bc, kke), jnp.float32)      # sum_a a*r
    act_acc = jnp.zeros((1, kke), jnp.float32)      # sum_a a
    pv_acc = [jnp.zeros((Bc, kke), jnp.float32) for _ in range(D)]  # sum_a a*r*vote_d

    for a in range(A):                              # small, unrolled
        act_a = act[a:a + 1, :]                                    # (1, kke)
        pc = [pose[a * C + c: a * C + c + 1, :] for c in range(C)]  # (1, kke) each

        # routing logits + softmax over the output-capsule axis (sublanes)
        logit = b2_ref[a]                                          # (Bc, kke)
        for c in range(C):
            logit = logit + w2_ref[a, c] * pc[c]
        logit = logit - jnp.max(logit, axis=0, keepdims=True)
        e = jnp.exp(logit)
        r = e * pl.reciprocal(jnp.sum(e, axis=0, keepdims=True), approx=True)

        ar = act_a * r                                             # (Bc, kke)
        ar_acc = ar_acc + ar
        act_acc = act_acc + act_a
        for d in range(D):
            vote = w1_ref[a, 0, d] * pc[0]
            for c in range(1, C):
                vote = vote + w1_ref[a, c, d] * pc[c]
            pv_acc[d] = pv_acc[d] + ar * vote

    # deferred lane reductions (D + 2 of them, once per image)
    ar_sum = jnp.sum(ar_acc, axis=1, keepdims=True)                # (Bc, 1)
    act_sum = jnp.sum(act_acc, axis=1, keepdims=True)              # (1, 1)

    # NOTE: no epsilon in the divisions, matching the PyTorch module (the
    # activation comes from a sigmoid, so ar_sum / act_sum are strictly > 0).
    inv_ar = pl.reciprocal(ar_sum, approx=True)
    aout_ref[0] = ar_sum * pl.reciprocal(act_sum, approx=True)     # (Bc, 1)
    pout_ref[0] = jnp.concatenate(
        [jnp.sum(pv_acc[d], axis=1, keepdims=True) * inv_ar for d in range(D)],
        axis=1)                                                    # (Bc, D)


def capsnet_forward(x_nchw, params):
    A = params["num_caps"]
    C = params["caps_size"]
    Bc, D = A, C
    B, Cin, H, W = x_nchw.shape
    Wp = W + 2
    kke = H * Wp
    Lpad = (H + 2) * Wp + 2

    # the fc routing layer uses kernel_size == final_shape, padding 0 -> l == 1
    assert params["w1_r"].shape[-1] == kke, "final_shape must equal spatial size"

    # Host prep is O(input) only: zero-pad (1 row / 1 col each side), flatten
    # spatial, add 2 trailing zeros so every in-kernel tap slice is in bounds.
    xp = jnp.pad(x_nchw, ((0, 0), (0, 0), (1, 1), (1, 1)))          # (B,Cin,H+2,Wp)
    xflat = jnp.pad(xp.reshape(B, Cin, (H + 2) * Wp),
                    ((0, 0), (0, 0), (0, 2))).astype(jnp.bfloat16)  # (B,Cin,Lpad)

    a_out, p_out = pl.pallas_call(
        partial(_capsnet_kernel, H=H, Wp=Wp, A=A, C=C, Bc=Bc, D=D),
        out_shape=(jax.ShapeDtypeStruct((B, Bc, 1), jnp.float32),
                   jax.ShapeDtypeStruct((B, Bc, D), jnp.float32)),
        grid_spec=pltpu.PrefetchScalarGridSpec(
            num_scalar_prefetch=0,
            grid=(B,),
            in_specs=[
                pl.BlockSpec((1, Cin, Lpad), lambda b: (b, 0, 0)),
                pl.BlockSpec((9, A, Cin), lambda b: (0, 0, 0)),
                pl.BlockSpec((9, A * C, Cin), lambda b: (0, 0, 0)),
                pl.BlockSpec((A, 1), lambda b: (0, 0)),
                pl.BlockSpec((A, 1), lambda b: (0, 0)),
                pl.BlockSpec((A * C, 1), lambda b: (0, 0)),
                pl.BlockSpec((A * C, 1), lambda b: (0, 0)),
                pl.BlockSpec((1, kke), lambda b: (0, 0)),
                pl.BlockSpec((A, C, D, Bc, kke), lambda b: (0, 0, 0, 0, 0)),
                pl.BlockSpec((A, C, Bc, kke), lambda b: (0, 0, 0, 0)),
                pl.BlockSpec((A, Bc, kke), lambda b: (0, 0, 0)),
            ],
            out_specs=(pl.BlockSpec((1, Bc, 1), lambda b: (b, 0, 0)),
                       pl.BlockSpec((1, Bc, D), lambda b: (b, 0, 0))),
        ),
        compiler_params=pltpu.CompilerParams(
            dimension_semantics=("parallel",)),
    )(xflat, params["wa"], params["wp"],
      params["a_scale"], params["a_shift"], params["p_scale"], params["p_shift"],
      params["amask"], params["w1_r"], params["w2_r"], params["b2_r"])

    # torch: out -> (B, Bc); pose -> (B, Bc*D, 1, 1)
    return a_out.reshape(B, Bc), p_out.reshape(B, Bc * D, 1, 1)


# ----------------------------------------------------------------------------
# Parameters (deterministic, synthetic — shapes follow the torch __init__).
# Kernel-layout constants (per-tap conv weights, extended-spatial routing
# weights, activation mask) are built here once.
# ----------------------------------------------------------------------------
def make_params(key, in_channels, num_caps, caps_size, final_shape):
    A, C = num_caps, caps_size
    Bc, D = A, C
    H = W = final_shape
    Wp = W + 2
    kk = H * W
    kke = H * Wp
    kkA = kk * A
    ks = jax.random.split(key, 12)
    eps = 1e-5

    def bn_fold(kg, kb, km, kv, n):
        gamma = 1.0 + 0.1 * jax.random.normal(kg, (n,), jnp.float32)
        beta = 0.1 * jax.random.normal(kb, (n,), jnp.float32)
        mean = 0.1 * jax.random.normal(km, (n,), jnp.float32)
        var = jnp.abs(jax.random.normal(kv, (n,), jnp.float32)) * 0.1 + 1.0
        scale = gamma / jnp.sqrt(var + eps)
        shift = beta - mean * scale
        return scale, shift

    conv_a_w = jax.random.normal(ks[0], (A, in_channels, 3, 3),
                                 jnp.float32) * math.sqrt(2.0 / (in_channels * 9))
    conv_pose_w = jax.random.normal(ks[1], (A * C, in_channels, 3, 3),
                                    jnp.float32) * math.sqrt(2.0 / (in_channels * 9))
    bn_a_scale, bn_a_shift = bn_fold(ks[2], ks[3], ks[4], ks[5], A)
    bn_p_scale, bn_p_shift = bn_fold(ks[6], ks[7], ks[8], ks[9], A * C)

    # W2 / b2 are zero-initialized in the torch module; small random values are
    # used here so the softmax routing path is exercised non-trivially.
    W1 = jax.random.normal(ks[10], (kkA, Bc * D, C), jnp.float32) * math.sqrt(2.0 / C)
    W2 = 0.1 * jax.random.normal(ks[11], (kkA, Bc, C), jnp.float32)
    b2 = 0.05 * jax.random.normal(jax.random.fold_in(key, 99), (1, 1, kkA, Bc),
                                  jnp.float32)

    # ---- kernel-layout constants ----
    # per-tap conv weights: [t = di*3+dj, out_channel, in_channel]
    wa = jnp.transpose(conv_a_w, (2, 3, 0, 1)).reshape(9, A, in_channels)
    wp = jnp.transpose(conv_pose_w, (2, 3, 0, 1)).reshape(9, A * C, in_channels)
    wa = wa.astype(jnp.bfloat16)
    wp = wp.astype(jnp.bfloat16)
    a_scale = bn_a_scale.reshape(A, 1)
    a_shift = bn_a_shift.reshape(A, 1)
    p_scale = bn_p_scale.reshape(A * C, 1)
    p_shift = bn_p_shift.reshape(A * C, 1)

    # routing weights -> extended spatial layout: real pixel (r, c) lives at
    # lane pe = r*Wp + c, junk columns c in {W, W+1} are zero-padded.
    def pad_spatial(arr):
        lead = arr.shape[:-1]
        a2 = arr.reshape(lead + (H, W))
        a2 = jnp.pad(a2, [(0, 0)] * len(lead) + [(0, 0), (0, Wp - W)])
        return a2.reshape(lead + (kke,))

    # kkA index k = p*A + a  ->  (a, ..., pe) layouts
    w1_r = pad_spatial(jnp.transpose(W1.reshape(kk, A, Bc, D, C), (1, 4, 3, 2, 0)))
    w2_r = pad_spatial(jnp.transpose(W2.reshape(kk, A, Bc, C), (1, 3, 2, 0)))
    b2_r = pad_spatial(jnp.transpose(b2.reshape(kk, A, Bc), (1, 2, 0)))
    amask = pad_spatial(jnp.ones((1, kk), jnp.float32))

    return dict(
        # reference-layout (torch) parameters
        conv_a_w=conv_a_w, conv_pose_w=conv_pose_w,
        bn_a_scale=bn_a_scale, bn_a_shift=bn_a_shift,
        bn_pose_scale=bn_p_scale, bn_pose_shift=bn_p_shift,
        W1=W1, W2=W2, b2=b2,
        # kernel-layout constants
        wa=wa, wp=wp, a_scale=a_scale, a_shift=a_shift,
        p_scale=p_scale, p_shift=p_shift, amask=amask,
        w1_r=w1_r, w2_r=w2_r, b2_r=b2_r,
        num_caps=num_caps, caps_size=caps_size)


# ----------------------------------------------------------------------------
# Pure-JAX reference (mirrors the torch forward, for a correctness check)
# ----------------------------------------------------------------------------
def reference_forward(x, p):
    def conv(inp, w):
        return jax.lax.conv_general_dilated(
            inp, w, (1, 1), ((1, 1), (1, 1)),
            dimension_numbers=("NCHW", "OIHW", "NCHW"))

    a = conv(x, p["conv_a_w"])
    pose = conv(x, p["conv_pose_w"])
    a = jax.nn.sigmoid(a * p["bn_a_scale"][None, :, None, None]
                       + p["bn_a_shift"][None, :, None, None])
    pose = (pose * p["bn_pose_scale"][None, :, None, None]
            + p["bn_pose_shift"][None, :, None, None])

    Bsz, _, H, W = pose.shape
    A, C = p["num_caps"], p["caps_size"]
    Bc, D = A, C
    kk = H * W
    kkA = kk * A
    pose_u = jnp.transpose(pose.reshape(Bsz, A, C, kk), (0, 3, 1, 2)).reshape(Bsz, kkA, C)
    a_u = jnp.transpose(a.reshape(Bsz, A, kk), (0, 2, 1)).reshape(Bsz, kkA, 1)

    votes = jnp.einsum("kmc,bkc->bkm", p["W1"], pose_u).reshape(Bsz, kkA, Bc, D)
    logit = jnp.einsum("kjc,bkc->bkj", p["W2"], pose_u) + p["b2"].reshape(1, kkA, Bc)
    r = jax.nn.softmax(logit, axis=-1)
    ar = a_u * r
    ar_sum = ar.sum(axis=1, keepdims=True)
    coeff = (ar / ar_sum)[..., None]
    a_out = (ar_sum / a_u.sum(axis=1, keepdims=True))[:, 0, :]       # (Bsz, Bc)
    pose_out = (coeff * votes).sum(axis=1)                           # (Bsz, Bc, D)
    return a_out, pose_out.reshape(Bsz, Bc * D, 1, 1)


if __name__ == "__main__":
    # small, module-consistent shapes (final_shape must equal the spatial size
    # because the fc routing layer uses kernel_size=final_shape, padding=0)
    batch, in_channels, spatial = 2, 4, 16
    num_caps, caps_size, final_shape = 4, 4, spatial

    key = jax.random.PRNGKey(0)
    kx, kp = jax.random.split(key)
    x = jax.random.normal(kx, (batch, in_channels, spatial, spatial), jnp.float32)
    params = make_params(kp, in_channels, num_caps, caps_size, final_shape)

    out, pose = capsnet_forward(x, params)
    out, pose = jax.block_until_ready(out), jax.block_until_ready(pose)

    out_ref, pose_ref = reference_forward(x, params)
    assert out.shape == (batch, num_caps)
    assert pose.shape == (batch, num_caps * caps_size, 1, 1)
    # bf16 MXU conv inputs (f32 accumulation) + approx reciprocals vs. the
    # f32 reference.
    assert jnp.allclose(out, out_ref, atol=1e-2, rtol=2e-2)
    assert jnp.allclose(pose, pose_ref, atol=1e-2, rtol=2e-2)

    print("KERNEL_OK")
</pallas_src>

<mosaic_0001>
module attributes {stable_mosaic.version = 11 : i64} {
  func.func @_capsnet_kernel(%arg0: i32, %arg1: memref<1x4x326xbf16, #tpu.memory_space<vmem>>, %arg2: memref<9x4x4xbf16, #tpu.memory_space<vmem>>, %arg3: memref<9x16x4xbf16, #tpu.memory_space<vmem>>, %arg4: memref<4x1xf32, #tpu.memory_space<vmem>>, %arg5: memref<4x1xf32, #tpu.memory_space<vmem>>, %arg6: memref<16x1xf32, #tpu.memory_space<vmem>>, %arg7: memref<16x1xf32, #tpu.memory_space<vmem>>, %arg8: memref<1x288xf32, #tpu.memory_space<vmem>>, %arg9: memref<4x4x4x4x288xf32, #tpu.memory_space<vmem>>, %arg10: memref<4x4x4x288xf32, #tpu.memory_space<vmem>>, %arg11: memref<4x4x288xf32, #tpu.memory_space<vmem>>, %arg12: memref<1x4x1xf32, #tpu.memory_space<vmem>>, %arg13: memref<1x4x4xf32, #tpu.memory_space<vmem>>) attributes {dimension_semantics = [#tpu.dimension_semantics<parallel>], iteration_bounds = array<i64: 2>, scalar_prefetch = 0 : i64, scratch_operands = 0 : i64, tpu.core_type = #tpu.core_type<tc>, window_params = [{transform_indices = @transform_0, window_bounds = array<i64: 1, 4, 326>}, {pipeline_mode = #tpu.pipeline_mode<synchronous>, transform_indices = @transform_1, window_bounds = array<i64: 9, 4, 4>}, {pipeline_mode = #tpu.pipeline_mode<synchronous>, transform_indices = @transform_2, window_bounds = array<i64: 9, 16, 4>}, {pipeline_mode = #tpu.pipeline_mode<synchronous>, transform_indices = @transform_3, window_bounds = array<i64: 4, 1>}, {pipeline_mode = #tpu.pipeline_mode<synchronous>, transform_indices = @transform_4, window_bounds = array<i64: 4, 1>}, {pipeline_mode = #tpu.pipeline_mode<synchronous>, transform_indices = @transform_5, window_bounds = array<i64: 16, 1>}, {pipeline_mode = #tpu.pipeline_mode<synchronous>, transform_indices = @transform_6, window_bounds = array<i64: 16, 1>}, {pipeline_mode = #tpu.pipeline_mode<synchronous>, transform_indices = @transform_7, window_bounds = array<i64: 1, 288>}, {pipeline_mode = #tpu.pipeline_mode<synchronous>, transform_indices = @transform_8, window_bounds = array<i64: 4, 4, 4, 4, 288>}, {pipeline_mode = #tpu.pipeline_mode<synchronous>, transform_indices = @transform_9, window_bounds = array<i64: 4, 4, 4, 288>}, {pipeline_mode = #tpu.pipeline_mode<synchronous>, transform_indices = @transform_10, window_bounds = array<i64: 4, 4, 288>}, {transform_indices = @transform_11, window_bounds = array<i64: 1, 4, 1>}, {transform_indices = @transform_12, window_bounds = array<i64: 1, 4, 4>}]} {
    %cst = arith.constant 0.000000e+00 : f32
    %0 = vector.broadcast %cst : f32 to vector<4x288xf32>
    %cst_0 = arith.constant 0.000000e+00 : f32
    %1 = vector.broadcast %cst_0 : f32 to vector<16x288xf32>
    %c0 = arith.constant 0 : index
    %c0_1 = arith.constant 0 : index
    %c0_2 = arith.constant 0 : index
    %2 = vector.load %arg1[%c0, %c0_1, %c0_2] : memref<1x4x326xbf16, #tpu.memory_space<vmem>>, vector<1x4x288xbf16>
    %3 = vector.shape_cast %2 : vector<1x4x288xbf16> to vector<4x288xbf16>
    %c0_3 = arith.constant 0 : index
    %c0_4 = arith.constant 0 : index
    %c0_5 = arith.constant 0 : index
    %4 = vector.load %arg2[%c0_3, %c0_4, %c0_5] : memref<9x4x4xbf16, #tpu.memory_space<vmem>>, vector<1x4x4xbf16>
    %5 = vector.shape_cast %4 : vector<1x4x4xbf16> to vector<4x4xbf16>
    %cst_6 = arith.constant dense<0.000000e+00> : vector<4x288xf32>
    %6 = tpu.matmul %5, %3, %cst_6 {dimension_numbers = #tpu.dot_dimension_numbers<[1], [0], [0], [1], [0, 0, 1, 1], [], []>} : vector<4x4xbf16>, vector<4x288xbf16>, vector<4x288xf32> -> vector<4x288xf32>
    %7 = arith.addf %0, %6 : vector<4x288xf32>
    %c0_7 = arith.constant 0 : index
    %c0_8 = arith.constant 0 : index
    %c0_9 = arith.constant 0 : index
    %8 = vector.load %arg3[%c0_7, %c0_8, %c0_9] : memref<9x16x4xbf16, #tpu.memory_space<vmem>>, vector<1x16x4xbf16>
    %9 = vector.shape_cast %8 : vector<1x16x4xbf16> to vector<16x4xbf16>
    %cst_10 = arith.constant dense<0.000000e+00> : vector<16x288xf32>
    %10 = tpu.matmul %9, %3, %cst_10 {dimension_numbers = #tpu.dot_dimension_numbers<[1], [0], [0], [1], [0, 0, 1, 1], [], []>} : vector<16x4xbf16>, vector<4x288xbf16>, vector<16x288xf32> -> vector<16x288xf32>
    %11 = arith.addf %1, %10 : vector<16x288xf32>
    %c0_11 = arith.constant 0 : index
    %c0_12 = arith.constant 0 : index
    %c1 = arith.constant 1 : index
    %12 = vector.load %arg1[%c0_11, %c0_12, %c1] : memref<1x4x326xbf16, #tpu.memory_space<vmem>>, vector<1x4x288xbf16>
    %13 = vector.shape_cast %12 : vector<1x4x288xbf16> to vector<4x288xbf16>
    %c1_13 = arith.constant 1 : index
    %c0_14 = arith.constant 0 : index
    %c0_15 = arith.constant 0 : index
    %14 = vector.load %arg2[%c1_13, %c0_14, %c0_15] : memref<9x4x4xbf16, #tpu.memory_space<vmem>>, vector<1x4x4xbf16>
    %15 = vector.shape_cast %14 : vector<1x4x4xbf16> to vector<4x4xbf16>
    %cst_16 = arith.constant dense<0.000000e+00> : vector<4x288xf32>
    %16 = tpu.matmul %15, %13, %cst_16 {dimension_numbers = #tpu.dot_dimension_numbers<[1], [0], [0], [1], [0, 0, 1, 1], [], []>} : vector<4x4xbf16>, vector<4x288xbf16>, vector<4x288xf32> -> vector<4x288xf32>
    %17 = arith.addf %7, %16 : vector<4x288xf32>
    %c1_17 = arith.constant 1 : index
    %c0_18 = arith.constant 0 : index
    %c0_19 = arith.constant 0 : index
    %18 = vector.load %arg3[%c1_17, %c0_18, %c0_19] : memref<9x16x4xbf16, #tpu.memory_space<vmem>>, vector<1x16x4xbf16>
    %19 = vector.shape_cast %18 : vector<1x16x4xbf16> to vector<16x4xbf16>
    %cst_20 = arith.constant dense<0.000000e+00> : vector<16x288xf32>
    %20 = tpu.matmul %19, %13, %cst_20 {dimension_numbers = #tpu.dot_dimension_numbers<[1], [0], [0], [1], [0, 0, 1, 1], [], []>} : vector<16x4xbf16>, vector<4x288xbf16>, vector<16x288xf32> -> vector<16x288xf32>
    %21 = arith.addf %11, %20 : vector<16x288xf32>
    %c0_21 = arith.constant 0 : index
    %c0_22 = arith.constant 0 : index
    %c2 = arith.constant 2 : index
    %22 = vector.load %arg1[%c0_21, %c0_22, %c2] : memref<1x4x326xbf16, #tpu.memory_space<vmem>>, vector<1x4x288xbf16>
    %23 = vector.shape_cast %22 : vector<1x4x288xbf16> to vector<4x288xbf16>
    %c2_23 = arith.constant 2 : index
    %c0_24 = arith.constant 0 : index
    %c0_25 = arith.constant 0 : index
    %24 = vector.load %arg2[%c2_23, %c0_24, %c0_25] : memref<9x4x4xbf16, #tpu.memory_space<vmem>>, vector<1x4x4xbf16>
    %25 = vector.shape_cast %24 : vector<1x4x4xbf16> to vector<4x4xbf16>
    %cst_26 = arith.constant dense<0.000000e+00> : vector<4x288xf32>
    %26 = tpu.matmul %25, %23, %cst_26 {dimension_numbers = #tpu.dot_dimension_numbers<[1], [0], [0], [1], [0, 0, 1, 1], [], []>} : vector<4x4xbf16>, vector<4x288xbf16>, vector<4x288xf32> -> vector<4x288xf32>
    %27 = arith.addf %17, %26 : vector<4x288xf32>
    %c2_27 = arith.constant 2 : index
    %c0_28 = arith.constant 0 : index
    %c0_29 = arith.constant 0 : index
    %28 = vector.load %arg3[%c2_27, %c0_28, %c0_29] : memref<9x16x4xbf16, #tpu.memory_space<vmem>>, vector<1x16x4xbf16>
    %29 = vector.shape_cast %28 : vector<1x16x4xbf16> to vector<16x4xbf16>
    %cst_30 = arith.constant dense<0.000000e+00> : vector<16x288xf32>
    %30 = tpu.matmul %29, %23, %cst_30 {dimension_numbers = #tpu.dot_dimension_numbers<[1], [0], [0], [1], [0, 0, 1, 1], [], []>} : vector<16x4xbf16>, vector<4x288xbf16>, vector<16x288xf32> -> vector<16x288xf32>
    %31 = arith.addf %21, %30 : vector<16x288xf32>
    %c0_31 = arith.constant 0 : index
    %c0_32 = arith.constant 0 : index
    %c18 = arith.constant 18 : index
    %32 = vector.load %arg1[%c0_31, %c0_32, %c18] : memref<1x4x326xbf16, #tpu.memory_space<vmem>>, vector<1x4x288xbf16>
    %33 = vector.shape_cast %32 : vector<1x4x288xbf16> to vector<4x288xbf16>
    %c3 = arith.constant 3 : index
    %c0_33 = arith.constant 0 : index
    %c0_34 = arith.constant 0 : index
    %34 = vector.load %arg2[%c3, %c0_33, %c0_34] : memref<9x4x4xbf16, #tpu.memory_space<vmem>>, vector<1x4x4xbf16>
    %35 = vector.shape_cast %34 : vector<1x4x4xbf16> to vector<4x4xbf16>
    %cst_35 = arith.constant dense<0.000000e+00> : vector<4x288xf32>
    %36 = tpu.matmul %35, %33, %cst_35 {dimension_numbers = #tpu.dot_dimension_numbers<[1], [0], [0], [1], [0, 0, 1, 1], [], []>} : vector<4x4xbf16>, vector<4x288xbf16>, vector<4x288xf32> -> vector<4x288xf32>
    %37 = arith.addf %27, %36 : vector<4x288xf32>
    %c3_36 = arith.constant 3 : index
    %c0_37 = arith.constant 0 : index
    %c0_38 = arith.constant 0 : index
    %38 = vector.load %arg3[%c3_36, %c0_37, %c0_38] : memref<9x16x4xbf16, #tpu.memory_space<vmem>>, vector<1x16x4xbf16>
    %39 = vector.shape_cast %38 : vector<1x16x4xbf16> to vector<16x4xbf16>
    %cst_39 = arith.constant dense<0.000000e+00> : vector<16x288xf32>
    %40 = tpu.matmul %39, %33, %cst_39 {dimension_numbers = #tpu.dot_dimension_numbers<[1], [0], [0], [1], [0, 0, 1, 1], [], []>} : vector<16x4xbf16>, vector<4x288xbf16>, vector<16x288xf32> -> vector<16x288xf32>
    %41 = arith.addf %31, %40 : vector<16x288xf32>
    %c0_40 = arith.constant 0 : index
    %c0_41 = arith.constant 0 : index
    %c19 = arith.constant 19 : index
    %42 = vector.load %arg1[%c0_40, %c0_41, %c19] : memref<1x4x326xbf16, #tpu.memory_space<vmem>>, vector<1x4x288xbf16>
    %43 = vector.shape_cast %42 : vector<1x4x288xbf16> to vector<4x288xbf16>
    %c4 = arith.constant 4 : index
    %c0_42 = arith.constant 0 : index
    %c0_43 = arith.constant 0 : index
    %44 = vector.load %arg2[%c4, %c0_42, %c0_43] : memref<9x4x4xbf16, #tpu.memory_space<vmem>>, vector<1x4x4xbf16>
    %45 = vector.shape_cast %44 : vector<1x4x4xbf16> to vector<4x4xbf16>
    %cst_44 = arith.constant dense<0.000000e+00> : vector<4x288xf32>
    %46 = tpu.matmul %45, %43, %cst_44 {dimension_numbers = #tpu.dot_dimension_numbers<[1], [0], [0], [1], [0, 0, 1, 1], [], []>} : vector<4x4xbf16>, vector<4x288xbf16>, vector<4x288xf32> -> vector<4x288xf32>
    %47 = arith.addf %37, %46 : vector<4x288xf32>
    %c4_45 = arith.constant 4 : index
    %c0_46 = arith.constant 0 : index
    %c0_47 = arith.constant 0 : index
    %48 = vector.load %arg3[%c4_45, %c0_46, %c0_47] : memref<9x16x4xbf16, #tpu.memory_space<vmem>>, vector<1x16x4xbf16>
    %49 = vector.shape_cast %48 : vector<1x16x4xbf16> to vector<16x4xbf16>
    %cst_48 = arith.constant dense<0.000000e+00> : vector<16x288xf32>
    %50 = tpu.matmul %49, %43, %cst_48 {dimension_numbers = #tpu.dot_dimension_numbers<[1], [0], [0], [1], [0, 0, 1, 1], [], []>} : vector<16x4xbf16>, vector<4x288xbf16>, vector<16x288xf32> -> vector<16x288xf32>
    %51 = arith.addf %41, %50 : vector<16x288xf32>
    %c0_49 = arith.constant 0 : index
    %c0_50 = arith.constant 0 : index
    %c20 = arith.constant 20 : index
    %52 = vector.load %arg1[%c0_49, %c0_50, %c20] : memref<1x4x326xbf16, #tpu.memory_space<vmem>>, vector<1x4x288xbf16>
    %53 = vector.shape_cast %52 : vector<1x4x288xbf16> to vector<4x288xbf16>
    %c5 = arith.constant 5 : index
    %c0_51 = arith.constant 0 : index
    %c0_52 = arith.constant 0 : index
    %54 = vector.load %arg2[%c5, %c0_51, %c0_52] : memref<9x4x4xbf16, #tpu.memory_space<vmem>>, vector<1x4x4xbf16>
    %55 = vector.shape_cast %54 : vector<1x4x4xbf16> to vector<4x4xbf16>
    %cst_53 = arith.constant dense<0.000000e+00> : vector<4x288xf32>
    %56 = tpu.matmul %55, %53, %cst_53 {dimension_numbers = #tpu.dot_dimension_numbers<[1], [0], [0], [1], [0, 0, 1, 1], [], []>} : vector<4x4xbf16>, vector<4x288xbf16>, vector<4x288xf32> -> vector<4x288xf32>
    %57 = arith.addf %47, %56 : vector<4x288xf32>
    %c5_54 = arith.constant 5 : index
    %c0_55 = arith.constant 0 : index
    %c0_56 = arith.constant 0 : index
    %58 = vector.load %arg3[%c5_54, %c0_55, %c0_56] : memref<9x16x4xbf16, #tpu.memory_space<vmem>>, vector<1x16x4xbf16>
    %59 = vector.shape_cast %58 : vector<1x16x4xbf16> to vector<16x4xbf16>
    %cst_57 = arith.constant dense<0.000000e+00> : vector<16x288xf32>
    %60 = tpu.matmul %59, %53, %cst_57 {dimension_numbers = #tpu.dot_dimension_numbers<[1], [0], [0], [1], [0, 0, 1, 1], [], []>} : vector<16x4xbf16>, vector<4x288xbf16>, vector<16x288xf32> -> vector<16x288xf32>
    %61 = arith.addf %51, %60 : vector<16x288xf32>
    %c0_58 = arith.constant 0 : index
    %c0_59 = arith.constant 0 : index
    %c36 = arith.constant 36 : index
    %62 = vector.load %arg1[%c0_58, %c0_59, %c36] : memref<1x4x326xbf16, #tpu.memory_space<vmem>>, vector<1x4x288xbf16>
    %63 = vector.shape_cast %62 : vector<1x4x288xbf16> to vector<4x288xbf16>
    %c6 = arith.constant 6 : index
    %c0_60 = arith.constant 0 : index
    %c0_61 = arith.constant 0 : index
    %64 = vector.load %arg2[%c6, %c0_60, %c0_61] : memref<9x4x4xbf16, #tpu.memory_space<vmem>>, vector<1x4x4xbf16>
    %65 = vector.shape_cast %64 : vector<1x4x4xbf16> to vector<4x4xbf16>
    %cst_62 = arith.constant dense<0.000000e+00> : vector<4x288xf32>
    %66 = tpu.matmul %65, %63, %cst_62 {dimension_numbers = #tpu.dot_dimension_numbers<[1], [0], [0], [1], [0, 0, 1, 1], [], []>} : vector<4x4xbf16>, vector<4x288xbf16>, vector<4x288xf32> -> vector<4x288xf32>
    %67 = arith.addf %57, %66 : vector<4x288xf32>
    %c6_63 = arith.constant 6 : index
    %c0_64 = arith.constant 0 : index
    %c0_65 = arith.constant 0 : index
    %68 = vector.load %arg3[%c6_63, %c0_64, %c0_65] : memref<9x16x4xbf16, #tpu.memory_space<vmem>>, vector<1x16x4xbf16>
    %69 = vector.shape_cast %68 : vector<1x16x4xbf16> to vector<16x4xbf16>
    %cst_66 = arith.constant dense<0.000000e+00> : vector<16x288xf32>
    %70 = tpu.matmul %69, %63, %cst_66 {dimension_numbers = #tpu.dot_dimension_numbers<[1], [0], [0], [1], [0, 0, 1, 1], [], []>} : vector<16x4xbf16>, vector<4x288xbf16>, vector<16x288xf32> -> vector<16x288xf32>
    %71 = arith.addf %61, %70 : vector<16x288xf32>
    %c0_67 = arith.constant 0 : index
    %c0_68 = arith.constant 0 : index
    %c37 = arith.constant 37 : index
    %72 = vector.load %arg1[%c0_67, %c0_68, %c37] : memref<1x4x326xbf16, #tpu.memory_space<vmem>>, vector<1x4x288xbf16>
    %73 = vector.shape_cast %72 : vector<1x4x288xbf16> to vector<4x288xbf16>
    %c7 = arith.constant 7 : index
    %c0_69 = arith.constant 0 : index
    %c0_70 = arith.constant 0 : index
    %74 = vector.load %arg2[%c7, %c0_69, %c0_70] : memref<9x4x4xbf16, #tpu.memory_space<vmem>>, vector<1x4x4xbf16>
    %75 = vector.shape_cast %74 : vector<1x4x4xbf16> to vector<4x4xbf16>
    %cst_71 = arith.constant dense<0.000000e+00> : vector<4x288xf32>
    %76 = tpu.matmul %75, %73, %cst_71 {dimension_numbers = #tpu.dot_dimension_numbers<[1], [0], [0], [1], [0, 0, 1, 1], [], []>} : vector<4x4xbf16>, vector<4x288xbf16>, vector<4x288xf32> -> vector<4x288xf32>
    %77 = arith.addf %67, %76 : vector<4x288xf32>
    %c7_72 = arith.constant 7 : index
    %c0_73 = arith.constant 0 : index
    %c0_74 = arith.constant 0 : index
    %78 = vector.load %arg3[%c7_72, %c0_73, %c0_74] : memref<9x16x4xbf16, #tpu.memory_space<vmem>>, vector<1x16x4xbf16>
    %79 = vector.shape_cast %78 : vector<1x16x4xbf16> to vector<16x4xbf16>
    %cst_75 = arith.constant dense<0.000000e+00> : vector<16x288xf32>
    %80 = tpu.matmul %79, %73, %cst_75 {dimension_numbers = #tpu.dot_dimension_numbers<[1], [0], [0], [1], [0, 0, 1, 1], [], []>} : vector<16x4xbf16>, vector<4x288xbf16>, vector<16x288xf32> -> vector<16x288xf32>
    %81 = arith.addf %71, %80 : vector<16x288xf32>
    %c0_76 = arith.constant 0 : index
    %c0_77 = arith.constant 0 : index
    %c38 = arith.constant 38 : index
    %82 = vector.load %arg1[%c0_76, %c0_77, %c38] : memref<1x4x326xbf16, #tpu.memory_space<vmem>>, vector<1x4x288xbf16>
    %83 = vector.shape_cast %82 : vector<1x4x288xbf16> to vector<4x288xbf16>
    %c8 = arith.constant 8 : index
    %c0_78 = arith.constant 0 : index
    %c0_79 = arith.constant 0 : index
    %84 = vector.load %arg2[%c8, %c0_78, %c0_79] : memref<9x4x4xbf16, #tpu.memory_space<vmem>>, vector<1x4x4xbf16>
    %85 = vector.shape_cast %84 : vector<1x4x4xbf16> to vector<4x4xbf16>
    %cst_80 = arith.constant dense<0.000000e+00> : vector<4x288xf32>
    %86 = tpu.matmul %85, %83, %cst_80 {dimension_numbers = #tpu.dot_dimension_numbers<[1], [0], [0], [1], [0, 0, 1, 1], [], []>} : vector<4x4xbf16>, vector<4x288xbf16>, vector<4x288xf32> -> vector<4x288xf32>
    %87 = arith.addf %77, %86 : vector<4x288xf32>
    %c8_81 = arith.constant 8 : index
    %c0_82 = arith.constant 0 : index
    %c0_83 = arith.constant 0 : index
    %88 = vector.load %arg3[%c8_81, %c0_82, %c0_83] : memref<9x16x4xbf16, #tpu.memory_space<vmem>>, vector<1x16x4xbf16>
    %89 = vector.shape_cast %88 : vector<1x16x4xbf16> to vector<16x4xbf16>
    %cst_84 = arith.constant dense<0.000000e+00> : vector<16x288xf32>
    %90 = tpu.matmul %89, %83, %cst_84 {dimension_numbers = #tpu.dot_dimension_numbers<[1], [0], [0], [1], [0, 0, 1, 1], [], []>} : vector<16x4xbf16>, vector<4x288xbf16>, vector<16x288xf32> -> vector<16x288xf32>
    %91 = arith.addf %81, %90 : vector<16x288xf32>
    %c0_85 = arith.constant 0 : index
    %c0_86 = arith.constant 0 : index
    %92 = vector.load %arg4[%c0_85, %c0_86] : memref<4x1xf32, #tpu.memory_space<vmem>>, vector<4x1xf32>
    %93 = vector.broadcast %92 : vector<4x1xf32> to vector<4x288xf32>
    %94 = arith.mulf %87, %93 : vector<4x288xf32>
    %c0_87 = arith.constant 0 : index
    %c0_88 = arith.constant 0 : index
    %95 = vector.load %arg5[%c0_87, %c0_88] : memref<4x1xf32, #tpu.memory_space<vmem>>, vector<4x1xf32>
    %96 = vector.broadcast %95 : vector<4x1xf32> to vector<4x288xf32>
    %97 = arith.addf %94, %96 : vector<4x288xf32>
    %98 = arith.negf %97 : vector<4x288xf32>
    %99 = math.exp %98 : vector<4x288xf32>
    %cst_89 = arith.constant 1.000000e+00 : f32
    %100 = vector.broadcast %cst_89 : f32 to vector<4x288xf32>
    %101 = arith.addf %100, %99 : vector<4x288xf32>
    %102 = arith.divf %100, %101 : vector<4x288xf32>
    %c0_90 = arith.constant 0 : index
    %c0_91 = arith.constant 0 : index
    %103 = vector.load %arg8[%c0_90, %c0_91] : memref<1x288xf32, #tpu.memory_space<vmem>>, vector<1x288xf32>
    %104 = vector.broadcast %103 : vector<1x288xf32> to vector<4x288xf32>
    %105 = arith.mulf %102, %104 : vector<4x288xf32>
    %c0_92 = arith.constant 0 : index
    %c0_93 = arith.constant 0 : index
    %106 = vector.load %arg6[%c0_92, %c0_93] : memref<16x1xf32, #tpu.memory_space<vmem>>, vector<16x1xf32>
    %107 = vector.broadcast %106 : vector<16x1xf32> to vector<16x288xf32>
    %108 = arith.mulf %91, %107 : vector<16x288xf32>
    %c0_94 = arith.constant 0 : index
    %c0_95 = arith.constant 0 : index
    %109 = vector.load %arg7[%c0_94, %c0_95] : memref<16x1xf32, #tpu.memory_space<vmem>>, vector<16x1xf32>
    %110 = vector.broadcast %109 : vector<16x1xf32> to vector<16x288xf32>
    %111 = arith.addf %108, %110 : vector<16x288xf32>
    %cst_96 = arith.constant 0.000000e+00 : f32
    %112 = vector.broadcast %cst_96 : f32 to vector<4x288xf32>
    %cst_97 = arith.constant 0.000000e+00 : f32
    %113 = vector.broadcast %cst_97 : f32 to vector<1x288xf32>
    %cst_98 = arith.constant 0.000000e+00 : f32
    %114 = vector.broadcast %cst_98 : f32 to vector<4x288xf32>
    %cst_99 = arith.constant 0.000000e+00 : f32
    %115 = vector.broadcast %cst_99 : f32 to vector<4x288xf32>
    %cst_100 = arith.constant 0.000000e+00 : f32
    %116 = vector.broadcast %cst_100 : f32 to vector<4x288xf32>
    %cst_101 = arith.constant 0.000000e+00 : f32
    %117 = vector.broadcast %cst_101 : f32 to vector<4x288xf32>
    %118 = vector.extract_strided_slice %105 {offsets = [0, 0], sizes = [1, 288], strides = [1, 1]} : vector<4x288xf32> to vector<1x288xf32>
    %119 = vector.extract_strided_slice %111 {offsets = [0, 0], sizes = [1, 288], strides = [1, 1]} : vector<16x288xf32> to vector<1x288xf32>
    %120 = vector.extract_strided_slice %111 {offsets = [1, 0], sizes = [1, 288], strides = [1, 1]} : vector<16x288xf32> to vector<1x288xf32>
    %121 = vector.extract_strided_slice %111 {offsets = [2, 0], sizes = [1, 288], strides = [1, 1]} : vector<16x288xf32> to vector<1x288xf32>
    %122 = vector.extract_strided_slice %111 {offsets = [3, 0], sizes = [1, 288], strides = [1, 1]} : vector<16x288xf32> to vector<1x288xf32>
    %c0_102 = arith.constant 0 : index
    %c0_103 = arith.constant 0 : index
    %c0_104 = arith.constant 0 : index
    %123 = vector.load %arg11[%c0_102, %c0_103, %c0_104] : memref<4x4x288xf32, #tpu.memory_space<vmem>>, vector<1x4x288xf32>
    %124 = vector.shape_cast %123 : vector<1x4x288xf32> to vector<4x288xf32>
    %c0_105 = arith.constant 0 : index
    %c0_106 = arith.constant 0 : index
    %c0_107 = arith.constant 0 : index
    %c0_108 = arith.constant 0 : index
    %125 = vector.load %arg10[%c0_105, %c0_106, %c0_107, %c0_108] : memref<4x4x4x288xf32, #tpu.memory_space<vmem>>, vector<1x1x4x288xf32>
    %126 = vector.shape_cast %125 : vector<1x1x4x288xf32> to vector<4x288xf32>
    %127 = vector.broadcast %119 : vector<1x288xf32> to vector<4x288xf32>
    %128 = arith.mulf %126, %127 : vector<4x288xf32>
    %129 = arith.addf %124, %128 : vector<4x288xf32>
    %c0_109 = arith.constant 0 : index
    %c1_110 = arith.constant 1 : index
    %c0_111 = arith.constant 0 : index
    %c0_112 = arith.constant 0 : index
    %130 = vector.load %arg10[%c0_109, %c1_110, %c0_111, %c0_112] : memref<4x4x4x288xf32, #tpu.memory_space<vmem>>, vector<1x1x4x288xf32>
    %131 = vector.shape_cast %130 : vector<1x1x4x288xf32> to vector<4x288xf32>
    %132 = vector.broadcast %120 : vector<1x288xf32> to vector<4x288xf32>
    %133 = arith.mulf %131, %132 : vector<4x288xf32>
    %134 = arith.addf %129, %133 : vector<4x288xf32>
    %c0_113 = arith.constant 0 : index
    %c2_114 = arith.constant 2 : index
    %c0_115 = arith.constant 0 : index
    %c0_116 = arith.constant 0 : index
    %135 = vector.load %arg10[%c0_113, %c2_114, %c0_115, %c0_116] : memref<4x4x4x288xf32, #tpu.memory_space<vmem>>, vector<1x1x4x288xf32>
    %136 = vector.shape_cast %135 : vector<1x1x4x288xf32> to vector<4x288xf32>
    %137 = vector.broadcast %121 : vector<1x288xf32> to vector<4x288xf32>
    %138 = arith.mulf %136, %137 : vector<4x288xf32>
    %139 = arith.addf %134, %138 : vector<4x288xf32>
    %c0_117 = arith.constant 0 : index
    %c3_118 = arith.constant 3 : index
    %c0_119 = arith.constant 0 : index
    %c0_120 = arith.constant 0 : index
    %140 = vector.load %arg10[%c0_117, %c3_118, %c0_119, %c0_120] : memref<4x4x4x288xf32, #tpu.memory_space<vmem>>, vector<1x1x4x288xf32>
    %141 = vector.shape_cast %140 : vector<1x1x4x288xf32> to vector<4x288xf32>
    %142 = vector.broadcast %122 : vector<1x288xf32> to vector<4x288xf32>
    %143 = arith.mulf %141, %142 : vector<4x288xf32>
    %144 = arith.addf %139, %143 : vector<4x288xf32>
    %cst_121 = arith.constant dense<0xFF800000> : vector<288xf32>
    %145 = vector.multi_reduction <maximumf>, %144, %cst_121 [0] : vector<4x288xf32> to vector<288xf32>
    %146 = vector.shape_cast %145 : vector<288xf32> to vector<1x288xf32>
    %147 = vector.broadcast %146 : vector<1x288xf32> to vector<4x288xf32>
    %148 = arith.subf %144, %147 : vector<4x288xf32>
    %149 = math.exp %148 : vector<4x288xf32>
    %cst_122 = arith.constant dense<0.000000e+00> : vector<288xf32>
    %150 = vector.multi_reduction <add>, %149, %cst_122 [0] : vector<4x288xf32> to vector<288xf32>
    %151 = vector.shape_cast %150 : vector<288xf32> to vector<1x288xf32>
    %152 = tpu.reciprocal %151 {approx = true} : vector<1x288xf32> -> vector<1x288xf32>
    %153 = vector.broadcast %152 : vector<1x288xf32> to vector<4x288xf32>
    %154 = arith.mulf %149, %153 : vector<4x288xf32>
    %155 = vector.broadcast %118 : vector<1x288xf32> to vector<4x288xf32>
    %156 = arith.mulf %155, %154 : vector<4x288xf32>
    %157 = arith.addf %112, %156 : vector<4x288xf32>
    %158 = arith.addf %113, %118 : vector<1x288xf32>
    %c0_123 = arith.constant 0 : index
    %c0_124 = arith.constant 0 : index
    %c0_125 = arith.constant 0 : index
    %c0_126 = arith.constant 0 : index
    %c0_127 = arith.constant 0 : index
    %159 = vector.load %arg9[%c0_123, %c0_124, %c0_125, %c0_126, %c0_127] : memref<4x4x4x4x288xf32, #tpu.memory_space<vmem>>, vector<1x1x1x4x288xf32>
    %160 = vector.shape_cast %159 : vector<1x1x1x4x288xf32> to vector<4x288xf32>
    %161 = vector.broadcast %119 : vector<1x288xf32> to vector<4x288xf32>
    %162 = arith.mulf %160, %161 : vector<4x288xf32>
    %c0_128 = arith.constant 0 : index
    %c1_129 = arith.constant 1 : index
    %c0_130 = arith.constant 0 : index
    %c0_131 = arith.constant 0 : index
    %c0_132 = arith.constant 0 : index
    %163 = vector.load %arg9[%c0_128, %c1_129, %c0_130, %c0_131, %c0_132] : memref<4x4x4x4x288xf32, #tpu.memory_space<vmem>>, vector<1x1x1x4x288xf32>
    %164 = vector.shape_cast %163 : vector<1x1x1x4x288xf32> to vector<4x288xf32>
    %165 = vector.broadcast %120 : vector<1x288xf32> to vector<4x288xf32>
    %166 = arith.mulf %164, %165 : vector<4x288xf32>
    %167 = arith.addf %162, %166 : vector<4x288xf32>
    %c0_133 = arith.constant 0 : index
    %c2_134 = arith.constant 2 : index
    %c0_135 = arith.constant 0 : index
    %c0_136 = arith.constant 0 : index
    %c0_137 = arith.constant 0 : index
    %168 = vector.load %arg9[%c0_133, %c2_134, %c0_135, %c0_136, %c0_137] : memref<4x4x4x4x288xf32, #tpu.memory_space<vmem>>, vector<1x1x1x4x288xf32>
    %169 = vector.shape_cast %168 : vector<1x1x1x4x288xf32> to vector<4x288xf32>
    %170 = vector.broadcast %121 : vector<1x288xf32> to vector<4x288xf32>
    %171 = arith.mulf %169, %170 : vector<4x288xf32>
    %172 = arith.addf %167, %171 : vector<4x288xf32>
    %c0_138 = arith.constant 0 : index
    %c3_139 = arith.constant 3 : index
    %c0_140 = arith.constant 0 : index
    %c0_141 = arith.constant 0 : index
    %c0_142 = arith.constant 0 : index
    %173 = vector.load %arg9[%c0_138, %c3_139, %c0_140, %c0_141, %c0_142] : memref<4x4x4x4x288xf32, #tpu.memory_space<vmem>>, vector<1x1x1x4x288xf32>
    %174 = vector.shape_cast %173 : vector<1x1x1x4x288xf32> to vector<4x288xf32>
    %175 = vector.broadcast %122 : vector<1x288xf32> to vector<4x288xf32>
    %176 = arith.mulf %174, %175 : vector<4x288xf32>
    %177 = arith.addf %172, %176 : vector<4x288xf32>
    %178 = arith.mulf %156, %177 : vector<4x288xf32>
    %179 = arith.addf %114, %178 : vector<4x288xf32>
    %c0_143 = arith.constant 0 : index
    %c0_144 = arith.constant 0 : index
    %c1_145 = arith.constant 1 : index
    %c0_146 = arith.constant 0 : index
    %c0_147 = arith.constant 0 : index
    %180 = vector.load %arg9[%c0_143, %c0_144, %c1_145, %c0_146, %c0_147] : memref<4x4x4x4x288xf32, #tpu.memory_space<vmem>>, vector<1x1x1x4x288xf32>
    %181 = vector.shape_cast %180 : vector<1x1x1x4x288xf32> to vector<4x288xf32>
    %182 = vector.broadcast %119 : vector<1x288xf32> to vector<4x288xf32>
    %183 = arith.mulf %181, %182 : vector<4x288xf32>
    %c0_148 = arith.constant 0 : index
    %c1_149 = arith.constant 1 : index
    %c1_150 = arith.constant 1 : index
    %c0_151 = arith.constant 0 : index
    %c0_152 = arith.constant 0 : index
    %184 = vector.load %arg9[%c0_148, %c1_149, %c1_150, %c0_151, %c0_152] : memref<4x4x4x4x288xf32, #tpu.memory_space<vmem>>, vector<1x1x1x4x288xf32>
    %185 = vector.shape_cast %184 : vector<1x1x1x4x288xf32> to vector<4x288xf32>
    %186 = vector.broadcast %120 : vector<1x288xf32> to vector<4x288xf32>
    %187 = arith.mulf %185, %186 : vector<4x288xf32>
    %188 = arith.addf %183, %187 : vector<4x288xf32>
    %c0_153 = arith.constant 0 : index
    %c2_154 = arith.constant 2 : index
    %c1_155 = arith.constant 1 : index
    %c0_156 = arith.constant 0 : index
    %c0_157 = arith.constant 0 : index
    %189 = vector.load %arg9[%c0_153, %c2_154, %c1_155, %c0_156, %c0_157] : memref<4x4x4x4x288xf32, #tpu.memory_space<vmem>>, vector<1x1x1x4x288xf32>
    %190 = vector.shape_cast %189 : vector<1x1x1x4x288xf32> to vector<4x288xf32>
    %191 = vector.broadcast %121 : vector<1x288xf32> to vector<4x288xf32>
    %192 = arith.mulf %190, %191 : vector<4x288xf32>
    %193 = arith.addf %188, %192 : vector<4x288xf32>
    %c0_158 = arith.constant 0 : index
    %c3_159 = arith.constant 3 : index
    %c1_160 = arith.constant 1 : index
    %c0_161 = arith.constant 0 : index
    %c0_162 = arith.constant 0 : index
    %194 = vector.load %arg9[%c0_158, %c3_159, %c1_160, %c0_161, %c0_162] : memref<4x4x4x4x288xf32, #tpu.memory_space<vmem>>, vector<1x1x1x4x288xf32>
    %195 = vector.shape_cast %194 : vector<1x1x1x4x288xf32> to vector<4x288xf32>
    %196 = vector.broadcast %122 : vector<1x288xf32> to vector<4x288xf32>
    %197 = arith.mulf %195, %196 : vector<4x288xf32>
    %198 = arith.addf %193, %197 : vector<4x288xf32>
    %199 = arith.mulf %156, %198 : vector<4x288xf32>
    %200 = arith.addf %115, %199 : vector<4x288xf32>
    %c0_163 = arith.constant 0 : index
    %c0_164 = arith.constant 0 : index
    %c2_165 = arith.constant 2 : index
    %c0_166 = arith.constant 0 : index
    %c0_167 = arith.constant 0 : index
    %201 = vector.load %arg9[%c0_163, %c0_164, %c2_165, %c0_166, %c0_167] : memref<4x4x4x4x288xf32, #tpu.memory_space<vmem>>, vector<1x1x1x4x288xf32>
    %202 = vector.shape_cast %201 : vector<1x1x1x4x288xf32> to vector<4x288xf32>
    %203 = vector.broadcast %119 : vector<1x288xf32> to vector<4x288xf32>
    %204 = arith.mulf %202, %203 : vector<4x288xf32>
    %c0_168 = arith.constant 0 : index
    %c1_169 = arith.constant 1 : index
    %c2_170 = arith.constant 2 : index
    %c0_171 = arith.constant 0 : index
    %c0_172 = arith.constant 0 : index
    %205 = vector.load %arg9[%c0_168, %c1_169, %c2_170, %c0_171, %c0_172] : memref<4x4x4x4x288xf32, #tpu.memory_space<vmem>>, vector<1x1x1x4x288xf32>
    %206 = vector.shape_cast %205 : vector<1x1x1x4x288xf32> to vector<4x288xf32>
    %207 = vector.broadcast %120 : vector<1x288xf32> to vector<4x288xf32>
    %208 = arith.mulf %206, %207 : vector<4x288xf32>
    %209 = arith.addf %204, %208 : vector<4x288xf32>
    %c0_173 = arith.constant 0 : index
    %c2_174 = arith.constant 2 : index
    %c2_175 = arith.constant 2 : index
    %c0_176 = arith.constant 0 : index
    %c0_177 = arith.constant 0 : index
    %210 = vector.load %arg9[%c0_173, %c2_174, %c2_175, %c0_176, %c0_177] : memref<4x4x4x4x288xf32, #tpu.memory_space<vmem>>, vector<1x1x1x4x288xf32>
    %211 = vector.shape_cast %210 : vector<1x1x1x4x288xf32> to vector<4x288xf32>
    %212 = vector.broadcast %121 : vector<1x288xf32> to vector<4x288xf32>
    %213 = arith.mulf %211, %212 : vector<4x288xf32>
    %214 = arith.addf %209, %213 : vector<4x288xf32>
    %c0_178 = arith.constant 0 : index
    %c3_179 = arith.constant 3 : index
    %c2_180 = arith.constant 2 : index
    %c0_181 = arith.constant 0 : index
    %c0_182 = arith.constant 0 : index
    %215 = vector.load %arg9[%c0_178, %c3_179, %c2_180, %c0_181, %c0_182] : memref<4x4x4x4x288xf32, #tpu.memory_space<vmem>>, vector<1x1x1x4x288xf32>
    %216 = vector.shape_cast %215 : vector<1x1x1x4x288xf32> to vector<4x288xf32>
    %217 = vector.broadcast %122 : vector<1x288xf32> to vector<4x288xf32>
    %218 = arith.mulf %216, %217 : vector<4x288xf32>
    %219 = arith.addf %214, %218 : vector<4x288xf32>
    %220 = arith.mulf %156, %219 : vector<4x288xf32>
    %221 = arith.addf %116, %220 : vector<4x288xf32>
    %c0_183 = arith.constant 0 : index
    %c0_184 = arith.constant 0 : index
    %c3_185 = arith.constant 3 : index
    %c0_186 = arith.constant 0 : index
    %c0_187 = arith.constant 0 : index
    %222 = vector.load %arg9[%c0_183, %c0_184, %c3_185, %c0_186, %c0_187] : memref<4x4x4x4x288xf32, #tpu.memory_space<vmem>>, vector<1x1x1x4x288xf32>
    %223 = vector.shape_cast %222 : vector<1x1x1x4x288xf32> to vector<4x288xf32>
    %224 = vector.broadcast %119 : vector<1x288xf32> to vector<4x288xf32>
    %225 = arith.mulf %223, %224 : vector<4x288xf32>
    %c0_188 = arith.constant 0 : index
    %c1_189 = arith.constant 1 : index
    %c3_190 = arith.constant 3 : index
    %c0_191 = arith.constant 0 : index
    %c0_192 = arith.constant 0 : index
    %226 = vector.load %arg9[%c0_188, %c1_189, %c3_190, %c0_191, %c0_192] : memref<4x4x4x4x288xf32, #tpu.memory_space<vmem>>, vector<1x1x1x4x288xf32>
    %227 = vector.shape_cast %226 : vector<1x1x1x4x288xf32> to vector<4x288xf32>
    %228 = vector.broadcast %120 : vector<1x288xf32> to vector<4x288xf32>
    %229 = arith.mulf %227, %228 : vector<4x288xf32>
    %230 = arith.addf %225, %229 : vector<4x288xf32>
    %c0_193 = arith.constant 0 : index
    %c2_194 = arith.constant 2 : index
    %c3_195 = arith.constant 3 : index
    %c0_196 = arith.constant 0 : index
    %c0_197 = arith.constant 0 : index
    %231 = vector.load %arg9[%c0_193, %c2_194, %c3_195, %c0_196, %c0_197] : memref<4x4x4x4x288xf32, #tpu.memory_space<vmem>>, vector<1x1x1x4x288xf32>
    %232 = vector.shape_cast %231 : vector<1x1x1x4x288xf32> to vector<4x288xf32>
    %233 = vector.broadcast %121 : vector<1x288xf32> to vector<4x288xf32>
    %234 = arith.mulf %232, %233 : vector<4x288xf32>
    %235 = arith.addf %230, %234 : vector<4x288xf32>
    %c0_198 = arith.constant 0 : index
    %c3_199 = arith.constant 3 : index
    %c3_200 = arith.constant 3 : index
    %c0_201 = arith.constant 0 : index
    %c0_202 = arith.constant 0 : index
    %236 = vector.load %arg9[%c0_198, %c3_199, %c3_200, %c0_201, %c0_202] : memref<4x4x4x4x288xf32, #tpu.memory_space<vmem>>, vector<1x1x1x4x288xf32>
    %237 = vector.shape_cast %236 : vector<1x1x1x4x288xf32> to vector<4x288xf32>
    %238 = vector.broadcast %122 : vector<1x288xf32> to vector<4x288xf32>
    %239 = arith.mulf %237, %238 : vector<4x288xf32>
    %240 = arith.addf %235, %239 : vector<4x288xf32>
    %241 = arith.mulf %156, %240 : vector<4x288xf32>
    %242 = arith.addf %117, %241 : vector<4x288xf32>
    %243 = vector.extract_strided_slice %105 {offsets = [1, 0], sizes = [1, 288], strides = [1, 1]} : vector<4x288xf32> to vector<1x288xf32>
    %244 = vector.extract_strided_slice %111 {offsets = [4, 0], sizes = [1, 288], strides = [1, 1]} : vector<16x288xf32> to vector<1x288xf32>
    %245 = vector.extract_strided_slice %111 {offsets = [5, 0], sizes = [1, 288], strides = [1, 1]} : vector<16x288xf32> to vector<1x288xf32>
    %246 = vector.extract_strided_slice %111 {offsets = [6, 0], sizes = [1, 288], strides = [1, 1]} : vector<16x288xf32> to vector<1x288xf32>
    %247 = vector.extract_strided_slice %111 {offsets = [7, 0], sizes = [1, 288], strides = [1, 1]} : vector<16x288xf32> to vector<1x288xf32>
    %c1_203 = arith.constant 1 : index
    %c0_204 = arith.constant 0 : index
    %c0_205 = arith.constant 0 : index
    %248 = vector.load %arg11[%c1_203, %c0_204, %c0_205] : memref<4x4x288xf32, #tpu.memory_space<vmem>>, vector<1x4x288xf32>
    %249 = vector.shape_cast %248 : vector<1x4x288xf32> to vector<4x288xf32>
    %c1_206 = arith.constant 1 : index
    %c0_207 = arith.constant 0 : index
    %c0_208 = arith.constant 0 : index
    %c0_209 = arith.constant 0 : index
    %250 = vector.load %arg10[%c1_206, %c0_207, %c0_208, %c0_209] : memref<4x4x4x288xf32, #tpu.memory_space<vmem>>, vector<1x1x4x288xf32>
    %251 = vector.shape_cast %250 : vector<1x1x4x288xf32> to vector<4x288xf32>
    %252 = vector.broadcast %244 : vector<1x288xf32> to vector<4x288xf32>
    %253 = arith.mulf %251, %252 : vector<4x288xf32>
    %254 = arith.addf %249, %253 : vector<4x288xf32>
    %c1_210 = arith.constant 1 : index
    %c1_211 = arith.constant 1 : index
    %c0_212 = arith.constant 0 : index
    %c0_213 = arith.constant 0 : index
    %255 = vector.load %arg10[%c1_210, %c1_211, %c0_212, %c0_213] : memref<4x4x4x288xf32, #tpu.memory_space<vmem>>, vector<1x1x4x288xf32>
    %256 = vector.shape_cast %255 : vector<1x1x4x288xf32> to vector<4x288xf32>
    %257 = vector.broadcast %245 : vector<1x288xf32> to vector<4x288xf32>
    %258 = arith.mulf %256, %257 : vector<4x288xf32>
    %259 = arith.addf %254, %258 : vector<4x288xf32>
    %c1_214 = arith.constant 1 : index
    %c2_215 = arith.constant 2 : index
    %c0_216 = arith.constant 0 : index
    %c0_217 = arith.constant 0 : index
    %260 = vector.load %arg10[%c1_214, %c2_215, %c0_216, %c0_217] : memref<4x4x4x288xf32, #tpu.memory_space<vmem>>, vector<1x1x4x288xf32>
    %261 = vector.shape_cast %260 : vector<1x1x4x288xf32> to vector<4x288xf32>
    %262 = vector.broadcast %246 : vector<1x288xf32> to vector<4x288xf32>
    %263 = arith.mulf %261, %262 : vector<4x288xf32>
    %264 = arith.addf %259, %263 : vector<4x288xf32>
    %c1_218 = arith.constant 1 : index
    %c3_219 = arith.constant 3 : index
    %c0_220 = arith.constant 0 : index
    %c0_221 = arith.constant 0 : index
    %265 = vector.load %arg10[%c1_218, %c3_219, %c0_220, %c0_221] : memref<4x4x4x288xf32, #tpu.memory_space<vmem>>, vector<1x1x4x288xf32>
    %266 = vector.shape_cast %265 : vector<1x1x4x288xf32> to vector<4x288xf32>
    %267 = vector.broadcast %247 : vector<1x288xf32> to vector<4x288xf32>
    %268 = arith.mulf %266, %267 : vector<4x288xf32>
    %269 = arith.addf %264, %268 : vector<4x288xf32>
    %cst_222 = arith.constant dense<0xFF800000> : vector<288xf32>
    %270 = vector.multi_reduction <maximumf>, %269, %cst_222 [0] : vector<4x288xf32> to vector<288xf32>
    %271 = vector.shape_cast %270 : vector<288xf32> to vector<1x288xf32>
    %272 = vector.broadcast %271 : vector<1x288xf32> to vector<4x288xf32>
    %273 = arith.subf %269, %272 : vector<4x288xf32>
    %274 = math.exp %273 : vector<4x288xf32>
    %cst_223 = arith.constant dense<0.000000e+00> : vector<288xf32>
    %275 = vector.multi_reduction <add>, %274, %cst_223 [0] : vector<4x288xf32> to vector<288xf32>
    %276 = vector.shape_cast %275 : vector<288xf32> to vector<1x288xf32>
    %277 = tpu.reciprocal %276 {approx = true} : vector<1x288xf32> -> vector<1x288xf32>
    %278 = vector.broadcast %277 : vector<1x288xf32> to vector<4x288xf32>
    %279 = arith.mulf %274, %278 : vector<4x288xf32>
    %280 = vector.broadcast %243 : vector<1x288xf32> to vector<4x288xf32>
    %281 = arith.mulf %280, %279 : vector<4x288xf32>
    %282 = arith.addf %157, %281 : vector<4x288xf32>
    %283 = arith.addf %158, %243 : vector<1x288xf32>
    %c1_224 = arith.constant 1 : index
    %c0_225 = arith.constant 0 : index
    %c0_226 = arith.constant 0 : index
    %c0_227 = arith.constant 0 : index
    %c0_228 = arith.constant 0 : index
    %284 = vector.load %arg9[%c1_224, %c0_225, %c0_226, %c0_227, %c0_228] : memref<4x4x4x4x288xf32, #tpu.memory_space<vmem>>, vector<1x1x1x4x288xf32>
    %285 = vector.shape_cast %284 : vector<1x1x1x4x288xf32> to vector<4x288xf32>
    %286 = vector.broadcast %244 : vector<1x288xf32> to vector<4x288xf32>
    %287 = arith.mulf %285, %286 : vector<4x288xf32>
    %c1_229 = arith.constant 1 : index
    %c1_230 = arith.constant 1 : index
    %c0_231 = arith.constant 0 : index
    %c0_232 = arith.constant 0 : index
    %c0_233 = arith.constant 0 : index
    %288 = vector.load %arg9[%c1_229, %c1_230, %c0_231, %c0_232, %c0_233] : memref<4x4x4x4x288xf32, #tpu.memory_space<vmem>>, vector<1x1x1x4x288xf32>
    %289 = vector.shape_cast %288 : vector<1x1x1x4x288xf32> to vector<4x288xf32>
    %290 = vector.broadcast %245 : vector<1x288xf32> to vector<4x288xf32>
    %291 = arith.mulf %289, %290 : vector<4x288xf32>
    %292 = arith.addf %287, %291 : vector<4x288xf32>
    %c1_234 = arith.constant 1 : index
    %c2_235 = arith.constant 2 : index
    %c0_236 = arith.constant 0 : index
    %c0_237 = arith.constant 0 : index
    %c0_238 = arith.constant 0 : index
    %293 = vector.load %arg9[%c1_234, %c2_235, %c0_236, %c0_237, %c0_238] : memref<4x4x4x4x288xf32, #tpu.memory_space<vmem>>, vector<1x1x1x4x288xf32>
    %294 = vector.shape_cast %293 : vector<1x1x1x4x288xf32> to vector<4x288xf32>
    %295 = vector.broadcast %246 : vector<1x288xf32> to vector<4x288xf32>
    %296 = arith.mulf %294, %295 : vector<4x288xf32>
    %297 = arith.addf %292, %296 : vector<4x288xf32>
    %c1_239 = arith.constant 1 : index
    %c3_240 = arith.constant 3 : index
    %c0_241 = arith.constant 0 : index
    %c0_242 = arith.constant 0 : index
    %c0_243 = arith.constant 0 : index
    %298 = vector.load %arg9[%c1_239, %c3_240, %c0_241, %c0_242, %c0_243] : memref<4x4x4x4x288xf32, #tpu.memory_space<vmem>>, vector<1x1x1x4x288xf32>
    %299 = vector.shape_cast %298 : vector<1x1x1x4x288xf32> to vector<4x288xf32>
    %300 = vector.broadcast %247 : vector<1x288xf32> to vector<4x288xf32>
    %301 = arith.mulf %299, %300 : vector<4x288xf32>
    %302 = arith.addf %297, %301 : vector<4x288xf32>
    %303 = arith.mulf %281, %302 : vector<4x288xf32>
    %304 = arith.addf %179, %303 : vector<4x288xf32>
    %c1_244 = arith.constant 1 : index
    %c0_245 = arith.constant 0 : index
    %c1_246 = arith.constant 1 : index
    %c0_247 = arith.constant 0 : index
    %c0_248 = arith.constant 0 : index
    %305 = vector.load %arg9[%c1_244, %c0_245, %c1_246, %c0_247, %c0_248] : memref<4x4x4x4x288xf32, #tpu.memory_space<vmem>>, vector<1x1x1x4x288xf32>
    %306 = vector.shape_cast %305 : vector<1x1x1x4x288xf32> to vector<4x288xf32>
    %307 = vector.broadcast %244 : vector<1x288xf32> to vector<4x288xf32>
    %308 = arith.mulf %306, %307 : vector<4x288xf32>
    %c1_249 = arith.constant 1 : index
    %c1_250 = arith.constant 1 : index
    %c1_251 = arith.constant 1 : index
    %c0_252 = arith.constant 0 : index
    %c0_253 = arith.constant 0 : index
    %309 = vector.load %arg9[%c1_249, %c1_250, %c1_251, %c0_252, %c0_253] : memref<4x4x4x4x288xf32, #tpu.memory_space<vmem>>, vector<1x1x1x4x288xf32>
    %310 = vector.shape_cast %309 : vector<1x1x1x4x288xf32> to vector<4x288xf32>
    %311 = vector.broadcast %245 : vector<1x288xf32> to vector<4x288xf32>
    %312 = arith.mulf %310, %311 : vector<4x288xf32>
    %313 = arith.addf %308, %312 : vector<4x288xf32>
    %c1_254 = arith.constant 1 : index
    %c2_255 = arith.constant 2 : index
    %c1_256 = arith.constant 1 : index
    %c0_257 = arith.constant 0 : index
    %c0_258 = arith.constant 0 : index
    %314 = vector.load %arg9[%c1_254, %c2_255, %c1_256, %c0_257, %c0_258] : memref<4x4x4x4x288xf32, #tpu.memory_space<vmem>>, vector<1x1x1x4x288xf32>
    %315 = vector.shape_cast %314 : vector<1x1x1x4x288xf32> to vector<4x288xf32>
    %316 = vector.broadcast %246 : vector<1x288xf32> to vector<4x288xf32>
    %317 = arith.mulf %315, %316 : vector<4x288xf32>
    %318 = arith.addf %313, %317 : vector<4x288xf32>
    %c1_259 = arith.constant 1 : index
    %c3_260 = arith.constant 3 : index
    %c1_261 = arith.constant 1 : index
    %c0_262 = arith.constant 0 : index
    %c0_263 = arith.constant 0 : index
    %319 = vector.load %arg9[%c1_259, %c3_260, %c1_261, %c0_262, %c0_263] : memref<4x4x4x4x288xf32, #tpu.memory_space<vmem>>, vector<1x1x1x4x288xf32>
    %320 = vector.shape_cast %319 : vector<1x1x1x4x288xf32> to vector<4x288xf32>
    %321 = vector.broadcast %247 : vector<1x288xf32> to vector<4x288xf32>
    %322 = arith.mulf %320, %321 : vector<4x288xf32>
    %323 = arith.addf %318, %322 : vector<4x288xf32>
    %324 = arith.mulf %281, %323 : vector<4x288xf32>
    %325 = arith.addf %200, %324 : vector<4x288xf32>
    %c1_264 = arith.constant 1 : index
    %c0_265 = arith.constant 0 : index
    %c2_266 = arith.constant 2 : index
    %c0_267 = arith.constant 0 : index
    %c0_268 = arith.constant 0 : index
    %326 = vector.load %arg9[%c1_264, %c0_265, %c2_266, %c0_267, %c0_268] : memref<4x4x4x4x288xf32, #tpu.memory_space<vmem>>, vector<1x1x1x4x288xf32>
    %327 = vector.shape_cast %326 : vector<1x1x1x4x288xf32> to vector<4x288xf32>
    %328 = vector.broadcast %244 : vector<1x288xf32> to vector<4x288xf32>
    %329 = arith.mulf %327, %328 : vector<4x288xf32>
    %c1_269 = arith.constant 1 : index
    %c1_270 = arith.constant 1 : index
    %c2_271 = arith.constant 2 : index
    %c0_272 = arith.constant 0 : index
    %c0_273 = arith.constant 0 : index
    %330 = vector.load %arg9[%c1_269, %c1_270, %c2_271, %c0_272, %c0_273] : memref<4x4x4x4x288xf32, #tpu.memory_space<vmem>>, vector<1x1x1x4x288xf32>
    %331 = vector.shape_cast %330 : vector<1x1x1x4x288xf32> to vector<4x288xf32>
    %332 = vector.broadcast %245 : vector<1x288xf32> to vector<4x288xf32>
    %333 = arith.mulf %331, %332 : vector<4x288xf32>
    %334 = arith.addf %329, %333 : vector<4x288xf32>
    %c1_274 = arith.constant 1 : index
    %c2_275 = arith.constant 2 : index
    %c2_276 = arith.constant 2 : index
    %c0_277 = arith.constant 0 : index
    %c0_278 = arith.constant 0 : index
    %335 = vector.load %arg9[%c1_274, %c2_275, %c2_276, %c0_277, %c0_278] : memref<4x4x4x4x288xf32, #tpu.memory_space<vmem>>, vector<1x1x1x4x288xf32>
    %336 = vector.shape_cast %335 : vector<1x1x1x4x288xf32> to vector<4x288xf32>
    %337 = vector.broadcast %246 : vector<1x288xf32> to vector<4x288xf32>
    %338 = arith.mulf %336, %337 : vector<4x288xf32>
    %339 = arith.addf %334, %338 : vector<4x288xf32>
    %c1_279 = arith.constant 1 : index
    %c3_280 = arith.constant 3 : index
    %c2_281 = arith.constant 2 : index
    %c0_282 = arith.constant 0 : index
    %c0_283 = arith.constant 0 : index
    %340 = vector.load %arg9[%c1_279, %c3_280, %c2_281, %c0_282, %c0_283] : memref<4x4x4x4x288xf32, #tpu.memory_space<vmem>>, vector<1x1x1x4x288xf32>
    %341 = vector.shape_cast %340 : vector<1x1x1x4x288xf32> to vector<4x288xf32>
    %342 = vector.broadcast %247 : vector<1x288xf32> to vector<4x288xf32>
    %343 = arith.mulf %341, %342 : vector<4x288xf32>
    %344 = arith.addf %339, %343 : vector<4x288xf32>
    %345 = arith.mulf %281, %344 : vector<4x288xf32>
    %346 = arith.addf %221, %345 : vector<4x288xf32>
    %c1_284 = arith.constant 1 : index
    %c0_285 = arith.constant 0 : index
    %c3_286 = arith.constant 3 : index
    %c0_287 = arith.constant 0 : index
    %c0_288 = arith.constant 0 : index
    %347 = vector.load %arg9[%c1_284, %c0_285, %c3_286, %c0_287, %c0_288] : memref<4x4x4x4x288xf32, #tpu.memory_space<vmem>>, vector<1x1x1x4x288xf32>
    %348 = vector.shape_cast %347 : vector<1x1x1x4x288xf32> to vector<4x288xf32>
    %349 = vector.broadcast %244 : vector<1x288xf32> to vector<4x288xf32>
    %350 = arith.mulf %348, %349 : vector<4x288xf32>
    %c1_289 = arith.constant 1 : index
    %c1_290 = arith.constant 1 : index
    %c3_291 = arith.constant 3 : index
    %c0_292 = arith.constant 0 : index
    %c0_293 = arith.constant 0 : index
    %351 = vector.load %arg9[%c1_289, %c1_290, %c3_291, %c0_292, %c0_293] : memref<4x4x4x4x288xf32, #tpu.memory_space<vmem>>, vector<1x1x1x4x288xf32>
    %352 = vector.shape_cast %351 : vector<1x1x1x4x288xf32> to vector<4x288xf32>
    %353 = vector.broadcast %245 : vector<1x288xf32> to vector<4x288xf32>
    %354 = arith.mulf %352, %353 : vector<4x288xf32>
    %355 = arith.addf %350, %354 : vector<4x288xf32>
    %c1_294 = arith.constant 1 : index
    %c2_295 = arith.constant 2 : index
    %c3_296 = arith.constant 3 : index
    %c0_297 = arith.constant 0 : index
    %c0_298 = arith.constant 0 : index
    %356 = vector.load %arg9[%c1_294, %c2_295, %c3_296, %c0_297, %c0_298] : memref<4x4x4x4x288xf32, #tpu.memory_space<vmem>>, vector<1x1x1x4x288xf32>
    %357 = vector.shape_cast %356 : vector<1x1x1x4x288xf32> to vector<4x288xf32>
    %358 = vector.broadcast %246 : vector<1x288xf32> to vector<4x288xf32>
    %359 = arith.mulf %357, %358 : vector<4x288xf32>
    %360 = arith.addf %355, %359 : vector<4x288xf32>
    %c1_299 = arith.constant 1 : index
    %c3_300 = arith.constant 3 : index
    %c3_301 = arith.constant 3 : index
    %c0_302 = arith.constant 0 : index
    %c0_303 = arith.constant 0 : index
    %361 = vector.load %arg9[%c1_299, %c3_300, %c3_301, %c0_302, %c0_303] : memref<4x4x4x4x288xf32, #tpu.memory_space<vmem>>, vector<1x1x1x4x288xf32>
    %362 = vector.shape_cast %361 : vector<1x1x1x4x288xf32> to vector<4x288xf32>
    %363 = vector.broadcast %247 : vector<1x288xf32> to vector<4x288xf32>
    %364 = arith.mulf %362, %363 : vector<4x288xf32>
    %365 = arith.addf %360, %364 : vector<4x288xf32>
    %366 = arith.mulf %281, %365 : vector<4x288xf32>
    %367 = arith.addf %242, %366 : vector<4x288xf32>
    %368 = vector.extract_strided_slice %105 {offsets = [2, 0], sizes = [1, 288], strides = [1, 1]} : vector<4x288xf32> to vector<1x288xf32>
    %369 = vector.extract_strided_slice %111 {offsets = [8, 0], sizes = [1, 288], strides = [1, 1]} : vector<16x288xf32> to vector<1x288xf32>
    %370 = vector.extract_strided_slice %111 {offsets = [9, 0], sizes = [1, 288], strides = [1, 1]} : vector<16x288xf32> to vector<1x288xf32>
    %371 = vector.extract_strided_slice %111 {offsets = [10, 0], sizes = [1, 288], strides = [1, 1]} : vector<16x288xf32> to vector<1x288xf32>
    %372 = vector.extract_strided_slice %111 {offsets = [11, 0], sizes = [1, 288], strides = [1, 1]} : vector<16x288xf32> to vector<1x288xf32>
    %c2_304 = arith.constant 2 : index
    %c0_305 = arith.constant 0 : index
    %c0_306 = arith.constant 0 : index
    %373 = vector.load %arg11[%c2_304, %c0_305, %c0_306] : memref<4x4x288xf32, #tpu.memory_space<vmem>>, vector<1x4x288xf32>
    %374 = vector.shape_cast %373 : vector<1x4x288xf32> to vector<4x288xf32>
    %c2_307 = arith.constant 2 : index
    %c0_308 = arith.constant 0 : index
    %c0_309 = arith.constant 0 : index
    %c0_310 = arith.constant 0 : index
    %375 = vector.load %arg10[%c2_307, %c0_308, %c0_309, %c0_310] : memref<4x4x4x288xf32, #tpu.memory_space<vmem>>, vector<1x1x4x288xf32>
    %376 = vector.shape_cast %375 : vector<1x1x4x288xf32> to vector<4x288xf32>
    %377 = vector.broadcast %369 : vector<1x288xf32> to vector<4x288xf32>
    %378 = arith.mulf %376, %377 : vector<4x288xf32>
    %379 = arith.addf %374, %378 : vector<4x288xf32>
    %c2_311 = arith.constant 2 : index
    %c1_312 = arith.constant 1 : index
    %c0_313 = arith.constant 0 : index
    %c0_314 = arith.constant 0 : index
    %380 = vector.load %arg10[%c2_311, %c1_312, %c0_313, %c0_314] : memref<4x4x4x288xf32, #tpu.memory_space<vmem>>, vector<1x1x4x288xf32>
    %381 = vector.shape_cast %380 : vector<1x1x4x288xf32> to vector<4x288xf32>
    %382 = vector.broadcast %370 : vector<1x288xf32> to vector<4x288xf32>
    %383 = arith.mulf %381, %382 : vector<4x288xf32>
    %384 = arith.addf %379, %383 : vector<4x288xf32>
    %c2_315 = arith.constant 2 : index
    %c2_316 = arith.constant 2 : index
    %c0_317 = arith.constant 0 : index
    %c0_318 = arith.constant 0 : index
    %385 = vector.load %arg10[%c2_315, %c2_316, %c0_317, %c0_318] : memref<4x4x4x288xf32, #tpu.memory_space<vmem>>, vector<1x1x4x288xf32>
    %386 = vector.shape_cast %385 : vector<1x1x4x288xf32> to vector<4x288xf32>
    %387 = vector.broadcast %371 : vector<1x288xf32> to vector<4x288xf32>
    %388 = arith.mulf %386, %387 : vector<4x288xf32>
    %389 = arith.addf %384, %388 : vector<4x288xf32>
    %c2_319 = arith.constant 2 : index
    %c3_320 = arith.constant 3 : index
    %c0_321 = arith.constant 0 : index
    %c0_322 = arith.constant 0 : index
    %390 = vector.load %arg10[%c2_319, %c3_320, %c0_321, %c0_322] : memref<4x4x4x288xf32, #tpu.memory_space<vmem>>, vector<1x1x4x288xf32>
    %391 = vector.shape_cast %390 : vector<1x1x4x288xf32> to vector<4x288xf32>
    %392 = vector.broadcast %372 : vector<1x288xf32> to vector<4x288xf32>
    %393 = arith.mulf %391, %392 : vector<4x288xf32>
    %394 = arith.addf %389, %393 : vector<4x288xf32>
    %cst_323 = arith.constant dense<0xFF800000> : vector<288xf32>
    %395 = vector.multi_reduction <maximumf>, %394, %cst_323 [0] : vector<4x288xf32> to vector<288xf32>
    %396 = vector.shape_cast %395 : vector<288xf32> to vector<1x288xf32>
    %397 = vector.broadcast %396 : vector<1x288xf32> to vector<4x288xf32>
    %398 = arith.subf %394, %397 : vector<4x288xf32>
    %399 = math.exp %398 : vector<4x288xf32>
    %cst_324 = arith.constant dense<0.000000e+00> : vector<288xf32>
    %400 = vector.multi_reduction <add>, %399, %cst_324 [0] : vector<4x288xf32> to vector<288xf32>
    %401 = vector.shape_cast %400 : vector<288xf32> to vector<1x288xf32>
    %402 = tpu.reciprocal %401 {approx = true} : vector<1x288xf32> -> vector<1x288xf32>
    %403 = vector.broadcast %402 : vector<1x288xf32> to vector<4x288xf32>
    %404 = arith.mulf %399, %403 : vector<4x288xf32>
    %405 = vector.broadcast %368 : vector<1x288xf32> to vector<4x288xf32>
    %406 = arith.mulf %405, %404 : vector<4x288xf32>
    %407 = arith.addf %282, %406 : vector<4x288xf32>
    %408 = arith.addf %283, %368 : vector<1x288xf32>
    %c2_325 = arith.constant 2 : index
    %c0_326 = arith.constant 0 : index
    %c0_327 = arith.constant 0 : index
    %c0_328 = arith.constant 0 : index
    %c0_329 = arith.constant 0 : index
    %409 = vector.load %arg9[%c2_325, %c0_326, %c0_327, %c0_328, %c0_329] : memref<4x4x4x4x288xf32, #tpu.memory_space<vmem>>, vector<1x1x1x4x288xf32>
    %410 = vector.shape_cast %409 : vector<1x1x1x4x288xf32> to vector<4x288xf32>
    %411 = vector.broadcast %369 : vector<1x288xf32> to vector<4x288xf32>
    %412 = arith.mulf %410, %411 : vector<4x288xf32>
    %c2_330 = arith.constant 2 : index
    %c1_331 = arith.constant 1 : index
    %c0_332 = arith.constant 0 : index
    %c0_333 = arith.constant 0 : index
    %c0_334 = arith.constant 0 : index
    %413 = vector.load %arg9[%c2_330, %c1_331, %c0_332, %c0_333, %c0_334] : memref<4x4x4x4x288xf32, #tpu.memory_space<vmem>>, vector<1x1x1x4x288xf32>
    %414 = vector.shape_cast %413 : vector<1x1x1x4x288xf32> to vector<4x288xf32>
    %415 = vector.broadcast %370 : vector<1x288xf32> to vector<4x288xf32>
    %416 = arith.mulf %414, %415 : vector<4x288xf32>
    %417 = arith.addf %412, %416 : vector<4x288xf32>
    %c2_335 = arith.constant 2 : index
    %c2_336 = arith.constant 2 : index
    %c0_337 = arith.constant 0 : index
    %c0_338 = arith.constant 0 : index
    %c0_339 = arith.constant 0 : index
    %418 = vector.load %arg9[%c2_335, %c2_336, %c0_337, %c0_338, %c0_339] : memref<4x4x4x4x288xf32, #tpu.memory_space<vmem>>, vector<1x1x1x4x288xf32>
    %419 = vector.shape_cast %418 : vector<1x1x1x4x288xf32> to vector<4x288xf32>
    %420 = vector.broadcast %371 : vector<1x288xf32> to vector<4x288xf32>
    %421 = arith.mulf %419, %420 : vector<4x288xf32>
    %422 = arith.addf %417, %421 : vector<4x288xf32>
    %c2_340 = arith.constant 2 : index
    %c3_341 = arith.constant 3 : index
    %c0_342 = arith.constant 0 : index
    %c0_343 = arith.constant 0 : index
    %c0_344 = arith.constant 0 : index
    %423 = vector.load %arg9[%c2_340, %c3_341, %c0_342, %c0_343, %c0_344] : memref<4x4x4x4x288xf32, #tpu.memory_space<vmem>>, vector<1x1x1x4x288xf32>
    %424 = vector.shape_cast %423 : vector<1x1x1x4x288xf32> to vector<4x288xf32>
    %425 = vector.broadcast %372 : vector<1x288xf32> to vector<4x288xf32>
    %426 = arith.mulf %424, %425 : vector<4x288xf32>
    %427 = arith.addf %422, %426 : vector<4x288xf32>
    %428 = arith.mulf %406, %427 : vector<4x288xf32>
    %429 = arith.addf %304, %428 : vector<4x288xf32>
    %c2_345 = arith.constant 2 : index
    %c0_346 = arith.constant 0 : index
    %c1_347 = arith.constant 1 : index
    %c0_348 = arith.constant 0 : index
    %c0_349 = arith.constant 0 : index
    %430 = vector.load %arg9[%c2_345, %c0_346, %c1_347, %c0_348, %c0_349] : memref<4x4x4x4x288xf32, #tpu.memory_space<vmem>>, vector<1x1x1x4x288xf32>
    %431 = vector.shape_cast %430 : vector<1x1x1x4x288xf32> to vector<4x288xf32>
    %432 = vector.broadcast %369 : vector<1x288xf32> to vector<4x288xf32>
    %433 = arith.mulf %431, %432 : vector<4x288xf32>
    %c2_350 = arith.constant 2 : index
    %c1_351 = arith.constant 1 : index
    %c1_352 = arith.constant 1 : index
    %c0_353 = arith.constant 0 : index
    %c0_354 = arith.constant 0 : index
    %434 = vector.load %arg9[%c2_350, %c1_351, %c1_352, %c0_353, %c0_354] : memref<4x4x4x4x288xf32, #tpu.memory_space<vmem>>, vector<1x1x1x4x288xf32>
    %435 = vector.shape_cast %434 : vector<1x1x1x4x288xf32> to vector<4x288xf32>
    %436 = vector.broadcast %370 : vector<1x288xf32> to vector<4x288xf32>
    %437 = arith.mulf %435, %436 : vector<4x288xf32>
    %438 = arith.addf %433, %437 : vector<4x288xf32>
    %c2_355 = arith.constant 2 : index
    %c2_356 = arith.constant 2 : index
    %c1_357 = arith.constant 1 : index
    %c0_358 = arith.constant 0 : index
    %c0_359 = arith.constant 0 : index
    %439 = vector.load %arg9[%c2_355, %c2_356, %c1_357, %c0_358, %c0_359] : memref<4x4x4x4x288xf32, #tpu.memory_space<vmem>>, vector<1x1x1x4x288xf32>
    %440 = vector.shape_cast %439 : vector<1x1x1x4x288xf32> to vector<4x288xf32>
    %441 = vector.broadcast %371 : vector<1x288xf32> to vector<4x288xf32>
    %442 = arith.mulf %440, %441 : vector<4x288xf32>
    %443 = arith.addf %438, %442 : vector<4x288xf32>
    %c2_360 = arith.constant 2 : index
    %c3_361 = arith.constant 3 : index
    %c1_362 = arith.constant 1 : index
    %c0_363 = arith.constant 0 : index
    %c0_364 = arith.constant 0 : index
    %444 = vector.load %arg9[%c2_360, %c3_361, %c1_362, %c0_363, %c0_364] : memref<4x4x4x4x288xf32, #tpu.memory_space<vmem>>, vector<1x1x1x4x288xf32>
    %445 = vector.shape_cast %444 : vector<1x1x1x4x288xf32> to vector<4x288xf32>
    %446 = vector.broadcast %372 : vector<1x288xf32> to vector<4x288xf32>
    %447 = arith.mulf %445, %446 : vector<4x288xf32>
    %448 = arith.addf %443, %447 : vector<4x288xf32>
    %449 = arith.mulf %406, %448 : vector<4x288xf32>
    %450 = arith.addf %325, %449 : vector<4x288xf32>
    %c2_365 = arith.constant 2 : index
    %c0_366 = arith.constant 0 : index
    %c2_367 = arith.constant 2 : index
    %c0_368 = arith.constant 0 : index
    %c0_369 = arith.constant 0 : index
    %451 = vector.load %arg9[%c2_365, %c0_366, %c2_367, %c0_368, %c0_369] : memref<4x4x4x4x288xf32, #tpu.memory_space<vmem>>, vector<1x1x1x4x288xf32>
    %452 = vector.shape_cast %451 : vector<1x1x1x4x288xf32> to vector<4x288xf32>
    %453 = vector.broadcast %369 : vector<1x288xf32> to vector<4x288xf32>
    %454 = arith.mulf %452, %453 : vector<4x288xf32>
    %c2_370 = arith.constant 2 : index
    %c1_371 = arith.constant 1 : index
    %c2_372 = arith.constant 2 : index
    %c0_373 = arith.constant 0 : index
    %c0_374 = arith.constant 0 : index
    %455 = vector.load %arg9[%c2_370, %c1_371, %c2_372, %c0_373, %c0_374] : memref<4x4x4x4x288xf32, #tpu.memory_space<vmem>>, vector<1x1x1x4x288xf32>
    %456 = vector.shape_cast %455 : vector<1x1x1x4x288xf32> to vector<4x288xf32>
    %457 = vector.broadcast %370 : vector<1x288xf32> to vector<4x288xf32>
    %458 = arith.mulf %456, %457 : vector<4x288xf32>
    %459 = arith.addf %454, %458 : vector<4x288xf32>
    %c2_375 = arith.constant 2 : index
    %c2_376 = arith.constant 2 : index
    %c2_377 = arith.constant 2 : index
    %c0_378 = arith.constant 0 : index
    %c0_379 = arith.constant 0 : index
    %460 = vector.load %arg9[%c2_375, %c2_376, %c2_377, %c0_378, %c0_379] : memref<4x4x4x4x288xf32, #tpu.memory_space<vmem>>, vector<1x1x1x4x288xf32>
    %461 = vector.shape_cast %460 : vector<1x1x1x4x288xf32> to vector<4x288xf32>
    %462 = vector.broadcast %371 : vector<1x288xf32> to vector<4x288xf32>
    %463 = arith.mulf %461, %462 : vector<4x288xf32>
    %464 = arith.addf %459, %463 : vector<4x288xf32>
    %c2_380 = arith.constant 2 : index
    %c3_381 = arith.constant 3 : index
    %c2_382 = arith.constant 2 : index
    %c0_383 = arith.constant 0 : index
    %c0_384 = arith.constant 0 : index
    %465 = vector.load %arg9[%c2_380, %c3_381, %c2_382, %c0_383, %c0_384] : memref<4x4x4x4x288xf32, #tpu.memory_space<vmem>>, vector<1x1x1x4x288xf32>
    %466 = vector.shape_cast %465 : vector<1x1x1x4x288xf32> to vector<4x288xf32>
    %467 = vector.broadcast %372 : vector<1x288xf32> to vector<4x288xf32>
    %468 = arith.mulf %466, %467 : vector<4x288xf32>
    %469 = arith.addf %464, %468 : vector<4x288xf32>
    %470 = arith.mulf %406, %469 : vector<4x288xf32>
    %471 = arith.addf %346, %470 : vector<4x288xf32>
    %c2_385 = arith.constant 2 : index
    %c0_386 = arith.constant 0 : index
    %c3_387 = arith.constant 3 : index
    %c0_388 = arith.constant 0 : index
    %c0_389 = arith.constant 0 : index
    %472 = vector.load %arg9[%c2_385, %c0_386, %c3_387, %c0_388, %c0_389] : memref<4x4x4x4x288xf32, #tpu.memory_space<vmem>>, vector<1x1x1x4x288xf32>
    %473 = vector.shape_cast %472 : vector<1x1x1x4x288xf32> to vector<4x288xf32>
    %474 = vector.broadcast %369 : vector<1x288xf32> to vector<4x288xf32>
    %475 = arith.mulf %473, %474 : vector<4x288xf32>
    %c2_390 = arith.constant 2 : index
    %c1_391 = arith.constant 1 : index
    %c3_392 = arith.constant 3 : index
    %c0_393 = arith.constant 0 : index
    %c0_394 = arith.constant 0 : index
    %476 = vector.load %arg9[%c2_390, %c1_391, %c3_392, %c0_393, %c0_394] : memref<4x4x4x4x288xf32, #tpu.memory_space<vmem>>, vector<1x1x1x4x288xf32>
    %477 = vector.shape_cast %476 : vector<1x1x1x4x288xf32> to vector<4x288xf32>
    %478 = vector.broadcast %370 : vector<1x288xf32> to vector<4x288xf32>
    %479 = arith.mulf %477, %478 : vector<4x288xf32>
    %480 = arith.addf %475, %479 : vector<4x288xf32>
    %c2_395 = arith.constant 2 : index
    %c2_396 = arith.constant 2 : index
    %c3_397 = arith.constant 3 : index
    %c0_398 = arith.constant 0 : index
    %c0_399 = arith.constant 0 : index
    %481 = vector.load %arg9[%c2_395, %c2_396, %c3_397, %c0_398, %c0_399] : memref<4x4x4x4x288xf32, #tpu.memory_space<vmem>>, vector<1x1x1x4x288xf32>
    %482 = vector.shape_cast %481 : vector<1x1x1x4x288xf32> to vector<4x288xf32>
    %483 = vector.broadcast %371 : vector<1x288xf32> to vector<4x288xf32>
    %484 = arith.mulf %482, %483 : vector<4x288xf32>
    %485 = arith.addf %480, %484 : vector<4x288xf32>
    %c2_400 = arith.constant 2 : index
    %c3_401 = arith.constant 3 : index
    %c3_402 = arith.constant 3 : index
    %c0_403 = arith.constant 0 : index
    %c0_404 = arith.constant 0 : index
    %486 = vector.load %arg9[%c2_400, %c3_401, %c3_402, %c0_403, %c0_404] : memref<4x4x4x4x288xf32, #tpu.memory_space<vmem>>, vector<1x1x1x4x288xf32>
    %487 = vector.shape_cast %486 : vector<1x1x1x4x288xf32> to vector<4x288xf32>
    %488 = vector.broadcast %372 : vector<1x288xf32> to vector<4x288xf32>
    %489 = arith.mulf %487, %488 : vector<4x288xf32>
    %490 = arith.addf %485, %489 : vector<4x288xf32>
    %491 = arith.mulf %406, %490 : vector<4x288xf32>
    %492 = arith.addf %367, %491 : vector<4x288xf32>
    %493 = vector.extract_strided_slice %105 {offsets = [3, 0], sizes = [1, 288], strides = [1, 1]} : vector<4x288xf32> to vector<1x288xf32>
    %494 = vector.extract_strided_slice %111 {offsets = [12, 0], sizes = [1, 288], strides = [1, 1]} : vector<16x288xf32> to vector<1x288xf32>
    %495 = vector.extract_strided_slice %111 {offsets = [13, 0], sizes = [1, 288], strides = [1, 1]} : vector<16x288xf32> to vector<1x288xf32>
    %496 = vector.extract_strided_slice %111 {offsets = [14, 0], sizes = [1, 288], strides = [1, 1]} : vector<16x288xf32> to vector<1x288xf32>
    %497 = vector.extract_strided_slice %111 {offsets = [15, 0], sizes = [1, 288], strides = [1, 1]} : vector<16x288xf32> to vector<1x288xf32>
    %c3_405 = arith.constant 3 : index
    %c0_406 = arith.constant 0 : index
    %c0_407 = arith.constant 0 : index
    %498 = vector.load %arg11[%c3_405, %c0_406, %c0_407] : memref<4x4x288xf32, #tpu.memory_space<vmem>>, vector<1x4x288xf32>
    %499 = vector.shape_cast %498 : vector<1x4x288xf32> to vector<4x288xf32>
    %c3_408 = arith.constant 3 : index
    %c0_409 = arith.constant 0 : index
    %c0_410 = arith.constant 0 : index
    %c0_411 = arith.constant 0 : index
    %500 = vector.load %arg10[%c3_408, %c0_409, %c0_410, %c0_411] : memref<4x4x4x288xf32, #tpu.memory_space<vmem>>, vector<1x1x4x288xf32>
    %501 = vector.shape_cast %500 : vector<1x1x4x288xf32> to vector<4x288xf32>
    %502 = vector.broadcast %494 : vector<1x288xf32> to vector<4x288xf32>
    %503 = arith.mulf %501, %502 : vector<4x288xf32>
    %504 = arith.addf %499, %503 : vector<4x288xf32>
    %c3_412 = arith.constant 3 : index
    %c1_413 = arith.constant 1 : index
    %c0_414 = arith.constant 0 : index
    %c0_415 = arith.constant 0 : index
    %505 = vector.load %arg10[%c3_412, %c1_413, %c0_414, %c0_415] : memref<4x4x4x288xf32, #tpu.memory_space<vmem>>, vector<1x1x4x288xf32>
    %506 = vector.shape_cast %505 : vector<1x1x4x288xf32> to vector<4x288xf32>
    %507 = vector.broadcast %495 : vector<1x288xf32> to vector<4x288xf32>
    %508 = arith.mulf %506, %507 : vector<4x288xf32>
    %509 = arith.addf %504, %508 : vector<4x288xf32>
    %c3_416 = arith.constant 3 : index
    %c2_417 = arith.constant 2 : index
    %c0_418 = arith.constant 0 : index
    %c0_419 = arith.constant 0 : index
    %510 = vector.load %arg10[%c3_416, %c2_417, %c0_418, %c0_419] : memref<4x4x4x288xf32, #tpu.memory_space<vmem>>, vector<1x1x4x288xf32>
    %511 = vector.shape_cast %510 : vector<1x1x4x288xf32> to vector<4x288xf32>
    %512 = vector.broadcast %496 : vector<1x288xf32> to vector<4x288xf32>
    %513 = arith.mulf %511, %512 : vector<4x288xf32>
    %514 = arith.addf %509, %513 : vector<4x288xf32>
    %c3_420 = arith.constant 3 : index
    %c3_421 = arith.constant 3 : index
    %c0_422 = arith.constant 0 : index
    %c0_423 = arith.constant 0 : index
    %515 = vector.load %arg10[%c3_420, %c3_421, %c0_422, %c0_423] : memref<4x4x4x288xf32, #tpu.memory_space<vmem>>, vector<1x1x4x288xf32>
    %516 = vector.shape_cast %515 : vector<1x1x4x288xf32> to vector<4x288xf32>
    %517 = vector.broadcast %497 : vector<1x288xf32> to vector<4x288xf32>
    %518 = arith.mulf %516, %517 : vector<4x288xf32>
    %519 = arith.addf %514, %518 : vector<4x288xf32>
    %cst_424 = arith.constant dense<0xFF800000> : vector<288xf32>
    %520 = vector.multi_reduction <maximumf>, %519, %cst_424 [0] : vector<4x288xf32> to vector<288xf32>
    %521 = vector.shape_cast %520 : vector<288xf32> to vector<1x288xf32>
    %522 = vector.broadcast %521 : vector<1x288xf32> to vector<4x288xf32>
    %523 = arith.subf %519, %522 : vector<4x288xf32>
    %524 = math.exp %523 : vector<4x288xf32>
    %cst_425 = arith.constant dense<0.000000e+00> : vector<288xf32>
    %525 = vector.multi_reduction <add>, %524, %cst_425 [0] : vector<4x288xf32> to vector<288xf32>
    %526 = vector.shape_cast %525 : vector<288xf32> to vector<1x288xf32>
    %527 = tpu.reciprocal %526 {approx = true} : vector<1x288xf32> -> vector<1x288xf32>
    %528 = vector.broadcast %527 : vector<1x288xf32> to vector<4x288xf32>
    %529 = arith.mulf %524, %528 : vector<4x288xf32>
    %530 = vector.broadcast %493 : vector<1x288xf32> to vector<4x288xf32>
    %531 = arith.mulf %530, %529 : vector<4x288xf32>
    %532 = arith.addf %407, %531 : vector<4x288xf32>
    %533 = arith.addf %408, %493 : vector<1x288xf32>
    %c3_426 = arith.constant 3 : index
    %c0_427 = arith.constant 0 : index
    %c0_428 = arith.constant 0 : index
    %c0_429 = arith.constant 0 : index
    %c0_430 = arith.constant 0 : index
    %534 = vector.load %arg9[%c3_426, %c0_427, %c0_428, %c0_429, %c0_430] : memref<4x4x4x4x288xf32, #tpu.memory_space<vmem>>, vector<1x1x1x4x288xf32>
    %535 = vector.shape_cast %534 : vector<1x1x1x4x288xf32> to vector<4x288xf32>
    %536 = vector.broadcast %494 : vector<1x288xf32> to vector<4x288xf32>
    %537 = arith.mulf %535, %536 : vector<4x288xf32>
    %c3_431 = arith.constant 3 : index
    %c1_432 = arith.constant 1 : index
    %c0_433 = arith.constant 0 : index
    %c0_434 = arith.constant 0 : index
    %c0_435 = arith.constant 0 : index
    %538 = vector.load %arg9[%c3_431, %c1_432, %c0_433, %c0_434, %c0_435] : memref<4x4x4x4x288xf32, #tpu.memory_space<vmem>>, vector<1x1x1x4x288xf32>
    %539 = vector.shape_cast %538 : vector<1x1x1x4x288xf32> to vector<4x288xf32>
    %540 = vector.broadcast %495 : vector<1x288xf32> to vector<4x288xf32>
    %541 = arith.mulf %539, %540 : vector<4x288xf32>
    %542 = arith.addf %537, %541 : vector<4x288xf32>
    %c3_436 = arith.constant 3 : index
    %c2_437 = arith.constant 2 : index
    %c0_438 = arith.constant 0 : index
    %c0_439 = arith.constant 0 : index
    %c0_440 = arith.constant 0 : index
    %543 = vector.load %arg9[%c3_436, %c2_437, %c0_438, %c0_439, %c0_440] : memref<4x4x4x4x288xf32, #tpu.memory_space<vmem>>, vector<1x1x1x4x288xf32>
    %544 = vector.shape_cast %543 : vector<1x1x1x4x288xf32> to vector<4x288xf32>
    %545 = vector.broadcast %496 : vector<1x288xf32> to vector<4x288xf32>
    %546 = arith.mulf %544, %545 : vector<4x288xf32>
    %547 = arith.addf %542, %546 : vector<4x288xf32>
    %c3_441 = arith.constant 3 : index
    %c3_442 = arith.constant 3 : index
    %c0_443 = arith.constant 0 : index
    %c0_444 = arith.constant 0 : index
    %c0_445 = arith.constant 0 : index
    %548 = vector.load %arg9[%c3_441, %c3_442, %c0_443, %c0_444, %c0_445] : memref<4x4x4x4x288xf32, #tpu.memory_space<vmem>>, vector<1x1x1x4x288xf32>
    %549 = vector.shape_cast %548 : vector<1x1x1x4x288xf32> to vector<4x288xf32>
    %550 = vector.broadcast %497 : vector<1x288xf32> to vector<4x288xf32>
    %551 = arith.mulf %549, %550 : vector<4x288xf32>
    %552 = arith.addf %547, %551 : vector<4x288xf32>
    %553 = arith.mulf %531, %552 : vector<4x288xf32>
    %554 = arith.addf %429, %553 : vector<4x288xf32>
    %c3_446 = arith.constant 3 : index
    %c0_447 = arith.constant 0 : index
    %c1_448 = arith.constant 1 : index
    %c0_449 = arith.constant 0 : index
    %c0_450 = arith.constant 0 : index
    %555 = vector.load %arg9[%c3_446, %c0_447, %c1_448, %c0_449, %c0_450] : memref<4x4x4x4x288xf32, #tpu.memory_space<vmem>>, vector<1x1x1x4x288xf32>
    %556 = vector.shape_cast %555 : vector<1x1x1x4x288xf32> to vector<4x288xf32>
    %557 = vector.broadcast %494 : vector<1x288xf32> to vector<4x288xf32>
    %558 = arith.mulf %556, %557 : vector<4x288xf32>
    %c3_451 = arith.constant 3 : index
    %c1_452 = arith.constant 1 : index
    %c1_453 = arith.constant 1 : index
    %c0_454 = arith.constant 0 : index
    %c0_455 = arith.constant 0 : index
    %559 = vector.load %arg9[%c3_451, %c1_452, %c1_453, %c0_454, %c0_455] : memref<4x4x4x4x288xf32, #tpu.memory_space<vmem>>, vector<1x1x1x4x288xf32>
    %560 = vector.shape_cast %559 : vector<1x1x1x4x288xf32> to vector<4x288xf32>
    %561 = vector.broadcast %495 : vector<1x288xf32> to vector<4x288xf32>
    %562 = arith.mulf %560, %561 : vector<4x288xf32>
    %563 = arith.addf %558, %562 : vector<4x288xf32>
    %c3_456 = arith.constant 3 : index
    %c2_457 = arith.constant 2 : index
    %c1_458 = arith.constant 1 : index
    %c0_459 = arith.constant 0 : index
    %c0_460 = arith.constant 0 : index
    %564 = vector.load %arg9[%c3_456, %c2_457, %c1_458, %c0_459, %c0_460] : memref<4x4x4x4x288xf32, #tpu.memory_space<vmem>>, vector<1x1x1x4x288xf32>
    %565 = vector.shape_cast %564 : vector<1x1x1x4x288xf32> to vector<4x288xf32>
    %566 = vector.broadcast %496 : vector<1x288xf32> to vector<4x288xf32>
    %567 = arith.mulf %565, %566 : vector<4x288xf32>
    %568 = arith.addf %563, %567 : vector<4x288xf32>
    %c3_461 = arith.constant 3 : index
    %c3_462 = arith.constant 3 : index
    %c1_463 = arith.constant 1 : index
    %c0_464 = arith.constant 0 : index
    %c0_465 = arith.constant 0 : index
    %569 = vector.load %arg9[%c3_461, %c3_462, %c1_463, %c0_464, %c0_465] : memref<4x4x4x4x288xf32, #tpu.memory_space<vmem>>, vector<1x1x1x4x288xf32>
    %570 = vector.shape_cast %569 : vector<1x1x1x4x288xf32> to vector<4x288xf32>
    %571 = vector.broadcast %497 : vector<1x288xf32> to vector<4x288xf32>
    %572 = arith.mulf %570, %571 : vector<4x288xf32>
    %573 = arith.addf %568, %572 : vector<4x288xf32>
    %574 = arith.mulf %531, %573 : vector<4x288xf32>
    %575 = arith.addf %450, %574 : vector<4x288xf32>
    %c3_466 = arith.constant 3 : index
    %c0_467 = arith.constant 0 : index
    %c2_468 = arith.constant 2 : index
    %c0_469 = arith.constant 0 : index
    %c0_470 = arith.constant 0 : index
    %576 = vector.load %arg9[%c3_466, %c0_467, %c2_468, %c0_469, %c0_470] : memref<4x4x4x4x288xf32, #tpu.memory_space<vmem>>, vector<1x1x1x4x288xf32>
    %577 = vector.shape_cast %576 : vector<1x1x1x4x288xf32> to vector<4x288xf32>
    %578 = vector.broadcast %494 : vector<1x288xf32> to vector<4x288xf32>
    %579 = arith.mulf %577, %578 : vector<4x288xf32>
    %c3_471 = arith.constant 3 : index
    %c1_472 = arith.constant 1 : index
    %c2_473 = arith.constant 2 : index
    %c0_474 = arith.constant 0 : index
    %c0_475 = arith.constant 0 : index
    %580 = vector.load %arg9[%c3_471, %c1_472, %c2_473, %c0_474, %c0_475] : memref<4x4x4x4x288xf32, #tpu.memory_space<vmem>>, vector<1x1x1x4x288xf32>
    %581 = vector.shape_cast %580 : vector<1x1x1x4x288xf32> to vector<4x288xf32>
    %582 = vector.broadcast %495 : vector<1x288xf32> to vector<4x288xf32>
    %583 = arith.mulf %581, %582 : vector<4x288xf32>
    %584 = arith.addf %579, %583 : vector<4x288xf32>
    %c3_476 = arith.constant 3 : index
    %c2_477 = arith.constant 2 : index
    %c2_478 = arith.constant 2 : index
    %c0_479 = arith.constant 0 : index
    %c0_480 = arith.constant 0 : index
    %585 = vector.load %arg9[%c3_476, %c2_477, %c2_478, %c0_479, %c0_480] : memref<4x4x4x4x288xf32, #tpu.memory_space<vmem>>, vector<1x1x1x4x288xf32>
    %586 = vector.shape_cast %585 : vector<1x1x1x4x288xf32> to vector<4x288xf32>
    %587 = vector.broadcast %496 : vector<1x288xf32> to vector<4x288xf32>
    %588 = arith.mulf %586, %587 : vector<4x288xf32>
    %589 = arith.addf %584, %588 : vector<4x288xf32>
    %c3_481 = arith.constant 3 : index
    %c3_482 = arith.constant 3 : index
    %c2_483 = arith.constant 2 : index
    %c0_484 = arith.constant 0 : index
    %c0_485 = arith.constant 0 : index
    %590 = vector.load %arg9[%c3_481, %c3_482, %c2_483, %c0_484, %c0_485] : memref<4x4x4x4x288xf32, #tpu.memory_space<vmem>>, vector<1x1x1x4x288xf32>
    %591 = vector.shape_cast %590 : vector<1x1x1x4x288xf32> to vector<4x288xf32>
    %592 = vector.broadcast %497 : vector<1x288xf32> to vector<4x288xf32>
    %593 = arith.mulf %591, %592 : vector<4x288xf32>
    %594 = arith.addf %589, %593 : vector<4x288xf32>
    %595 = arith.mulf %531, %594 : vector<4x288xf32>
    %596 = arith.addf %471, %595 : vector<4x288xf32>
    %c3_486 = arith.constant 3 : index
    %c0_487 = arith.constant 0 : index
    %c3_488 = arith.constant 3 : index
    %c0_489 = arith.constant 0 : index
    %c0_490 = arith.constant 0 : index
    %597 = vector.load %arg9[%c3_486, %c0_487, %c3_488, %c0_489, %c0_490] : memref<4x4x4x4x288xf32, #tpu.memory_space<vmem>>, vector<1x1x1x4x288xf32>
    %598 = vector.shape_cast %597 : vector<1x1x1x4x288xf32> to vector<4x288xf32>
    %599 = vector.broadcast %494 : vector<1x288xf32> to vector<4x288xf32>
    %600 = arith.mulf %598, %599 : vector<4x288xf32>
    %c3_491 = arith.constant 3 : index
    %c1_492 = arith.constant 1 : index
    %c3_493 = arith.constant 3 : index
    %c0_494 = arith.constant 0 : index
    %c0_495 = arith.constant 0 : index
    %601 = vector.load %arg9[%c3_491, %c1_492, %c3_493, %c0_494, %c0_495] : memref<4x4x4x4x288xf32, #tpu.memory_space<vmem>>, vector<1x1x1x4x288xf32>
    %602 = vector.shape_cast %601 : vector<1x1x1x4x288xf32> to vector<4x288xf32>
    %603 = vector.broadcast %495 : vector<1x288xf32> to vector<4x288xf32>
    %604 = arith.mulf %602, %603 : vector<4x288xf32>
    %605 = arith.addf %600, %604 : vector<4x288xf32>
    %c3_496 = arith.constant 3 : index
    %c2_497 = arith.constant 2 : index
    %c3_498 = arith.constant 3 : index
    %c0_499 = arith.constant 0 : index
    %c0_500 = arith.constant 0 : index
    %606 = vector.load %arg9[%c3_496, %c2_497, %c3_498, %c0_499, %c0_500] : memref<4x4x4x4x288xf32, #tpu.memory_space<vmem>>, vector<1x1x1x4x288xf32>
    %607 = vector.shape_cast %606 : vector<1x1x1x4x288xf32> to vector<4x288xf32>
    %608 = vector.broadcast %496 : vector<1x288xf32> to vector<4x288xf32>
    %609 = arith.mulf %607, %608 : vector<4x288xf32>
    %610 = arith.addf %605, %609 : vector<4x288xf32>
    %c3_501 = arith.constant 3 : index
    %c3_502 = arith.constant 3 : index
    %c3_503 = arith.constant 3 : index
    %c0_504 = arith.constant 0 : index
    %c0_505 = arith.constant 0 : index
    %611 = vector.load %arg9[%c3_501, %c3_502, %c3_503, %c0_504, %c0_505] : memref<4x4x4x4x288xf32, #tpu.memory_space<vmem>>, vector<1x1x1x4x288xf32>
    %612 = vector.shape_cast %611 : vector<1x1x1x4x288xf32> to vector<4x288xf32>
    %613 = vector.broadcast %497 : vector<1x288xf32> to vector<4x288xf32>
    %614 = arith.mulf %612, %613 : vector<4x288xf32>
    %615 = arith.addf %610, %614 : vector<4x288xf32>
    %616 = arith.mulf %531, %615 : vector<4x288xf32>
    %617 = arith.addf %492, %616 : vector<4x288xf32>
    %cst_506 = arith.constant dense<0.000000e+00> : vector<4xf32>
    %618 = vector.multi_reduction <add>, %532, %cst_506 [1] : vector<4x288xf32> to vector<4xf32>
    %619 = vector.shape_cast %618 : vector<4xf32> to vector<4x1xf32>
    %cst_507 = arith.constant dense<0.000000e+00> : vector<1xf32>
    %620 = vector.multi_reduction <add>, %533, %cst_507 [1] : vector<1x288xf32> to vector<1xf32>
    %621 = vector.shape_cast %620 : vector<1xf32> to vector<1x1xf32>
    %622 = tpu.reciprocal %619 {approx = true} : vector<4x1xf32> -> vector<4x1xf32>
    %623 = tpu.reciprocal %621 {approx = true} : vector<1x1xf32> -> vector<1x1xf32>
    %624 = vector.broadcast %623 : vector<1x1xf32> to vector<4x1xf32>
    %625 = arith.mulf %619, %624 : vector<4x1xf32>
    %c0_508 = arith.constant 0 : index
    %c0_509 = arith.constant 0 : index
    %c0_510 = arith.constant 0 : index
    %626 = vector.load %arg12[%c0_508, %c0_509, %c0_510] : memref<1x4x1xf32, #tpu.memory_space<vmem>>, vector<1x4x1xf32>
    %627 = vector.shape_cast %626 : vector<1x4x1xf32> to vector<4x1xf32>
    %628 = vector.shape_cast %625 : vector<4x1xf32> to vector<1x4x1xf32>
    tpu.vector_store %arg12[%c0_508, %c0_509, %c0_510], %628 {strides = array<i32>} : memref<1x4x1xf32, #tpu.memory_space<vmem>>, vector<1x4x1xf32>,
    %cst_511 = arith.constant dense<0.000000e+00> : vector<4xf32>
    %629 = vector.multi_reduction <add>, %554, %cst_511 [1] : vector<4x288xf32> to vector<4xf32>
    %630 = vector.shape_cast %629 : vector<4xf32> to vector<4x1xf32>
    %631 = arith.mulf %630, %622 : vector<4x1xf32>
    %cst_512 = arith.constant dense<0.000000e+00> : vector<4xf32>
    %632 = vector.multi_reduction <add>, %575, %cst_512 [1] : vector<4x288xf32> to vector<4xf32>
    %633 = vector.shape_cast %632 : vector<4xf32> to vector<4x1xf32>
    %634 = arith.mulf %633, %622 : vector<4x1xf32>
    %cst_513 = arith.constant dense<0.000000e+00> : vector<4xf32>
    %635 = vector.multi_reduction <add>, %596, %cst_513 [1] : vector<4x288xf32> to vector<4xf32>
    %636 = vector.shape_cast %635 : vector<4xf32> to vector<4x1xf32>
    %637 = arith.mulf %636, %622 : vector<4x1xf32>
    %cst_514 = arith.constant dense<0.000000e+00> : vector<4xf32>
    %638 = vector.multi_reduction <add>, %617, %cst_514 [1] : vector<4x288xf32> to vector<4xf32>
    %639 = vector.shape_cast %638 : vector<4xf32> to vector<4x1xf32>
    %640 = arith.mulf %639, %622 : vector<4x1xf32>
    %641 = tpu.concatenate %631, %634, %637, %640 in 1 : vector<4x1xf32>, vector<4x1xf32>, vector<4x1xf32>, vector<4x1xf32> -> vector<4x4xf32>
    %c0_515 = arith.constant 0 : index
    %c0_516 = arith.constant 0 : index
    %c0_517 = arith.constant 0 : index
    %642 = vector.load %arg13[%c0_515, %c0_516, %c0_517] : memref<1x4x4xf32, #tpu.memory_space<vmem>>, vector<1x4x4xf32>
    %643 = vector.shape_cast %642 : vector<1x4x4xf32> to vector<4x4xf32>
    %644 = vector.shape_cast %641 : vector<4x4xf32> to vector<1x4x4xf32>
    tpu.vector_store %arg13[%c0_515, %c0_516, %c0_517], %644 {strides = array<i32>} : memref<1x4x4xf32, #tpu.memory_space<vmem>>, vector<1x4x4xf32>,
    return
  }
  func.func @transform_0(%arg0: i32) -> (i32, i32, i32) {
    %c0_i32 = arith.constant 0 : i32
    %c0_i32_0 = arith.constant 0 : i32
    %c0_i32_1 = arith.constant 0 : i32
    return %arg0, %c0_i32, %c0_i32_0 : i32, i32, i32
  }
  func.func @transform_1(%arg0: i32) -> (i32, i32, i32) {
    %c0_i32 = arith.constant 0 : i32
    %c0_i32_0 = arith.constant 0 : i32
    %c0_i32_1 = arith.constant 0 : i32
    %c0_i32_2 = arith.constant 0 : i32
    return %c0_i32, %c0_i32_0, %c0_i32_1 : i32, i32, i32
  }
  func.func @transform_2(%arg0: i32) -> (i32, i32, i32) {
    %c0_i32 = arith.constant 0 : i32
    %c0_i32_0 = arith.constant 0 : i32
    %c0_i32_1 = arith.constant 0 : i32
    %c0_i32_2 = arith.constant 0 : i32
    return %c0_i32, %c0_i32_0, %c0_i32_1 : i32, i32, i32
  }
  func.func @transform_3(%arg0: i32) -> (i32, i32) {
    %c0_i32 = arith.constant 0 : i32
    %c0_i32_0 = arith.constant 0 : i32
    %c0_i32_1 = arith.constant 0 : i32
    return %c0_i32, %c0_i32_0 : i32, i32
  }
  func.func @transform_4(%arg0: i32) -> (i32, i32) {
    %c0_i32 = arith.constant 0 : i32
    %c0_i32_0 = arith.constant 0 : i32
    %c0_i32_1 = arith.constant 0 : i32
    return %c0_i32, %c0_i32_0 : i32, i32
  }
  func.func @transform_5(%arg0: i32) -> (i32, i32) {
    %c0_i32 = arith.constant 0 : i32
    %c0_i32_0 = arith.constant 0 : i32
    %c0_i32_1 = arith.constant 0 : i32
    return %c0_i32, %c0_i32_0 : i32, i32
  }
  func.func @transform_6(%arg0: i32) -> (i32, i32) {
    %c0_i32 = arith.constant 0 : i32
    %c0_i32_0 = arith.constant 0 : i32
    %c0_i32_1 = arith.constant 0 : i32
    return %c0_i32, %c0_i32_0 : i32, i32
  }
  func.func @transform_7(%arg0: i32) -> (i32, i32) {
    %c0_i32 = arith.constant 0 : i32
    %c0_i32_0 = arith.constant 0 : i32
    %c0_i32_1 = arith.constant 0 : i32
    return %c0_i32, %c0_i32_0 : i32, i32
  }
  func.func @transform_8(%arg0: i32) -> (i32, i32, i32, i32, i32) {
    %c0_i32 = arith.constant 0 : i32
    %c0_i32_0 = arith.constant 0 : i32
    %c0_i32_1 = arith.constant 0 : i32
    %c0_i32_2 = arith.constant 0 : i32
    %c0_i32_3 = arith.constant 0 : i32
    %c0_i32_4 = arith.constant 0 : i32
    return %c0_i32, %c0_i32_0, %c0_i32_1, %c0_i32_2, %c0_i32_3 : i32, i32, i32, i32, i32
  }
  func.func @transform_9(%arg0: i32) -> (i32, i32, i32, i32) {
    %c0_i32 = arith.constant 0 : i32
    %c0_i32_0 = arith.constant 0 : i32
    %c0_i32_1 = arith.constant 0 : i32
    %c0_i32_2 = arith.constant 0 : i32
    %c0_i32_3 = arith.constant 0 : i32
    return %c0_i32, %c0_i32_0, %c0_i32_1, %c0_i32_2 : i32, i32, i32, i32
  }
  func.func @transform_10(%arg0: i32) -> (i32, i32, i32) {
    %c0_i32 = arith.constant 0 : i32
    %c0_i32_0 = arith.constant 0 : i32
    %c0_i32_1 = arith.constant 0 : i32
    %c0_i32_2 = arith.constant 0 : i32
    return %c0_i32, %c0_i32_0, %c0_i32_1 : i32, i32, i32
  }
  func.func @transform_11(%arg0: i32) -> (i32, i32, i32) {
    %c0_i32 = arith.constant 0 : i32
    %c0_i32_0 = arith.constant 0 : i32
    %c0_i32_1 = arith.constant 0 : i32
    return %arg0, %c0_i32, %c0_i32_0 : i32, i32, i32
  }
  func.func @transform_12(%arg0: i32) -> (i32, i32, i32) {
    %c0_i32 = arith.constant 0 : i32
    %c0_i32_0 = arith.constant 0 : i32
    %c0_i32_1 = arith.constant 0 : i32
    return %arg0, %c0_i32, %c0_i32_0 : i32, i32, i32
  }
}

</mosaic_0001>

<llo_original>
// kernel: tpu_custom_call.1
$region0: #{tpu_custom_call.1}
  #allocation0 [shape = 'u32[]', space=smem, size = 0x4, offset = 0x4, fixed_abs, tag = 'smem constant byte address 0x4 - core index']
  #allocation1 [shape = 'u32[72,128]{1,0:T(1,128)}', space=vmem, size = 0x9000, scoped, tag = 'internal scratch']
  %s0 = inlined_call_operand.vmem [shape: bf16[2,4,326], index: 0, kind: input, shape index: {}]
  %s1 = inlined_call_operand.vmem [shape: bf16[9,4,4], index: 1, kind: input, shape index: {}]
  %s2 = inlined_call_operand.vmem [shape: bf16[9,16,4], index: 2, kind: input, shape index: {}]
  %s3 = inlined_call_operand.vmem [shape: f32[4,1], index: 3, kind: input, shape index: {}]
  %s4 = inlined_call_operand.vmem [shape: f32[4,1], index: 4, kind: input, shape index: {}]
  %s5 = inlined_call_operand.vmem [shape: f32[16,1], index: 5, kind: input, shape index: {}]
  %s6 = inlined_call_operand.vmem [shape: f32[16,1], index: 6, kind: input, shape index: {}]
  %s7 = inlined_call_operand.vmem [shape: f32[1,288], index: 7, kind: input, shape index: {}]
  %s8 = inlined_call_operand.hbm [shape: f32[4,4,4,4,288], index: 8, kind: input, shape index: {}]
  %s9 = inlined_call_operand.hbm [shape: f32[4,4,4,288], index: 9, kind: input, shape index: {}]
  %s10 = inlined_call_operand.vmem [shape: f32[4,4,288], index: 10, kind: input, shape index: {}]
  %s11 = inlined_call_operand.vmem [shape: f32[2,4,1], index: 11, kind: output, shape index: {0}]
  %s12 = inlined_call_operand.hbm [shape: f32[2,4,4], index: 12, kind: output, shape index: {1}]
  %13 = xla_tuple %s11, %s12
  %s14 = sld [smem:[#allocation0]]
  $region93: #{tpu_custom_call.1} parent=0
    _
  %s16 = ssub.s32 1, %s14
  %s17 = scalar_select 0, %s16, %s14
  $region1: #{tpu_custom_call.1} parent=0
    #allocation2 [shape = 'u8[393216]{0}', space=vmem, size = 0x60000, scoped, tag = 'input window, operand 8, single buffered']
    #allocation3 [shape = 's32[2]{0}', space=sflag, size = 0x8, scoped, tag = 'scoped memory for tpu_custom_call.1']
    #allocation4 [shape = 's32[2]{0}', space=sflag, size = 0x8, scoped, tag = 'scoped memory for tpu_custom_call.1']
    #allocation5 [shape = 'u8[98304]{0}', space=vmem, size = 0x18000, scoped, tag = 'input window, operand 9, single buffered']
    #allocation6 [shape = 's32[1]{0}', space=sflag, size = 0x4, scoped, tag = 'scoped memory for tpu_custom_call.1']
    #allocation7 [shape = 'u8[4096]{0}', space=vmem, size = 0x1000, scoped, tag = 'output window, operand 1']
    %18 = vsyncpa [#allocation3], 0
    %19 = vsyncpa [#allocation6], 0
    %20 = vsyncpa [#allocation4], 0
    %s21 = scalar_lea.sflag [#allocation4], 1
    %22 = vsyncpa %s21, 0
    loop: start=0, step=1, limit=4
    $region2: #{tpu_custom_call.1} parent=1 // loop_pre_header
      _
    $region3: #{tpu_custom_call.1} parent=1 // loop_header
      %s24 = sphi 0, %s28
      %p25 = scmp.ge.s32.totalorder %s24, 4
      %s34 = sphi 0, %s36
      %s37 = sphi 0, %s34
      %s38 = sphi 0, %s37
      %s54 = sphi 0, %s38
      %s58 = sphi 0, %s58
      %s60 = sphi 0, %s58
      %s61 = sphi 0, %s60
      %s75 = sphi 0, %s61
      %s79 = sphi 0, %s79
      %s81 = sphi 0, %s79
      %s82 = sphi 0, %s81
      %s96 = sphi 0, %s82
      %s100 = sphi 0, %s100
      %s102 = sphi 0, %s100
      %s103 = sphi 0, %s102
      %s117 = sphi 0, %s103
      %s121 = sphi 0, %s121
      %s123 = sphi 0, %s121
      %s124 = sphi 0, %s123
      %s138 = sphi 0, %s124
      %s142 = sphi 0, %s142
      %s144 = sphi 0, %s142
      %s145 = sphi 0, %s144
      %s159 = sphi 0, %s145
      %s163 = sphi 0, %s163
      %s165 = sphi 0, %s163
      %s166 = sphi 0, %s165
      %s180 = sphi 0, %s166
      %s184 = sphi 0, %s184
      %s186 = sphi 0, %s184
      %s187 = sphi 0, %s186
      %s201 = sphi 0, %s187
      %s205 = sphi 0, %s205
      %s207 = sphi 0, %s205
      %s208 = sphi 0, %s207
      %s222 = sphi 0, %s208
      %s226 = sphi 0, %s226
      %s228 = sphi 0, %s226
      %s229 = sphi 0, %s228
      %s243 = sphi 0, %s229
      %s247 = sphi 0, %s247
      %s249 = sphi 0, %s247
      %s250 = sphi 0, %s249
      %s264 = sphi 0, %s250
      %s270 = sphi 0, %s272
      %s273 = sphi 0, %s270
      %s274 = sphi 0, %s273
      %s290 = sphi 0, %s274
      %s296 = sphi 0, %s298
      %s299 = sphi 0, %s296
      %s300 = sphi 0, %s299
      %s316 = sphi 0, %s300
    $region4: #{tpu_custom_call.1} parent=1 // loop_header_branch
      %27 = sbr.rel (%p25) target = $region8
    $region5: #{tpu_custom_call.1} parent=1 // loop_body
      %s29 = ssub.s32 %s24, 1
      %s30 = ssub.s32 %s24, 2
      %s31 = sadd.s32 %s24, 1
      %s32 = ssub.s32 %s24, %s31
      %p33 = scmp.eq.s32.totalorder %s32, 0
      %s35 = sadd.s32 %s34, 1
      %s36 = scalar_select %p33, %s34, %s35
      %p39 = pneg %p33
      %p40 = scmp.eq.s32.totalorder %s24, 1
      %p41 = por %p39, %p40
      %p42 = scmp.ne.s32.totalorder %s34, %s37
      %p43 = scmp.eq.s32.totalorder %s24, 0
      %p44 = por %p42, %p43
      %p45 = scmp.ne.s32.totalorder %s34, %s37
      %p46 = scmp.eq.s32.totalorder %s29, 1
      %p47 = por %p45, %p46
      %p48 = scmp.ne.s32.totalorder %s37, %s38
      %p49 = scmp.eq.s32.totalorder %s29, 0
      %p50 = por %p48, %p49
      %p51 = scmp.ne.s32.totalorder %s37, %s38
      %p52 = scmp.eq.s32.totalorder %s30, 1
      %p53 = por %p51, %p52
      %p55 = scmp.ne.s32.totalorder %s38, %s54
      %p56 = scmp.eq.s32.totalorder %s30, 0
      %p57 = por %p55, %p56
      %s59 = sadd.s32 %s58, 1
      %p62 = scmp.eq.s32.totalorder %s24, 1
      %p63 = scmp.ne.s32.totalorder %s58, %s60
      %p64 = scmp.eq.s32.totalorder %s24, 0
      %p65 = por %p63, %p64
      %p66 = scmp.ne.s32.totalorder %s58, %s60
      %p67 = scmp.eq.s32.totalorder %s29, 1
      %p68 = por %p66, %p67
      %p69 = scmp.ne.s32.totalorder %s60, %s61
      %p70 = scmp.eq.s32.totalorder %s29, 0
      %p71 = por %p69, %p70
      %p72 = scmp.ne.s32.totalorder %s60, %s61
      %p73 = scmp.eq.s32.totalorder %s30, 1
      %p74 = por %p72, %p73
      %p76 = scmp.ne.s32.totalorder %s61, %s75
      %p77 = scmp.eq.s32.totalorder %s30, 0
      %p78 = por %p76, %p77
      %s80 = sadd.s32 %s79, 1
      %p83 = scmp.eq.s32.totalorder %s24, 1
      %p84 = scmp.ne.s32.totalorder %s79, %s81
      %p85 = scmp.eq.s32.totalorder %s24, 0
      %p86 = por %p84, %p85
      %p87 = scmp.ne.s32.totalorder %s79, %s81
      %p88 = scmp.eq.s32.totalorder %s29, 1
      %p89 = por %p87, %p88
      %p90 = scmp.ne.s32.totalorder %s81, %s82
      %p91 = scmp.eq.s32.totalorder %s29, 0
      %p92 = por %p90, %p91
      %p93 = scmp.ne.s32.totalorder %s81, %s82
      %p94 = scmp.eq.s32.totalorder %s30, 1
      %p95 = por %p93, %p94
      %p97 = scmp.ne.s32.totalorder %s82, %s96
      %p98 = scmp.eq.s32.totalorder %s30, 0
      %p99 = por %p97, %p98
      %s101 = sadd.s32 %s100, 1
      %p104 = scmp.eq.s32.totalorder %s24, 1
      %p105 = scmp.ne.s32.totalorder %s100, %s102
      %p106 = scmp.eq.s32.totalorder %s24, 0
      %p107 = por %p105, %p106
      %p108 = scmp.ne.s32.totalorder %s100, %s102
      %p109 = scmp.eq.s32.totalorder %s29, 1
      %p110 = por %p108, %p109
      %p111 = scmp.ne.s32.totalorder %s102, %s103
      %p112 = scmp.eq.s32.totalorder %s29, 0
      %p113 = por %p111, %p112
      %p114 = scmp.ne.s32.totalorder %s102, %s103
      %p115 = scmp.eq.s32.totalorder %s30, 1
      %p116 = por %p114, %p115
      %p118 = scmp.ne.s32.totalorder %s103, %s117
      %p119 = scmp.eq.s32.totalorder %s30, 0
      %p120 = por %p118, %p119
      %s122 = sadd.s32 %s121, 1
      %p125 = scmp.eq.s32.totalorder %s24, 1
      %p126 = scmp.ne.s32.totalorder %s121, %s123
      %p127 = scmp.eq.s32.totalorder %s24, 0
      %p128 = por %p126, %p127
      %p129 = scmp.ne.s32.totalorder %s121, %s123
      %p130 = scmp.eq.s32.totalorder %s29, 1
      %p131 = por %p129, %p130
      %p132 = scmp.ne.s32.totalorder %s123, %s124
      %p133 = scmp.eq.s32.totalorder %s29, 0
      %p134 = por %p132, %p133
      %p135 = scmp.ne.s32.totalorder %s123, %s124
      %p136 = scmp.eq.s32.totalorder %s30, 1
      %p137 = por %p135, %p136
      %p139 = scmp.ne.s32.totalorder %s124, %s138
      %p140 = scmp.eq.s32.totalorder %s30, 0
      %p141 = por %p139, %p140
      %s143 = sadd.s32 %s142, 1
      %p146 = scmp.eq.s32.totalorder %s24, 1
      %p147 = scmp.ne.s32.totalorder %s142, %s144
      %p148 = scmp.eq.s32.totalorder %s24, 0
      %p149 = por %p147, %p148
      %p150 = scmp.ne.s32.totalorder %s142, %s144
      %p151 = scmp.eq.s32.totalorder %s29, 1
      %p152 = por %p150, %p151
      %p153 = scmp.ne.s32.totalorder %s144, %s145
      %p154 = scmp.eq.s32.totalorder %s29, 0
      %p155 = por %p153, %p154
      %p156 = scmp.ne.s32.totalorder %s144, %s145
      %p157 = scmp.eq.s32.totalorder %s30, 1
      %p158 = por %p156, %p157
      %p160 = scmp.ne.s32.totalorder %s145, %s159
      %p161 = scmp.eq.s32.totalorder %s30, 0
      %p162 = por %p160, %p161
      %s164 = sadd.s32 %s163, 1
      %p167 = scmp.eq.s32.totalorder %s24, 1
      %p168 = scmp.ne.s32.totalorder %s163, %s165
      %p169 = scmp.eq.s32.totalorder %s24, 0
      %p170 = por %p168, %p169
      %p171 = scmp.ne.s32.totalorder %s163, %s165
      %p172 = scmp.eq.s32.totalorder %s29, 1
      %p173 = por %p171, %p172
      %p174 = scmp.ne.s32.totalorder %s165, %s166
      %p175 = scmp.eq.s32.totalorder %s29, 0
      %p176 = por %p174, %p175
      %p177 = scmp.ne.s32.totalorder %s165, %s166
      %p178 = scmp.eq.s32.totalorder %s30, 1
      %p179 = por %p177, %p178
      %p181 = scmp.ne.s32.totalorder %s166, %s180
      %p182 = scmp.eq.s32.totalorder %s30, 0
      %p183 = por %p181, %p182
      %s185 = sadd.s32 %s184, 1
      %p188 = scmp.eq.s32.totalorder %s24, 1
      %p189 = scmp.ne.s32.totalorder %s184, %s186
      %p190 = scmp.eq.s32.totalorder %s24, 0
      %p191 = por %p189, %p190
      %p192 = scmp.ne.s32.totalorder %s184, %s186
      %p193 = scmp.eq.s32.totalorder %s29, 1
      %p194 = por %p192, %p193
      %p195 = scmp.ne.s32.totalorder %s186, %s187
      %p196 = scmp.eq.s32.totalorder %s29, 0
      %p197 = por %p195, %p196
      %p198 = scmp.ne.s32.totalorder %s186, %s187
      %p199 = scmp.eq.s32.totalorder %s30, 1
      %p200 = por %p198, %p199
      %p202 = scmp.ne.s32.totalorder %s187, %s201
      %p203 = scmp.eq.s32.totalorder %s30, 0
      %p204 = por %p202, %p203
      %s206 = sadd.s32 %s205, 1
      %p209 = scmp.eq.s32.totalorder %s24, 1
      %p210 = scmp.ne.s32.totalorder %s205, %s207
      %p211 = scmp.eq.s32.totalorder %s24, 0
      %p212 = por %p210, %p211
      %p213 = scmp.ne.s32.totalorder %s205, %s207
      %p214 = scmp.eq.s32.totalorder %s29, 1
      %p215 = por %p213, %p214
      %p216 = scmp.ne.s32.totalorder %s207, %s208
      %p217 = scmp.eq.s32.totalorder %s29, 0
      %p218 = por %p216, %p217
      %p219 = scmp.ne.s32.totalorder %s207, %s208
      %p220 = scmp.eq.s32.totalorder %s30, 1
      %p221 = por %p219, %p220
      %p223 = scmp.ne.s32.totalorder %s208, %s222
      %p224 = scmp.eq.s32.totalorder %s30, 0
      %p225 = por %p223, %p224
      %s227 = sadd.s32 %s226, 1
      %p230 = scmp.eq.s32.totalorder %s24, 1
      %p231 = scmp.ne.s32.totalorder %s226, %s228
      %p232 = scmp.eq.s32.totalorder %s24, 0
      %p233 = por %p231, %p232
      %p234 = scmp.ne.s32.totalorder %s226, %s228
      %p235 = scmp.eq.s32.totalorder %s29, 1
      %p236 = por %p234, %p235
      %p237 = scmp.ne.s32.totalorder %s228, %s229
      %p238 = scmp.eq.s32.totalorder %s29, 0
      %p239 = por %p237, %p238
      %p240 = scmp.ne.s32.totalorder %s228, %s229
      %p241 = scmp.eq.s32.totalorder %s30, 1
      %p242 = por %p240, %p241
      %p244 = scmp.ne.s32.totalorder %s229, %s243
      %p245 = scmp.eq.s32.totalorder %s30, 0
      %p246 = por %p244, %p245
      %s248 = sadd.s32 %s247, 1
      %p251 = scmp.eq.s32.totalorder %s24, 1
      %p252 = scmp.ne.s32.totalorder %s247, %s249
      %p253 = scmp.eq.s32.totalorder %s24, 0
      %p254 = por %p252, %p253
      %p255 = scmp.ne.s32.totalorder %s247, %s249
      %p256 = scmp.eq.s32.totalorder %s29, 1
      %p257 = por %p255, %p256
      %p258 = scmp.ne.s32.totalorder %s249, %s250
      %p259 = scmp.eq.s32.totalorder %s29, 0
      %p260 = por %p258, %p259
      %p261 = scmp.ne.s32.totalorder %s249, %s250
      %p262 = scmp.eq.s32.totalorder %s30, 1
      %p263 = por %p261, %p262
      %p265 = scmp.ne.s32.totalorder %s250, %s264
      %p266 = scmp.eq.s32.totalorder %s30, 0
      %p267 = por %p265, %p266
      %s268 = ssub.s32 %s24, %s31
      %p269 = scmp.eq.s32.totalorder %s268, 0
      %s271 = sadd.s32 %s270, 1
      %s272 = scalar_select %p269, %s270, %s271
      %p275 = pneg %p269
      %p276 = scmp.eq.s32.totalorder %s24, 1
      %p277 = por %p275, %p276
      %p278 = scmp.ne.s32.totalorder %s270, %s273
      %p279 = scmp.eq.s32.totalorder %s24, 0
      %p280 = por %p278, %p279
      %p281 = scmp.ne.s32.totalorder %s270, %s273
      %p282 = scmp.eq.s32.totalorder %s29, 1
      %p283 = por %p281, %p282
      %p284 = scmp.ne.s32.totalorder %s273, %s274
      %p285 = scmp.eq.s32.totalorder %s29, 0
      %p286 = por %p284, %p285
      %p287 = scmp.ne.s32.totalorder %s273, %s274
      %p288 = scmp.eq.s32.totalorder %s30, 1
      %p289 = por %p287, %p288
      %p291 = scmp.ne.s32.totalorder %s274, %s290
      %p292 = scmp.eq.s32.totalorder %s30, 0
      %p293 = por %p291, %p292
      %s294 = ssub.s32 %s24, %s31
      %p295 = scmp.eq.s32.totalorder %s294, 0
      %s297 = sadd.s32 %s296, 1
      %s298 = scalar_select %p295, %s296, %s297
      %p301 = pneg %p295
      %p302 = scmp.eq.s32.totalorder %s24, 1
      %p303 = por %p301, %p302
      %p304 = scmp.ne.s32.totalorder %s296, %s299
      %p305 = scmp.eq.s32.totalorder %s24, 0
      %p306 = por %p304, %p305
      %p307 = scmp.ne.s32.totalorder %s296, %s299
      %p308 = scmp.eq.s32.totalorder %s29, 1
      %p309 = por %p307, %p308
      %p310 = scmp.ne.s32.totalorder %s299, %s300
      %p311 = scmp.eq.s32.totalorder %s29, 0
      %p312 = por %p310, %p311
      %p313 = scmp.ne.s32.totalorder %s299, %s300
      %p314 = scmp.eq.s32.totalorder %s30, 1
      %p315 = por %p313, %p314
      %p317 = scmp.ne.s32.totalorder %s300, %s316
      %p318 = scmp.eq.s32.totalorder %s30, 0
      %p319 = por %p317, %p318
      %p320 = scmp.le.s32.totalorder 1, %s24
      %p321 = scmp.lt.s32.totalorder %s24, 3
      %p322 = pnand %p320, %p321
      %p323 = pneg %p322
      // Predicated region
      $region9: #{tpu_custom_call.1} parent=5 // pred_check
        _
      $region10: #{tpu_custom_call.1} parent=5 // pred_check_branch
        %325 = sbr.rel (%p322) target = $region12
      $region11: #{tpu_custom_call.1} parent=5 // pred_region
        %s326 = ssub.s32 %s24, 1
        // Predicated region
        $region13: #{tpu_custom_call.1} parent=11 // pred_check
          %p327 = pneg %p71
        $region14: #{tpu_custom_call.1} parent=11 // pred_check_branch
          %329 = sbr.rel (%p327) target = $region16
        $region15: #{tpu_custom_call.1} parent=11 // pred_region
          _
        $region16: #{tpu_custom_call.1} parent=11 // pred_fallthru
          _
        // Predicated region
        $region17: #{tpu_custom_call.1} parent=11 // pred_check
          %p330 = pneg %p92
        $region18: #{tpu_custom_call.1} parent=11 // pred_check_branch
          %332 = sbr.rel (%p330) target = $region20
        $region19: #{tpu_custom_call.1} parent=11 // pred_region
          _
        $region20: #{tpu_custom_call.1} parent=11 // pred_fallthru
          _
        // Predicated region
        $region21: #{tpu_custom_call.1} parent=11 // pred_check
          %p333 = pneg %p113
        $region22: #{tpu_custom_call.1} parent=11 // pred_check_branch
          %335 = sbr.rel (%p333) target = $region24
        $region23: #{tpu_custom_call.1} parent=11 // pred_region
          _
        $region24: #{tpu_custom_call.1} parent=11 // pred_fallthru
          _
        // Predicated region
        $region25: #{tpu_custom_call.1} parent=11 // pred_check
          %p336 = pneg %p134
        $region26: #{tpu_custom_call.1} parent=11 // pred_check_branch
          %338 = sbr.rel (%p336) target = $region28
        $region27: #{tpu_custom_call.1} parent=11 // pred_region
          _
        $region28: #{tpu_custom_call.1} parent=11 // pred_fallthru
          _
        // Predicated region
        $region29: #{tpu_custom_call.1} parent=11 // pred_check
          %p339 = pneg %p155
        $region30: #{tpu_custom_call.1} parent=11 // pred_check_branch
          %341 = sbr.rel (%p339) target = $region32
        $region31: #{tpu_custom_call.1} parent=11 // pred_region
          _
        $region32: #{tpu_custom_call.1} parent=11 // pred_fallthru
          _
        // Predicated region
        $region33: #{tpu_custom_call.1} parent=11 // pred_check
          %p342 = pneg %p176
        $region34: #{tpu_custom_call.1} parent=11 // pred_check_branch
          %344 = sbr.rel (%p342) target = $region36
        $region35: #{tpu_custom_call.1} parent=11 // pred_region
          _
        $region36: #{tpu_custom_call.1} parent=11 // pred_fallthru
          _
        // Predicated region
        $region37: #{tpu_custom_call.1} parent=11 // pred_check
          %p345 = pneg %p197
        $region38: #{tpu_custom_call.1} parent=11 // pred_check_branch
          %347 = sbr.rel (%p345) target = $region40
        $region39: #{tpu_custom_call.1} parent=11 // pred_region
          _
        $region40: #{tpu_custom_call.1} parent=11 // pred_fallthru
          _
        // Predicated region
        $region41: #{tpu_custom_call.1} parent=11 // pred_check
          %p348 = pneg %p218
        $region42: #{tpu_custom_call.1} parent=11 // pred_check_branch
          %350 = sbr.rel (%p348) target = $region44
        $region43: #{tpu_custom_call.1} parent=11 // pred_region
          %352 = vsyncadd [#allocation3], 0
          %s353 = sshll.u32 %s8, 4
          %s354 = int_to_ptr.hbm [resolvable:$true] %s353
          %s355 = sshll.u32 [#allocation2], 4
          %s356 = int_to_ptr.vmem [resolvable:$true] %s355
          %361 = dma.hbm_to_vmem [thread:$0]  %s354, 12288, %s356, [#allocation3], 192, 192, 12
        $region44: #{tpu_custom_call.1} parent=11 // pred_fallthru
          _
        // Predicated region
        $region45: #{tpu_custom_call.1} parent=11 // pred_check
          %p362 = pneg %p239
        $region46: #{tpu_custom_call.1} parent=11 // pred_check_branch
          %364 = sbr.rel (%p362) target = $region48
        $region47: #{tpu_custom_call.1} parent=11 // pred_region
          %366 = vsyncadd [#allocation6], 0
          %s367 = sshll.u32 %s9, 4
          %s368 = int_to_ptr.hbm [resolvable:$true] %s367
          %s369 = sshll.u32 [#allocation5], 4
          %s370 = int_to_ptr.vmem [resolvable:$true] %s369
          %375 = dma.hbm_to_vmem [thread:$0]  %s368, 3072, %s370, [#allocation6], 192, 192, 12
        $region48: #{tpu_custom_call.1} parent=11 // pred_fallthru
          _
        // Predicated region
        $region49: #{tpu_custom_call.1} parent=11 // pred_check
          %p376 = pneg %p260
        $region50: #{tpu_custom_call.1} parent=11 // pred_check_branch
          %378 = sbr.rel (%p376) target = $region52
        $region51: #{tpu_custom_call.1} parent=11 // pred_region
          _
        $region52: #{tpu_custom_call.1} parent=11 // pred_fallthru
          _
      $region12: #{tpu_custom_call.1} parent=5 // pred_fallthru
        _
      %p379 = scmp.lt.s32.totalorder %s24, 2
      // Predicated region
      $region53: #{tpu_custom_call.1} parent=5 // pred_check
        %p380 = pneg %p379
      $region54: #{tpu_custom_call.1} parent=5 // pred_check_branch
        %382 = sbr.rel (%p380) target = $region56
      $region55: #{tpu_custom_call.1} parent=5 // pred_region
        // Predicated region
        $region57: #{tpu_custom_call.1} parent=55 // pred_check
          %p383 = pneg %p44
        $region58: #{tpu_custom_call.1} parent=55 // pred_check_branch
          %385 = sbr.rel (%p383) target = $region60
        $region59: #{tpu_custom_call.1} parent=55 // pred_region
          %p386 = scmp.lt.s32.totalorder %s24, 1
          %s387 = scalar_select %p386, %s24, 1
          %s388 = smul.addr %s387, 3
          %s389 = smul.addr %s388, 2
          %s390 = scalar_lea.vmem %s0, %s389
        $region60: #{tpu_custom_call.1} parent=55 // pred_fallthru
          _
      $region56: #{tpu_custom_call.1} parent=5 // pred_fallthru
        _
      %p391 = scmp.le.s32.totalorder 1, %s24
      %p392 = scmp.lt.s32.totalorder %s24, 3
      %p393 = pnand %p391, %p392
      %p394 = pneg %p393
      // Predicated region
      $region61: #{tpu_custom_call.1} parent=5 // pred_check
        _
      $region62: #{tpu_custom_call.1} parent=5 // pred_check_branch
        %396 = sbr.rel (%p393) target = $region64
      $region63: #{tpu_custom_call.1} parent=5 // pred_region
        %s397 = ssub.s32 %s24, 1
        // Predicated region
        $region65: #{tpu_custom_call.1} parent=63 // pred_check
          %p398 = pneg %p218
        $region66: #{tpu_custom_call.1} parent=63 // pred_check_branch
          %400 = sbr.rel (%p398) target = $region68
        $region67: #{tpu_custom_call.1} parent=63 // pred_region
          %402 = dma.done [#allocation3], 12288
        $region68: #{tpu_custom_call.1} parent=63 // pred_fallthru
          _
        // Predicated region
        $region69: #{tpu_custom_call.1} parent=63 // pred_check
          %p403 = pneg %p239
        $region70: #{tpu_custom_call.1} parent=63 // pred_check_branch
          %405 = sbr.rel (%p403) target = $region72
        $region71: #{tpu_custom_call.1} parent=63 // pred_region
          %407 = dma.done [#allocation6], 3072
        $region72: #{tpu_custom_call.1} parent=63 // pred_fallthru
          _
        %p408 = scmp.lt.s32.totalorder %s29, 1
        %s409 = scalar_select %p408, %s29, 1
        %s410 = smul.addr %s409, 3
        %s411 = smul.addr %s410, 2
        %s412 = scalar_lea.vmem %s0, %s411
        %p413 = pneg %p50
        %p414 = pneg %p47
        %p415 = pneg %p71
        %p416 = pneg %p68
        %p417 = pneg %p92
        %p418 = pneg %p89
        %p419 = pneg %p113
        %p420 = pneg %p110
        %p421 = pneg %p134
        %p422 = pneg %p131
        %p423 = pneg %p155
        %p424 = pneg %p152
        %p425 = pneg %p176
        %p426 = pneg %p173
        %p427 = pneg %p197
        %p428 = pneg %p194
        %p429 = pneg %p218
        %p430 = pneg %p215
        %p431 = pneg %p239
        %p432 = pneg %p236
        %p433 = pneg %p260
        %p434 = pneg %p257
        %p435 = pneg %p286
        %p436 = pneg %p283
        %p437 = scmp.lt.s32.totalorder %s29, 1
        %s438 = scalar_select %p437, %s29, 1
        %s439 = smul.addr %s438, 4
        %s440 = scalar_lea.vmem %s11, %s439
        %p441 = pneg %p312
        %p442 = pneg %p309
        %s443 = sand.u32 %s299, 1
        %s444 = scalar_lea.sflag [#allocation4], %s443
        %s445 = sand.u32 %s299, 1
        %s446 = smul.addr %s445, 4
        %s447 = scalar_lea.vmem [#allocation7], %s446
        %p448 = scmp.lt.s32.totalorder %s29, 1
        %s449 = scalar_select %p448, %s29, 1
        %s450 = smul.addr %s449, 3
        %s451 = smul.addr %s450, 2
        %s452 = scalar_lea.vmem %s0, %s451
        %p453 = scmp.lt.s32.totalorder %s29, 1
        %s454 = scalar_select %p453, %s29, 1
        %s455 = smul.addr %s454, 4
        %s456 = scalar_lea.vmem %s11, %s455
        %v458 = vld [vmem:[%s452] sm:$0x3f]
        %v459 = vld [vmem:[%s1] sm:$0x3]
        %v460 = vld [vmem:[%s2] sm:$0xf]
        %v461 = vld [vmem:[%s2 + $0x4] sm:$0xf]
        %s462 = scalar_lea.vmem %s1, 2
        %v463 = vld [vmem:[%s462] sm:$0x3]
        %465 = vst [vmem:[#allocation1] ss:$4 sm:$0xff] %v458
        %v466 = vld.sshfl [vmem:[#allocation1] sm:$0xff pattern:$0x73625140]
        %v468 = vld.sshfl [vmem:[#allocation1 + $0x8] sm:$0xff pattern:$0x73625140]
        %v470 = vld.sshfl [vmem:[#allocation1 + $0x10] sm:$0xff pattern:$0x73625140]
        %472 = vrot.lane.b32.xlu0 %v466, 127
        %v473 = vpop.permute.xlu0 %472
        %474 = vrot.lane.b32.xlu0 %v468, 127
        %v475 = vpop.permute.xlu0 %474
        %476 = vrot.lane.b32.xlu0 %v470, 127
        %v477 = vpop.permute.xlu0 %476
        %vm478 = vcmask 1039360
        %v479 = vsel %vm478, %v473, %v475
        %v480 = vsel %vm478, %v475, %v477
        %vm481 = vcmask 31744
        %v483 = vsel %vm481, %v463, 0
        %vm485 = vcmask 1041408
        %v487 = vsel %vm485, %v479, 0
        %v490 = vsel %vm485, %v480, 0
        %v493 = vsel %vm485, %v477, 0
        %495 = vmatpush.bf16.msra.mxu0 0
        %496 = vmatpush.bf16.msra.mxu0 0
        %497 = vmatpush.bf16.msra.mxu0 0
        %498 = vmatpush.bf16.msra.mxu0 0
        %499 = vmatpush.bf16.msra.mxu0 0
        %500 = vmatpush.bf16.msra.mxu0 0
        %501 = vmatpush.bf16.msra.mxu0 0
        %502 = vmatpush.bf16.msra.mxu0 %v487
        %503 = vmatmul.bf16.gmra.mxu0 %v483
        %v504 = vpop.f32.mrf.mxu0
        %v505 = vadd.f32 0.0, %v504
        %v506 = vpop.f32.mrf.mxu0
        %507 = vdwg.mxu0
        %508 = vmatpush.bf16.msra.mxu0 0
        %509 = vmatpush.bf16.msra.mxu0 0
        %510 = vmatpush.bf16.msra.mxu0 0
        %511 = vmatpush.bf16.msra.mxu0 0
        %512 = vmatpush.bf16.msra.mxu0 0
        %513 = vmatpush.bf16.msra.mxu0 0
        %514 = vmatpush.bf16.msra.mxu0 0
        %515 = vmatpush.bf16.msra.mxu0 %v490
        %516 = vmatmul.bf16.gmra.mxu0 %v483
        %v517 = vpop.f32.mrf.mxu0
        %v518 = vadd.f32 0.0, %v517
        %v519 = vpop.f32.mrf.mxu0
        %520 = vdwg.mxu0
        %521 = vmatpush.bf16.msra.mxu0 0
        %522 = vmatpush.bf16.msra.mxu0 0
        %523 = vmatpush.bf16.msra.mxu0 0
        %524 = vmatpush.bf16.msra.mxu0 0
        %525 = vmatpush.bf16.msra.mxu0 0
        %526 = vmatpush.bf16.msra.mxu0 0
        %527 = vmatpush.bf16.msra.mxu0 0
        %528 = vmatpush.bf16.msra.mxu0 %v493
        %529 = vmatmul.bf16.gmra.mxu0 %v483
        %v530 = vpop.f32.mrf.mxu0
        %v531 = vadd.f32 0.0, %v530
        %v532 = vpop.f32.mrf.mxu0
        %533 = vdwg.mxu0
        %534 = vst [vmem:[#allocation1] ss:$4 sm:$0xff] %v458
        %v535 = vld.sshfl [vmem:[#allocation1] sm:$0xff pattern:$0x73625140]
        %v536 = vld.sshfl [vmem:[#allocation1 + $0x8] sm:$0xff pattern:$0x73625140]
        %v537 = vld.sshfl [vmem:[#allocation1 + $0x10] sm:$0xff pattern:$0x73625140]
        %v539 = vsel %vm481, %v459, 0
        %v541 = vsel %vm485, %v535, 0
        %v543 = vsel %vm485, %v536, 0
        %v545 = vsel %vm485, %v537, 0
        %547 = vmatpush.bf16.msra.mxu0 0
        %548 = vmatpush.bf16.msra.mxu0 0
        %549 = vmatpush.bf16.msra.mxu0 0
        %550 = vmatpush.bf16.msra.mxu0 0
        %551 = vmatpush.bf16.msra.mxu0 0
        %552 = vmatpush.bf16.msra.mxu0 0
        %553 = vmatpush.bf16.msra.mxu0 0
        %554 = vmatpush.bf16.msra.mxu0 %v541
        %555 = vmatmul.bf16.gmra.mxu0 %v539
        %v556 = vpop.f32.mrf.mxu0
        %v557 = vadd.f32 %v505, %v556
        %v558 = vpop.f32.mrf.mxu0
        %559 = vdwg.mxu0
        %560 = vmatpush.bf16.msra.mxu0 0
        %561 = vmatpush.bf16.msra.mxu0 0
        %562 = vmatpush.bf16.msra.mxu0 0
        %563 = vmatpush.bf16.msra.mxu0 0
        %564 = vmatpush.bf16.msra.mxu0 0
        %565 = vmatpush.bf16.msra.mxu0 0
        %566 = vmatpush.bf16.msra.mxu0 0
        %567 = vmatpush.bf16.msra.mxu0 %v543
        %568 = vmatmul.bf16.gmra.mxu0 %v539
        %v569 = vpop.f32.mrf.mxu0
        %v570 = vadd.f32 %v518, %v569
        %v571 = vpop.f32.mrf.mxu0
        %572 = vdwg.mxu0
        %573 = vmatpush.bf16.msra.mxu0 0
        %574 = vmatpush.bf16.msra.mxu0 0
        %575 = vmatpush.bf16.msra.mxu0 0
        %576 = vmatpush.bf16.msra.mxu0 0
        %577 = vmatpush.bf16.msra.mxu0 0
        %578 = vmatpush.bf16.msra.mxu0 0
        %579 = vmatpush.bf16.msra.mxu0 0
        %580 = vmatpush.bf16.msra.mxu0 %v545
        %581 = vmatmul.bf16.gmra.mxu0 %v539
        %v582 = vpop.f32.mrf.mxu0
        %v583 = vadd.f32 %v531, %v582
        %v584 = vpop.f32.mrf.mxu0
        %585 = vdwg.mxu0
        %s586 = scalar_lea.vmem %s2, 8
        %v587 = vld [vmem:[%s586] sm:$0xf]
        %v588 = vld [vmem:[%s586 + $0x4] sm:$0xf]
        %v591 = vunpack.c.l.b16 %v587
        %v592 = vunpack.c.l.b16 %v588
        %v593 = vpack.c.b16 %v592, %v591
        %594 = vst [vmem:[#allocation1] ss:$4 sm:$0xff] %v458
        %v595 = vld.sshfl [vmem:[#allocation1] sm:$0xff pattern:$0x73625140]
        %v597 = vld.sshfl [vmem:[#allocation1 + $0x8] sm:$0xff pattern:$0x73625140]
        %v599 = vld.sshfl [vmem:[#allocation1 + $0x10] sm:$0xff pattern:$0x73625140]
        %601 = vrot.lane.b32.xlu0 %v595, 127
        %v602 = vpop.permute.xlu0 %601
        %603 = vrot.lane.b32.xlu0 %v597, 127
        %v604 = vpop.permute.xlu0 %603
        %605 = vrot.lane.b32.xlu0 %v599, 127
        %v606 = vpop.permute.xlu0 %605
        %v607 = vsel %vm478, %v602, %v604
        %v608 = vsel %vm478, %v604, %v606
        %v610 = vsel %vm481, %v593, 0
        %v613 = vsel %vm485, %v607, 0
        %v616 = vsel %vm485, %v608, 0
        %v619 = vsel %vm485, %v606, 0
        %621 = vmatpush.bf16.msra.mxu0 0
        %622 = vmatpush.bf16.msra.mxu0 0
        %623 = vmatpush.bf16.msra.mxu0 0
        %624 = vmatpush.bf16.msra.mxu0 0
        %625 = vmatpush.bf16.msra.mxu0 0
        %626 = vmatpush.bf16.msra.mxu0 0
        %627 = vmatpush.bf16.msra.mxu0 0
        %628 = vmatpush.bf16.msra.mxu0 %v613
        %629 = vmatmul.bf16.gmra.mxu0 %v610
        %v630 = vpop.f32.mrf.mxu0
        %v631 = vadd.f32 0.0, %v630
        %v632 = vpop.f32.mrf.mxu0
        %v633 = vadd.f32 0.0, %v632
        %634 = vdwg.mxu0
        %635 = vmatpush.bf16.msra.mxu0 0
        %636 = vmatpush.bf16.msra.mxu0 0
        %637 = vmatpush.bf16.msra.mxu0 0
        %638 = vmatpush.bf16.msra.mxu0 0
        %639 = vmatpush.bf16.msra.mxu0 0
        %640 = vmatpush.bf16.msra.mxu0 0
        %641 = vmatpush.bf16.msra.mxu0 0
        %642 = vmatpush.bf16.msra.mxu0 %v616
        %643 = vmatmul.bf16.gmra.mxu0 %v610
        %v644 = vpop.f32.mrf.mxu0
        %v645 = vadd.f32 0.0, %v644
        %v646 = vpop.f32.mrf.mxu0
        %v647 = vadd.f32 0.0, %v646
        %648 = vdwg.mxu0
        %649 = vmatpush.bf16.msra.mxu0 0
        %650 = vmatpush.bf16.msra.mxu0 0
        %651 = vmatpush.bf16.msra.mxu0 0
        %652 = vmatpush.bf16.msra.mxu0 0
        %653 = vmatpush.bf16.msra.mxu0 0
        %654 = vmatpush.bf16.msra.mxu0 0
        %655 = vmatpush.bf16.msra.mxu0 0
        %656 = vmatpush.bf16.msra.mxu0 %v619
        %657 = vmatmul.bf16.gmra.mxu0 %v610
        %v658 = vpop.f32.mrf.mxu0
        %v659 = vadd.f32 0.0, %v658
        %v660 = vpop.f32.mrf.mxu0
        %v661 = vadd.f32 0.0, %v660
        %662 = vdwg.mxu0
        %v665 = vunpack.c.l.b16 %v460
        %v666 = vunpack.c.l.b16 %v461
        %v667 = vpack.c.b16 %v666, %v665
        %668 = vst [vmem:[#allocation1] ss:$4 sm:$0xff] %v458
        %v669 = vld.sshfl [vmem:[#allocation1] sm:$0xff pattern:$0x73625140]
        %v670 = vld.sshfl [vmem:[#allocation1 + $0x8] sm:$0xff pattern:$0x73625140]
        %v671 = vld.sshfl [vmem:[#allocation1 + $0x10] sm:$0xff pattern:$0x73625140]
        %v673 = vsel %vm481, %v667, 0
        %v675 = vsel %vm485, %v669, 0
        %v677 = vsel %vm485, %v670, 0
        %v679 = vsel %vm485, %v671, 0
        %681 = vmatpush.bf16.msra.mxu0 0
        %682 = vmatpush.bf16.msra.mxu0 0
        %683 = vmatpush.bf16.msra.mxu0 0
        %684 = vmatpush.bf16.msra.mxu0 0
        %685 = vmatpush.bf16.msra.mxu0 0
        %686 = vmatpush.bf16.msra.mxu0 0
        %687 = vmatpush.bf16.msra.mxu0 0
        %688 = vmatpush.bf16.msra.mxu0 %v675
        %689 = vmatmul.bf16.gmra.mxu0 %v673
        %v690 = vpop.f32.mrf.mxu0
        %v691 = vadd.f32 %v631, %v690
        %v692 = vpop.f32.mrf.mxu0
        %v693 = vadd.f32 %v633, %v692
        %694 = vdwg.mxu0
        %695 = vmatpush.bf16.msra.mxu0 0
        %696 = vmatpush.bf16.msra.mxu0 0
        %697 = vmatpush.bf16.msra.mxu0 0
        %698 = vmatpush.bf16.msra.mxu0 0
        %699 = vmatpush.bf16.msra.mxu0 0
        %700 = vmatpush.bf16.msra.mxu0 0
        %701 = vmatpush.bf16.msra.mxu0 0
        %702 = vmatpush.bf16.msra.mxu0 %v677
        %703 = vmatmul.bf16.gmra.mxu0 %v673
        %v704 = vpop.f32.mrf.mxu0
        %v705 = vadd.f32 %v645, %v704
        %v706 = vpop.f32.mrf.mxu0
        %v707 = vadd.f32 %v647, %v706
        %708 = vdwg.mxu0
        %709 = vmatpush.bf16.msra.mxu0 0
        %710 = vmatpush.bf16.msra.mxu0 0
        %711 = vmatpush.bf16.msra.mxu0 0
        %712 = vmatpush.bf16.msra.mxu0 0
        %713 = vmatpush.bf16.msra.mxu0 0
        %714 = vmatpush.bf16.msra.mxu0 0
        %715 = vmatpush.bf16.msra.mxu0 0
        %716 = vmatpush.bf16.msra.mxu0 %v679
        %717 = vmatmul.bf16.gmra.mxu0 %v673
        %v718 = vpop.f32.mrf.mxu0
        %v719 = vadd.f32 %v659, %v718
        %v720 = vpop.f32.mrf.mxu0
        %v721 = vadd.f32 %v661, %v720
        %722 = vdwg.mxu0
        %v723 = vld [vmem:[%s452] sm:$0x3f]
        %s724 = scalar_lea.vmem %s1, 4
        %v725 = vld [vmem:[%s724] sm:$0x3]
        %727 = vst [vmem:[#allocation1] ss:$4 sm:$0xff] %v723
        %v728 = vld.sshfl [vmem:[#allocation1] sm:$0xff pattern:$0x73625140]
        %v730 = vld.sshfl [vmem:[#allocation1 + $0x8] sm:$0xff pattern:$0x73625140]
        %v732 = vld.sshfl [vmem:[#allocation1 + $0x10] sm:$0xff pattern:$0x73625140]
        %734 = vrot.lane.b32.xlu0 %v728, 126
        %v735 = vpop.permute.xlu0 %734
        %736 = vrot.lane.b32.xlu0 %v730, 126
        %v737 = vpop.permute.xlu0 %736
        %738 = vrot.lane.b32.xlu0 %v732, 126
        %v739 = vpop.permute.xlu0 %738
        %vm740 = vcmask 1031168
        %v741 = vsel %vm740, %v735, %v737
        %v742 = vsel %vm740, %v737, %v739
        %v744 = vsel %vm481, %v725, 0
        %v747 = vsel %vm485, %v741, 0
        %v750 = vsel %vm485, %v742, 0
        %v753 = vsel %vm485, %v739, 0
        %755 = vmatpush.bf16.msra.mxu0 0
        %756 = vmatpush.bf16.msra.mxu0 0
        %757 = vmatpush.bf16.msra.mxu0 0
        %758 = vmatpush.bf16.msra.mxu0 0
        %759 = vmatpush.bf16.msra.mxu0 0
        %760 = vmatpush.bf16.msra.mxu0 0
        %761 = vmatpush.bf16.msra.mxu0 0
        %762 = vmatpush.bf16.msra.mxu0 %v747
        %763 = vmatmul.bf16.gmra.mxu0 %v744
        %v764 = vpop.f32.mrf.mxu0
        %v765 = vadd.f32 0.0, %v764
        %v766 = vpop.f32.mrf.mxu0
        %767 = vdwg.mxu0
        %768 = vmatpush.bf16.msra.mxu0 0
        %769 = vmatpush.bf16.msra.mxu0 0
        %770 = vmatpush.bf16.msra.mxu0 0
        %771 = vmatpush.bf16.msra.mxu0 0
        %772 = vmatpush.bf16.msra.mxu0 0
        %773 = vmatpush.bf16.msra.mxu0 0
        %774 = vmatpush.bf16.msra.mxu0 0
        %775 = vmatpush.bf16.msra.mxu0 %v750
        %776 = vmatmul.bf16.gmra.mxu0 %v744
        %v777 = vpop.f32.mrf.mxu0
        %v778 = vadd.f32 0.0, %v777
        %v779 = vpop.f32.mrf.mxu0
        %780 = vdwg.mxu0
        %781 = vmatpush.bf16.msra.mxu0 0
        %782 = vmatpush.bf16.msra.mxu0 0
        %783 = vmatpush.bf16.msra.mxu0 0
        %784 = vmatpush.bf16.msra.mxu0 0
        %785 = vmatpush.bf16.msra.mxu0 0
        %786 = vmatpush.bf16.msra.mxu0 0
        %787 = vmatpush.bf16.msra.mxu0 0
        %788 = vmatpush.bf16.msra.mxu0 %v753
        %789 = vmatmul.bf16.gmra.mxu0 %v744
        %v790 = vpop.f32.mrf.mxu0
        %v791 = vadd.f32 0.0, %v790
        %v792 = vpop.f32.mrf.mxu0
        %793 = vdwg.mxu0
        %v794 = vadd.f32 %v557, %v765
        %v795 = vadd.f32 %v570, %v778
        %v796 = vadd.f32 %v583, %v791
        %s797 = scalar_lea.vmem %s2, 16
        %v798 = vld [vmem:[%s797] sm:$0xf]
        %v799 = vld [vmem:[%s797 + $0x4] sm:$0xf]
        %v802 = vunpack.c.l.b16 %v798
        %v803 = vunpack.c.l.b16 %v799
        %v804 = vpack.c.b16 %v803, %v802
        %805 = vst [vmem:[#allocation1] ss:$4 sm:$0xff] %v723
        %v806 = vld.sshfl [vmem:[#allocation1] sm:$0xff pattern:$0x73625140]
        %v808 = vld.sshfl [vmem:[#allocation1 + $0x8] sm:$0xff pattern:$0x73625140]
        %v810 = vld.sshfl [vmem:[#allocation1 + $0x10] sm:$0xff pattern:$0x73625140]
        %812 = vrot.lane.b32.xlu0 %v806, 126
        %v813 = vpop.permute.xlu0 %812
        %814 = vrot.lane.b32.xlu0 %v808, 126
        %v815 = vpop.permute.xlu0 %814
        %816 = vrot.lane.b32.xlu0 %v810, 126
        %v817 = vpop.permute.xlu0 %816
        %v818 = vsel %vm740, %v813, %v815
        %v819 = vsel %vm740, %v815, %v817
        %v821 = vsel %vm481, %v804, 0
        %v824 = vsel %vm485, %v818, 0
        %v827 = vsel %vm485, %v819, 0
        %v830 = vsel %vm485, %v817, 0
        %832 = vmatpush.bf16.msra.mxu0 0
        %833 = vmatpush.bf16.msra.mxu0 0
        %834 = vmatpush.bf16.msra.mxu0 0
        %835 = vmatpush.bf16.msra.mxu0 0
        %836 = vmatpush.bf16.msra.mxu0 0
        %837 = vmatpush.bf16.msra.mxu0 0
        %838 = vmatpush.bf16.msra.mxu0 0
        %839 = vmatpush.bf16.msra.mxu0 %v824
        %840 = vmatmul.bf16.gmra.mxu0 %v821
        %v841 = vpop.f32.mrf.mxu0
        %v842 = vadd.f32 0.0, %v841
        %v843 = vpop.f32.mrf.mxu0
        %v844 = vadd.f32 0.0, %v843
        %845 = vdwg.mxu0
        %846 = vmatpush.bf16.msra.mxu0 0
        %847 = vmatpush.bf16.msra.mxu0 0
        %848 = vmatpush.bf16.msra.mxu0 0
        %849 = vmatpush.bf16.msra.mxu0 0
        %850 = vmatpush.bf16.msra.mxu0 0
        %851 = vmatpush.bf16.msra.mxu0 0
        %852 = vmatpush.bf16.msra.mxu0 0
        %853 = vmatpush.bf16.msra.mxu0 %v827
        %854 = vmatmul.bf16.gmra.mxu0 %v821
        %v855 = vpop.f32.mrf.mxu0
        %v856 = vadd.f32 0.0, %v855
        %v857 = vpop.f32.mrf.mxu0
        %v858 = vadd.f32 0.0, %v857
        %859 = vdwg.mxu0
        %860 = vmatpush.bf16.msra.mxu0 0
        %861 = vmatpush.bf16.msra.mxu0 0
        %862 = vmatpush.bf16.msra.mxu0 0
        %863 = vmatpush.bf16.msra.mxu0 0
        %864 = vmatpush.bf16.msra.mxu0 0
        %865 = vmatpush.bf16.msra.mxu0 0
        %866 = vmatpush.bf16.msra.mxu0 0
        %867 = vmatpush.bf16.msra.mxu0 %v830
        %868 = vmatmul.bf16.gmra.mxu0 %v821
        %v869 = vpop.f32.mrf.mxu0
        %v870 = vadd.f32 0.0, %v869
        %v871 = vpop.f32.mrf.mxu0
        %v872 = vadd.f32 0.0, %v871
        %873 = vdwg.mxu0
        %v874 = vadd.f32 %v691, %v842
        %v875 = vadd.f32 %v705, %v856
        %v876 = vadd.f32 %v719, %v870
        %v877 = vadd.f32 %v693, %v844
        %v878 = vadd.f32 %v707, %v858
        %v879 = vadd.f32 %v721, %v872
        %v880 = vld [vmem:[%s452] sm:$0x3f]
        %s881 = scalar_lea.vmem %s1, 6
        %v882 = vld [vmem:[%s881] sm:$0x3]
        %884 = vst [vmem:[#allocation1] ss:$4 sm:$0xff] %v880
        %v885 = vld.sshfl [vmem:[#allocation1] sm:$0xff pattern:$0x73625140]
        %v887 = vld.sshfl [vmem:[#allocation1 + $0x8] sm:$0xff pattern:$0x73625140]
        %v889 = vld.sshfl [vmem:[#allocation1 + $0x10] sm:$0xff pattern:$0x73625140]
        %891 = vrot.lane.b32.xlu0 %v885, 110
        %v892 = vpop.permute.xlu0 %891
        %893 = vrot.lane.b32.xlu0 %v887, 110
        %v894 = vpop.permute.xlu0 %893
        %895 = vrot.lane.b32.xlu0 %v889, 110
        %v896 = vpop.permute.xlu0 %895
        %vm897 = vcmask 900096
        %v898 = vsel %vm897, %v892, %v894
        %v899 = vsel %vm897, %v894, %v896
        %v901 = vsel %vm481, %v882, 0
        %v904 = vsel %vm485, %v898, 0
        %v907 = vsel %vm485, %v899, 0
        %v910 = vsel %vm485, %v896, 0
        %912 = vmatpush.bf16.msra.mxu0 0
        %913 = vmatpush.bf16.msra.mxu0 0
        %914 = vmatpush.bf16.msra.mxu0 0
        %915 = vmatpush.bf16.msra.mxu0 0
        %916 = vmatpush.bf16.msra.mxu0 0
        %917 = vmatpush.bf16.msra.mxu0 0
        %918 = vmatpush.bf16.msra.mxu0 0
        %919 = vmatpush.bf16.msra.mxu0 %v904
        %920 = vmatmul.bf16.gmra.mxu0 %v901
        %v921 = vpop.f32.mrf.mxu0
        %v922 = vadd.f32 0.0, %v921
        %v923 = vpop.f32.mrf.mxu0
        %924 = vdwg.mxu0
        %925 = vmatpush.bf16.msra.mxu0 0
        %926 = vmatpush.bf16.msra.mxu0 0
        %927 = vmatpush.bf16.msra.mxu0 0
        %928 = vmatpush.bf16.msra.mxu0 0
        %929 = vmatpush.bf16.msra.mxu0 0
        %930 = vmatpush.bf16.msra.mxu0 0
        %931 = vmatpush.bf16.msra.mxu0 0
        %932 = vmatpush.bf16.msra.mxu0 %v907
        %933 = vmatmul.bf16.gmra.mxu0 %v901
        %v934 = vpop.f32.mrf.mxu0
        %v935 = vadd.f32 0.0, %v934
        %v936 = vpop.f32.mrf.mxu0
        %937 = vdwg.mxu0
        %938 = vmatpush.bf16.msra.mxu0 0
        %939 = vmatpush.bf16.msra.mxu0 0
        %940 = vmatpush.bf16.msra.mxu0 0
        %941 = vmatpush.bf16.msra.mxu0 0
        %942 = vmatpush.bf16.msra.mxu0 0
        %943 = vmatpush.bf16.msra.mxu0 0
        %944 = vmatpush.bf16.msra.mxu0 0
        %945 = vmatpush.bf16.msra.mxu0 %v910
        %946 = vmatmul.bf16.gmra.mxu0 %v901
        %v947 = vpop.f32.mrf.mxu0
        %v948 = vadd.f32 0.0, %v947
        %v949 = vpop.f32.mrf.mxu0
        %950 = vdwg.mxu0
        %v951 = vadd.f32 %v794, %v922
        %v952 = vadd.f32 %v795, %v935
        %v953 = vadd.f32 %v796, %v948
        %s954 = scalar_lea.vmem %s2, 24
        %v955 = vld [vmem:[%s954] sm:$0xf]
        %v956 = vld [vmem:[%s954 + $0x4] sm:$0xf]
        %v959 = vunpack.c.l.b16 %v955
        %v960 = vunpack.c.l.b16 %v956
        %v961 = vpack.c.b16 %v960, %v959
        %962 = vst [vmem:[#allocation1] ss:$4 sm:$0xff] %v880
        %v963 = vld.sshfl [vmem:[#allocation1] sm:$0xff pattern:$0x73625140]
        %v965 = vld.sshfl [vmem:[#allocation1 + $0x8] sm:$0xff pattern:$0x73625140]
        %v967 = vld.sshfl [vmem:[#allocation1 + $0x10] sm:$0xff pattern:$0x73625140]
        %969 = vrot.lane.b32.xlu0 %v963, 110
        %v970 = vpop.permute.xlu0 %969
        %971 = vrot.lane.b32.xlu0 %v965, 110
        %v972 = vpop.permute.xlu0 %971
        %973 = vrot.lane.b32.xlu0 %v967, 110
        %v974 = vpop.permute.xlu0 %973
        %v975 = vsel %vm897, %v970, %v972
        %v976 = vsel %vm897, %v972, %v974
        %v978 = vsel %vm481, %v961, 0
        %v981 = vsel %vm485, %v975, 0
        %v984 = vsel %vm485, %v976, 0
        %v987 = vsel %vm485, %v974, 0
        %989 = vmatpush.bf16.msra.mxu0 0
        %990 = vmatpush.bf16.msra.mxu0 0
        %991 = vmatpush.bf16.msra.mxu0 0
        %992 = vmatpush.bf16.msra.mxu0 0
        %993 = vmatpush.bf16.msra.mxu0 0
        %994 = vmatpush.bf16.msra.mxu0 0
        %995 = vmatpush.bf16.msra.mxu0 0
        %996 = vmatpush.bf16.msra.mxu0 %v981
        %997 = vmatmul.bf16.gmra.mxu0 %v978
        %v998 = vpop.f32.mrf.mxu0
        %v999 = vadd.f32 0.0, %v998
        %v1000 = vpop.f32.mrf.mxu0
        %v1001 = vadd.f32 0.0, %v1000
        %1002 = vdwg.mxu0
        %1003 = vmatpush.bf16.msra.mxu0 0
        %1004 = vmatpush.bf16.msra.mxu0 0
        %1005 = vmatpush.bf16.msra.mxu0 0
        %1006 = vmatpush.bf16.msra.mxu0 0
        %1007 = vmatpush.bf16.msra.mxu0 0
        %1008 = vmatpush.bf16.msra.mxu0 0
        %1009 = vmatpush.bf16.msra.mxu0 0
        %1010 = vmatpush.bf16.msra.mxu0 %v984
        %1011 = vmatmul.bf16.gmra.mxu0 %v978
        %v1012 = vpop.f32.mrf.mxu0
        %v1013 = vadd.f32 0.0, %v1012
        %v1014 = vpop.f32.mrf.mxu0
        %v1015 = vadd.f32 0.0, %v1014
        %1016 = vdwg.mxu0
        %1017 = vmatpush.bf16.msra.mxu0 0
        %1018 = vmatpush.bf16.msra.mxu0 0
        %1019 = vmatpush.bf16.msra.mxu0 0
        %1020 = vmatpush.bf16.msra.mxu0 0
        %1021 = vmatpush.bf16.msra.mxu0 0
        %1022 = vmatpush.bf16.msra.mxu0 0
        %1023 = vmatpush.bf16.msra.mxu0 0
        %1024 = vmatpush.bf16.msra.mxu0 %v987
        %1025 = vmatmul.bf16.gmra.mxu0 %v978
        %v1026 = vpop.f32.mrf.mxu0
        %v1027 = vadd.f32 0.0, %v1026
        %v1028 = vpop.f32.mrf.mxu0
        %v1029 = vadd.f32 0.0, %v1028
        %1030 = vdwg.mxu0
        %v1031 = vadd.f32 %v874, %v999
        %v1032 = vadd.f32 %v875, %v1013
        %v1033 = vadd.f32 %v876, %v1027
        %v1034 = vadd.f32 %v877, %v1001
        %v1035 = vadd.f32 %v878, %v1015
        %v1036 = vadd.f32 %v879, %v1029
        %v1037 = vld [vmem:[%s452] sm:$0x3f]
        %s1038 = scalar_lea.vmem %s1, 8
        %v1039 = vld [vmem:[%s1038] sm:$0x3]
        %1041 = vst [vmem:[#allocation1] ss:$4 sm:$0xff] %v1037
        %v1042 = vld.sshfl [vmem:[#allocation1] sm:$0xff pattern:$0x73625140]
        %v1044 = vld.sshfl [vmem:[#allocation1 + $0x8] sm:$0xff pattern:$0x73625140]
        %v1046 = vld.sshfl [vmem:[#allocation1 + $0x10] sm:$0xff pattern:$0x73625140]
        %1048 = vrot.lane.b32.xlu0 %v1042, 109
        %v1049 = vpop.permute.xlu0 %1048
        %1050 = vrot.lane.b32.xlu0 %v1044, 109
        %v1051 = vpop.permute.xlu0 %1050
        %1052 = vrot.lane.b32.xlu0 %v1046, 109
        %v1053 = vpop.permute.xlu0 %1052
        %vm1054 = vcmask 891904
        %v1055 = vsel %vm1054, %v1049, %v1051
        %v1056 = vsel %vm1054, %v1051, %v1053
        %v1058 = vsel %vm481, %v1039, 0
        %v1061 = vsel %vm485, %v1055, 0
        %v1064 = vsel %vm485, %v1056, 0
        %v1067 = vsel %vm485, %v1053, 0
        %1069 = vmatpush.bf16.msra.mxu0 0
        %1070 = vmatpush.bf16.msra.mxu0 0
        %1071 = vmatpush.bf16.msra.mxu0 0
        %1072 = vmatpush.bf16.msra.mxu0 0
        %1073 = vmatpush.bf16.msra.mxu0 0
        %1074 = vmatpush.bf16.msra.mxu0 0
        %1075 = vmatpush.bf16.msra.mxu0 0
        %1076 = vmatpush.bf16.msra.mxu0 %v1061
        %1077 = vmatmul.bf16.gmra.mxu0 %v1058
        %v1078 = vpop.f32.mrf.mxu0
        %v1079 = vadd.f32 0.0, %v1078
        %v1080 = vpop.f32.mrf.mxu0
        %1081 = vdwg.mxu0
        %1082 = vmatpush.bf16.msra.mxu0 0
        %1083 = vmatpush.bf16.msra.mxu0 0
        %1084 = vmatpush.bf16.msra.mxu0 0
        %1085 = vmatpush.bf16.msra.mxu0 0
        %1086 = vmatpush.bf16.msra.mxu0 0
        %1087 = vmatpush.bf16.msra.mxu0 0
        %1088 = vmatpush.bf16.msra.mxu0 0
        %1089 = vmatpush.bf16.msra.mxu0 %v1064
        %1090 = vmatmul.bf16.gmra.mxu0 %v1058
        %v1091 = vpop.f32.mrf.mxu0
        %v1092 = vadd.f32 0.0, %v1091
        %v1093 = vpop.f32.mrf.mxu0
        %1094 = vdwg.mxu0
        %1095 = vmatpush.bf16.msra.mxu0 0
        %1096 = vmatpush.bf16.msra.mxu0 0
        %1097 = vmatpush.bf16.msra.mxu0 0
        %1098 = vmatpush.bf16.msra.mxu0 0
        %1099 = vmatpush.bf16.msra.mxu0 0
        %1100 = vmatpush.bf16.msra.mxu0 0
        %1101 = vmatpush.bf16.msra.mxu0 0
        %1102 = vmatpush.bf16.msra.mxu0 %v1067
        %1103 = vmatmul.bf16.gmra.mxu0 %v1058
        %v1104 = vpop.f32.mrf.mxu0
        %v1105 = vadd.f32 0.0, %v1104
        %v1106 = vpop.f32.mrf.mxu0
        %1107 = vdwg.mxu0
        %v1108 = vadd.f32 %v951, %v1079
        %v1109 = vadd.f32 %v952, %v1092
        %v1110 = vadd.f32 %v953, %v1105
        %s1111 = scalar_lea.vmem %s2, 32
        %v1112 = vld [vmem:[%s1111] sm:$0xf]
        %v1113 = vld [vmem:[%s1111 + $0x4] sm:$0xf]
        %v1116 = vunpack.c.l.b16 %v1112
        %v1117 = vunpack.c.l.b16 %v1113
        %v1118 = vpack.c.b16 %v1117, %v1116
        %1119 = vst [vmem:[#allocation1] ss:$4 sm:$0xff] %v1037
        %v1120 = vld.sshfl [vmem:[#allocation1] sm:$0xff pattern:$0x73625140]
        %v1122 = vld.sshfl [vmem:[#allocation1 + $0x8] sm:$0xff pattern:$0x73625140]
        %v1124 = vld.sshfl [vmem:[#allocation1 + $0x10] sm:$0xff pattern:$0x73625140]
        %1126 = vrot.lane.b32.xlu0 %v1120, 109
        %v1127 = vpop.permute.xlu0 %1126
        %1128 = vrot.lane.b32.xlu0 %v1122, 109
        %v1129 = vpop.permute.xlu0 %1128
        %1130 = vrot.lane.b32.xlu0 %v1124, 109
        %v1131 = vpop.permute.xlu0 %1130
        %v1132 = vsel %vm1054, %v1127, %v1129
        %v1133 = vsel %vm1054, %v1129, %v1131
        %v1135 = vsel %vm481, %v1118, 0
        %v1138 = vsel %vm485, %v1132, 0
        %v1141 = vsel %vm485, %v1133, 0
        %v1144 = vsel %vm485, %v1131, 0
        %1146 = vmatpush.bf16.msra.mxu0 0
        %1147 = vmatpush.bf16.msra.mxu0 0
        %1148 = vmatpush.bf16.msra.mxu0 0
        %1149 = vmatpush.bf16.msra.mxu0 0
        %1150 = vmatpush.bf16.msra.mxu0 0
        %1151 = vmatpush.bf16.msra.mxu0 0
        %1152 = vmatpush.bf16.msra.mxu0 0
        %1153 = vmatpush.bf16.msra.mxu0 %v1138
        %1154 = vmatmul.bf16.gmra.mxu0 %v1135
        %v1155 = vpop.f32.mrf.mxu0
        %v1156 = vadd.f32 0.0, %v1155
        %v1157 = vpop.f32.mrf.mxu0
        %v1158 = vadd.f32 0.0, %v1157
        %1159 = vdwg.mxu0
        %1160 = vmatpush.bf16.msra.mxu0 0
        %1161 = vmatpush.bf16.msra.mxu0 0
        %1162 = vmatpush.bf16.msra.mxu0 0
        %1163 = vmatpush.bf16.msra.mxu0 0
        %1164 = vmatpush.bf16.msra.mxu0 0
        %1165 = vmatpush.bf16.msra.mxu0 0
        %1166 = vmatpush.bf16.msra.mxu0 0
        %1167 = vmatpush.bf16.msra.mxu0 %v1141
        %1168 = vmatmul.bf16.gmra.mxu0 %v1135
        %v1169 = vpop.f32.mrf.mxu0
        %v1170 = vadd.f32 0.0, %v1169
        %v1171 = vpop.f32.mrf.mxu0
        %v1172 = vadd.f32 0.0, %v1171
        %1173 = vdwg.mxu0
        %1174 = vmatpush.bf16.msra.mxu0 0
        %1175 = vmatpush.bf16.msra.mxu0 0
        %1176 = vmatpush.bf16.msra.mxu0 0
        %1177 = vmatpush.bf16.msra.mxu0 0
        %1178 = vmatpush.bf16.msra.mxu0 0
        %1179 = vmatpush.bf16.msra.mxu0 0
        %1180 = vmatpush.bf16.msra.mxu0 0
        %1181 = vmatpush.bf16.msra.mxu0 %v1144
        %1182 = vmatmul.bf16.gmra.mxu0 %v1135
        %v1183 = vpop.f32.mrf.mxu0
        %v1184 = vadd.f32 0.0, %v1183
        %v1185 = vpop.f32.mrf.mxu0
        %v1186 = vadd.f32 0.0, %v1185
        %1187 = vdwg.mxu0
        %v1188 = vadd.f32 %v1031, %v1156
        %v1189 = vadd.f32 %v1032, %v1170
        %v1190 = vadd.f32 %v1033, %v1184
        %v1191 = vadd.f32 %v1034, %v1158
        %v1192 = vadd.f32 %v1035, %v1172
        %v1193 = vadd.f32 %v1036, %v1186
        %v1194 = vld [vmem:[%s452] sm:$0x3f]
        %s1195 = scalar_lea.vmem %s1, 10
        %v1196 = vld [vmem:[%s1195] sm:$0x3]
        %1198 = vst [vmem:[#allocation1] ss:$4 sm:$0xff] %v1194
        %v1199 = vld.sshfl [vmem:[#allocation1] sm:$0xff pattern:$0x73625140]
        %v1201 = vld.sshfl [vmem:[#allocation1 + $0x8] sm:$0xff pattern:$0x73625140]
        %v1203 = vld.sshfl [vmem:[#allocation1 + $0x10] sm:$0xff pattern:$0x73625140]
        %1205 = vrot.lane.b32.xlu0 %v1199, 108
        %v1206 = vpop.permute.xlu0 %1205
        %1207 = vrot.lane.b32.xlu0 %v1201, 108
        %v1208 = vpop.permute.xlu0 %1207
        %1209 = vrot.lane.b32.xlu0 %v1203, 108
        %v1210 = vpop.permute.xlu0 %1209
        %vm1211 = vcmask 883712
        %v1212 = vsel %vm1211, %v1206, %v1208
        %v1213 = vsel %vm1211, %v1208, %v1210
        %v1215 = vsel %vm481, %v1196, 0
        %v1218 = vsel %vm485, %v1212, 0
        %v1221 = vsel %vm485, %v1213, 0
        %v1224 = vsel %vm485, %v1210, 0
        %1226 = vmatpush.bf16.msra.mxu0 0
        %1227 = vmatpush.bf16.msra.mxu0 0
        %1228 = vmatpush.bf16.msra.mxu0 0
        %1229 = vmatpush.bf16.msra.mxu0 0
        %1230 = vmatpush.bf16.msra.mxu0 0
        %1231 = vmatpush.bf16.msra.mxu0 0
        %1232 = vmatpush.bf16.msra.mxu0 0
        %1233 = vmatpush.bf16.msra.mxu0 %v1218
        %1234 = vmatmul.bf16.gmra.mxu0 %v1215
        %v1235 = vpop.f32.mrf.mxu0
        %v1236 = vadd.f32 0.0, %v1235
        %v1237 = vpop.f32.mrf.mxu0
        %1238 = vdwg.mxu0
        %1239 = vmatpush.bf16.msra.mxu0 0
        %1240 = vmatpush.bf16.msra.mxu0 0
        %1241 = vmatpush.bf16.msra.mxu0 0
        %1242 = vmatpush.bf16.msra.mxu0 0
        %1243 = vmatpush.bf16.msra.mxu0 0
        %1244 = vmatpush.bf16.msra.mxu0 0
        %1245 = vmatpush.bf16.msra.mxu0 0
        %1246 = vmatpush.bf16.msra.mxu0 %v1221
        %1247 = vmatmul.bf16.gmra.mxu0 %v1215
        %v1248 = vpop.f32.mrf.mxu0
        %v1249 = vadd.f32 0.0, %v1248
        %v1250 = vpop.f32.mrf.mxu0
        %1251 = vdwg.mxu0
        %1252 = vmatpush.bf16.msra.mxu0 0
        %1253 = vmatpush.bf16.msra.mxu0 0
        %1254 = vmatpush.bf16.msra.mxu0 0
        %1255 = vmatpush.bf16.msra.mxu0 0
        %1256 = vmatpush.bf16.msra.mxu0 0
        %1257 = vmatpush.bf16.msra.mxu0 0
        %1258 = vmatpush.bf16.msra.mxu0 0
        %1259 = vmatpush.bf16.msra.mxu0 %v1224
        %1260 = vmatmul.bf16.gmra.mxu0 %v1215
        %v1261 = vpop.f32.mrf.mxu0
        %v1262 = vadd.f32 0.0, %v1261
        %v1263 = vpop.f32.mrf.mxu0
        %1264 = vdwg.mxu0
        %v1265 = vadd.f32 %v1108, %v1236
        %v1266 = vadd.f32 %v1109, %v1249
        %v1267 = vadd.f32 %v1110, %v1262
        %s1268 = scalar_lea.vmem %s2, 40
        %v1269 = vld [vmem:[%s1268] sm:$0xf]
        %v1270 = vld [vmem:[%s1268 + $0x4] sm:$0xf]
        %v1273 = vunpack.c.l.b16 %v1269
        %v1274 = vunpack.c.l.b16 %v1270
        %v1275 = vpack.c.b16 %v1274, %v1273
        %1276 = vst [vmem:[#allocation1] ss:$4 sm:$0xff] %v1194
        %v1277 = vld.sshfl [vmem:[#allocation1] sm:$0xff pattern:$0x73625140]
        %v1279 = vld.sshfl [vmem:[#allocation1 + $0x8] sm:$0xff pattern:$0x73625140]
        %v1281 = vld.sshfl [vmem:[#allocation1 + $0x10] sm:$0xff pattern:$0x73625140]
        %1283 = vrot.lane.b32.xlu0 %v1277, 108
        %v1284 = vpop.permute.xlu0 %1283
        %1285 = vrot.lane.b32.xlu0 %v1279, 108
        %v1286 = vpop.permute.xlu0 %1285
        %1287 = vrot.lane.b32.xlu0 %v1281, 108
        %v1288 = vpop.permute.xlu0 %1287
        %v1289 = vsel %vm1211, %v1284, %v1286
        %v1290 = vsel %vm1211, %v1286, %v1288
        %v1292 = vsel %vm481, %v1275, 0
        %v1295 = vsel %vm485, %v1289, 0
        %v1298 = vsel %vm485, %v1290, 0
        %v1301 = vsel %vm485, %v1288, 0
        %1303 = vmatpush.bf16.msra.mxu0 0
        %1304 = vmatpush.bf16.msra.mxu0 0
        %1305 = vmatpush.bf16.msra.mxu0 0
        %1306 = vmatpush.bf16.msra.mxu0 0
        %1307 = vmatpush.bf16.msra.mxu0 0
        %1308 = vmatpush.bf16.msra.mxu0 0
        %1309 = vmatpush.bf16.msra.mxu0 0
        %1310 = vmatpush.bf16.msra.mxu0 %v1295
        %1311 = vmatmul.bf16.gmra.mxu0 %v1292
        %v1312 = vpop.f32.mrf.mxu0
        %v1313 = vadd.f32 0.0, %v1312
        %v1314 = vpop.f32.mrf.mxu0
        %v1315 = vadd.f32 0.0, %v1314
        %1316 = vdwg.mxu0
        %1317 = vmatpush.bf16.msra.mxu0 0
        %1318 = vmatpush.bf16.msra.mxu0 0
        %1319 = vmatpush.bf16.msra.mxu0 0
        %1320 = vmatpush.bf16.msra.mxu0 0
        %1321 = vmatpush.bf16.msra.mxu0 0
        %1322 = vmatpush.bf16.msra.mxu0 0
        %1323 = vmatpush.bf16.msra.mxu0 0
        %1324 = vmatpush.bf16.msra.mxu0 %v1298
        %1325 = vmatmul.bf16.gmra.mxu0 %v1292
        %v1326 = vpop.f32.mrf.mxu0
        %v1327 = vadd.f32 0.0, %v1326
        %v1328 = vpop.f32.mrf.mxu0
        %v1329 = vadd.f32 0.0, %v1328
        %1330 = vdwg.mxu0
        %1331 = vmatpush.bf16.msra.mxu0 0
        %1332 = vmatpush.bf16.msra.mxu0 0
        %1333 = vmatpush.bf16.msra.mxu0 0
        %1334 = vmatpush.bf16.msra.mxu0 0
        %1335 = vmatpush.bf16.msra.mxu0 0
        %1336 = vmatpush.bf16.msra.mxu0 0
        %1337 = vmatpush.bf16.msra.mxu0 0
        %1338 = vmatpush.bf16.msra.mxu0 %v1301
        %1339 = vmatmul.bf16.gmra.mxu0 %v1292
        %v1340 = vpop.f32.mrf.mxu0
        %v1341 = vadd.f32 0.0, %v1340
        %v1342 = vpop.f32.mrf.mxu0
        %v1343 = vadd.f32 0.0, %v1342
        %1344 = vdwg.mxu0
        %v1345 = vadd.f32 %v1188, %v1313
        %v1346 = vadd.f32 %v1189, %v1327
        %v1347 = vadd.f32 %v1190, %v1341
        %v1348 = vadd.f32 %v1191, %v1315
        %v1349 = vadd.f32 %v1192, %v1329
        %v1350 = vadd.f32 %v1193, %v1343
        %v1351 = vld [vmem:[%s452] sm:$0x3f]
        %s1352 = scalar_lea.vmem %s1, 12
        %v1353 = vld [vmem:[%s1352] sm:$0x3]
        %1355 = vst [vmem:[#allocation1] ss:$4 sm:$0xff] %v1351
        %v1356 = vld.sshfl [vmem:[#allocation1] sm:$0xff pattern:$0x73625140]
        %v1358 = vld.sshfl [vmem:[#allocation1 + $0x8] sm:$0xff pattern:$0x73625140]
        %v1360 = vld.sshfl [vmem:[#allocation1 + $0x10] sm:$0xff pattern:$0x73625140]
        %1362 = vrot.lane.b32.xlu0 %v1356, 92
        %v1363 = vpop.permute.xlu0 %1362
        %1364 = vrot.lane.b32.xlu0 %v1358, 92
        %v1365 = vpop.permute.xlu0 %1364
        %1366 = vrot.lane.b32.xlu0 %v1360, 92
        %v1367 = vpop.permute.xlu0 %1366
        %vm1368 = vcmask 752640
        %v1369 = vsel %vm1368, %v1363, %v1365
        %v1370 = vsel %vm1368, %v1365, %v1367
        %v1372 = vsel %vm481, %v1353, 0
        %v1375 = vsel %vm485, %v1369, 0
        %v1378 = vsel %vm485, %v1370, 0
        %v1381 = vsel %vm485, %v1367, 0
        %1383 = vmatpush.bf16.msra.mxu0 0
        %1384 = vmatpush.bf16.msra.mxu0 0
        %1385 = vmatpush.bf16.msra.mxu0 0
        %1386 = vmatpush.bf16.msra.mxu0 0
        %1387 = vmatpush.bf16.msra.mxu0 0
        %1388 = vmatpush.bf16.msra.mxu0 0
        %1389 = vmatpush.bf16.msra.mxu0 0
        %1390 = vmatpush.bf16.msra.mxu0 %v1375
        %1391 = vmatmul.bf16.gmra.mxu0 %v1372
        %v1392 = vpop.f32.mrf.mxu0
        %v1393 = vadd.f32 0.0, %v1392
        %v1394 = vpop.f32.mrf.mxu0
        %1395 = vdwg.mxu0
        %1396 = vmatpush.bf16.msra.mxu0 0
        %1397 = vmatpush.bf16.msra.mxu0 0
        %1398 = vmatpush.bf16.msra.mxu0 0
        %1399 = vmatpush.bf16.msra.mxu0 0
        %1400 = vmatpush.bf16.msra.mxu0 0
        %1401 = vmatpush.bf16.msra.mxu0 0
        %1402 = vmatpush.bf16.msra.mxu0 0
        %1403 = vmatpush.bf16.msra.mxu0 %v1378
        %1404 = vmatmul.bf16.gmra.mxu0 %v1372
        %v1405 = vpop.f32.mrf.mxu0
        %v1406 = vadd.f32 0.0, %v1405
        %v1407 = vpop.f32.mrf.mxu0
        %1408 = vdwg.mxu0
        %1409 = vmatpush.bf16.msra.mxu0 0
        %1410 = vmatpush.bf16.msra.mxu0 0
        %1411 = vmatpush.bf16.msra.mxu0 0
        %1412 = vmatpush.bf16.msra.mxu0 0
        %1413 = vmatpush.bf16.msra.mxu0 0
        %1414 = vmatpush.bf16.msra.mxu0 0
        %1415 = vmatpush.bf16.msra.mxu0 0
        %1416 = vmatpush.bf16.msra.mxu0 %v1381
        %1417 = vmatmul.bf16.gmra.mxu0 %v1372
        %v1418 = vpop.f32.mrf.mxu0
        %v1419 = vadd.f32 0.0, %v1418
        %v1420 = vpop.f32.mrf.mxu0
        %1421 = vdwg.mxu0
        %v1422 = vadd.f32 %v1265, %v1393
        %v1423 = vadd.f32 %v1266, %v1406
        %v1424 = vadd.f32 %v1267, %v1419
        %s1425 = scalar_lea.vmem %s2, 48
        %v1426 = vld [vmem:[%s1425] sm:$0xf]
        %v1427 = vld [vmem:[%s1425 + $0x4] sm:$0xf]
        %v1430 = vunpack.c.l.b16 %v1426
        %v1431 = vunpack.c.l.b16 %v1427
        %v1432 = vpack.c.b16 %v1431, %v1430
        %1433 = vst [vmem:[#allocation1] ss:$4 sm:$0xff] %v1351
        %v1434 = vld.sshfl [vmem:[#allocation1] sm:$0xff pattern:$0x73625140]
        %v1436 = vld.sshfl [vmem:[#allocation1 + $0x8] sm:$0xff pattern:$0x73625140]
        %v1438 = vld.sshfl [vmem:[#allocation1 + $0x10] sm:$0xff pattern:$0x73625140]
        %1440 = vrot.lane.b32.xlu0 %v1434, 92
        %v1441 = vpop.permute.xlu0 %1440
        %1442 = vrot.lane.b32.xlu0 %v1436, 92
        %v1443 = vpop.permute.xlu0 %1442
        %1444 = vrot.lane.b32.xlu0 %v1438, 92
        %v1445 = vpop.permute.xlu0 %1444
        %v1446 = vsel %vm1368, %v1441, %v1443
        %v1447 = vsel %vm1368, %v1443, %v1445
        %v1449 = vsel %vm481, %v1432, 0
        %v1452 = vsel %vm485, %v1446, 0
        %v1455 = vsel %vm485, %v1447, 0
        %v1458 = vsel %vm485, %v1445, 0
        %1460 = vmatpush.bf16.msra.mxu0 0
        %1461 = vmatpush.bf16.msra.mxu0 0
        %1462 = vmatpush.bf16.msra.mxu0 0
        %1463 = vmatpush.bf16.msra.mxu0 0
        %1464 = vmatpush.bf16.msra.mxu0 0
        %1465 = vmatpush.bf16.msra.mxu0 0
        %1466 = vmatpush.bf16.msra.mxu0 0
        %1467 = vmatpush.bf16.msra.mxu0 %v1452
        %1468 = vmatmul.bf16.gmra.mxu0 %v1449
        %v1469 = vpop.f32.mrf.mxu0
        %v1470 = vadd.f32 0.0, %v1469
        %v1471 = vpop.f32.mrf.mxu0
        %v1472 = vadd.f32 0.0, %v1471
        %1473 = vdwg.mxu0
        %1474 = vmatpush.bf16.msra.mxu0 0
        %1475 = vmatpush.bf16.msra.mxu0 0
        %1476 = vmatpush.bf16.msra.mxu0 0
        %1477 = vmatpush.bf16.msra.mxu0 0
        %1478 = vmatpush.bf16.msra.mxu0 0
        %1479 = vmatpush.bf16.msra.mxu0 0
        %1480 = vmatpush.bf16.msra.mxu0 0
        %1481 = vmatpush.bf16.msra.mxu0 %v1455
        %1482 = vmatmul.bf16.gmra.mxu0 %v1449
        %v1483 = vpop.f32.mrf.mxu0
        %v1484 = vadd.f32 0.0, %v1483
        %v1485 = vpop.f32.mrf.mxu0
        %v1486 = vadd.f32 0.0, %v1485
        %1487 = vdwg.mxu0
        %1488 = vmatpush.bf16.msra.mxu0 0
        %1489 = vmatpush.bf16.msra.mxu0 0
        %1490 = vmatpush.bf16.msra.mxu0 0
        %1491 = vmatpush.bf16.msra.mxu0 0
        %1492 = vmatpush.bf16.msra.mxu0 0
        %1493 = vmatpush.bf16.msra.mxu0 0
        %1494 = vmatpush.bf16.msra.mxu0 0
        %1495 = vmatpush.bf16.msra.mxu0 %v1458
        %1496 = vmatmul.bf16.gmra.mxu0 %v1449
        %v1497 = vpop.f32.mrf.mxu0
        %v1498 = vadd.f32 0.0, %v1497
        %v1499 = vpop.f32.mrf.mxu0
        %v1500 = vadd.f32 0.0, %v1499
        %1501 = vdwg.mxu0
        %v1502 = vadd.f32 %v1345, %v1470
        %v1503 = vadd.f32 %v1346, %v1484
        %v1504 = vadd.f32 %v1347, %v1498
        %v1505 = vadd.f32 %v1348, %v1472
        %v1506 = vadd.f32 %v1349, %v1486
        %v1507 = vadd.f32 %v1350, %v1500
        %v1508 = vld [vmem:[%s452] sm:$0x3f]
        %s1509 = scalar_lea.vmem %s1, 14
        %v1510 = vld [vmem:[%s1509] sm:$0x3]
        %1512 = vst [vmem:[#allocation1] ss:$4 sm:$0xff] %v1508
        %v1513 = vld.sshfl [vmem:[#allocation1] sm:$0xff pattern:$0x73625140]
        %v1515 = vld.sshfl [vmem:[#allocation1 + $0x8] sm:$0xff pattern:$0x73625140]
        %v1517 = vld.sshfl [vmem:[#allocation1 + $0x10] sm:$0xff pattern:$0x73625140]
        %1519 = vrot.lane.b32.xlu0 %v1513, 91
        %v1520 = vpop.permute.xlu0 %1519
        %1521 = vrot.lane.b32.xlu0 %v1515, 91
        %v1522 = vpop.permute.xlu0 %1521
        %1523 = vrot.lane.b32.xlu0 %v1517, 91
        %v1524 = vpop.permute.xlu0 %1523
        %vm1525 = vcmask 744448
        %v1526 = vsel %vm1525, %v1520, %v1522
        %v1527 = vsel %vm1525, %v1522, %v1524
        %v1529 = vsel %vm481, %v1510, 0
        %v1532 = vsel %vm485, %v1526, 0
        %v1535 = vsel %vm485, %v1527, 0
        %v1538 = vsel %vm485, %v1524, 0
        %1540 = vmatpush.bf16.msra.mxu0 0
        %1541 = vmatpush.bf16.msra.mxu0 0
        %1542 = vmatpush.bf16.msra.mxu0 0
        %1543 = vmatpush.bf16.msra.mxu0 0
        %1544 = vmatpush.bf16.msra.mxu0 0
        %1545 = vmatpush.bf16.msra.mxu0 0
        %1546 = vmatpush.bf16.msra.mxu0 0
        %1547 = vmatpush.bf16.msra.mxu0 %v1532
        %1548 = vmatmul.bf16.gmra.mxu0 %v1529
        %v1549 = vpop.f32.mrf.mxu0
        %v1550 = vadd.f32 0.0, %v1549
        %v1551 = vpop.f32.mrf.mxu0
        %1552 = vdwg.mxu0
        %1553 = vmatpush.bf16.msra.mxu0 0
        %1554 = vmatpush.bf16.msra.mxu0 0
        %1555 = vmatpush.bf16.msra.mxu0 0
        %1556 = vmatpush.bf16.msra.mxu0 0
        %1557 = vmatpush.bf16.msra.mxu0 0
        %1558 = vmatpush.bf16.msra.mxu0 0
        %1559 = vmatpush.bf16.msra.mxu0 0
        %1560 = vmatpush.bf16.msra.mxu0 %v1535
        %1561 = vmatmul.bf16.gmra.mxu0 %v1529
        %v1562 = vpop.f32.mrf.mxu0
        %v1563 = vadd.f32 0.0, %v1562
        %v1564 = vpop.f32.mrf.mxu0
        %1565 = vdwg.mxu0
        %1566 = vmatpush.bf16.msra.mxu0 0
        %1567 = vmatpush.bf16.msra.mxu0 0
        %1568 = vmatpush.bf16.msra.mxu0 0
        %1569 = vmatpush.bf16.msra.mxu0 0
        %1570 = vmatpush.bf16.msra.mxu0 0
        %1571 = vmatpush.bf16.msra.mxu0 0
        %1572 = vmatpush.bf16.msra.mxu0 0
        %1573 = vmatpush.bf16.msra.mxu0 %v1538
        %1574 = vmatmul.bf16.gmra.mxu0 %v1529
        %v1575 = vpop.f32.mrf.mxu0
        %v1576 = vadd.f32 0.0, %v1575
        %v1577 = vpop.f32.mrf.mxu0
        %1578 = vdwg.mxu0
        %v1579 = vadd.f32 %v1422, %v1550
        %v1580 = vadd.f32 %v1423, %v1563
        %v1581 = vadd.f32 %v1424, %v1576
        %s1582 = scalar_lea.vmem %s2, 56
        %v1583 = vld [vmem:[%s1582] sm:$0xf]
        %v1584 = vld [vmem:[%s1582 + $0x4] sm:$0xf]
        %v1587 = vunpack.c.l.b16 %v1583
        %v1588 = vunpack.c.l.b16 %v1584
        %v1589 = vpack.c.b16 %v1588, %v1587
        %1590 = vst [vmem:[#allocation1] ss:$4 sm:$0xff] %v1508
        %v1591 = vld.sshfl [vmem:[#allocation1] sm:$0xff pattern:$0x73625140]
        %v1593 = vld.sshfl [vmem:[#allocation1 + $0x8] sm:$0xff pattern:$0x73625140]
        %v1595 = vld.sshfl [vmem:[#allocation1 + $0x10] sm:$0xff pattern:$0x73625140]
        %1597 = vrot.lane.b32.xlu0 %v1591, 91
        %v1598 = vpop.permute.xlu0 %1597
        %1599 = vrot.lane.b32.xlu0 %v1593, 91
        %v1600 = vpop.permute.xlu0 %1599
        %1601 = vrot.lane.b32.xlu0 %v1595, 91
        %v1602 = vpop.permute.xlu0 %1601
        %v1603 = vsel %vm1525, %v1598, %v1600
        %v1604 = vsel %vm1525, %v1600, %v1602
        %v1606 = vsel %vm481, %v1589, 0
        %v1609 = vsel %vm485, %v1603, 0
        %v1612 = vsel %vm485, %v1604, 0
        %v1615 = vsel %vm485, %v1602, 0
        %1617 = vmatpush.bf16.msra.mxu0 0
        %1618 = vmatpush.bf16.msra.mxu0 0
        %1619 = vmatpush.bf16.msra.mxu0 0
        %1620 = vmatpush.bf16.msra.mxu0 0
        %1621 = vmatpush.bf16.msra.mxu0 0
        %1622 = vmatpush.bf16.msra.mxu0 0
        %1623 = vmatpush.bf16.msra.mxu0 0
        %1624 = vmatpush.bf16.msra.mxu0 %v1609
        %1625 = vmatmul.bf16.gmra.mxu0 %v1606
        %v1626 = vpop.f32.mrf.mxu0
        %v1627 = vadd.f32 0.0, %v1626
        %v1628 = vpop.f32.mrf.mxu0
        %v1629 = vadd.f32 0.0, %v1628
        %1630 = vdwg.mxu0
        %1631 = vmatpush.bf16.msra.mxu0 0
        %1632 = vmatpush.bf16.msra.mxu0 0
        %1633 = vmatpush.bf16.msra.mxu0 0
        %1634 = vmatpush.bf16.msra.mxu0 0
        %1635 = vmatpush.bf16.msra.mxu0 0
        %1636 = vmatpush.bf16.msra.mxu0 0
        %1637 = vmatpush.bf16.msra.mxu0 0
        %1638 = vmatpush.bf16.msra.mxu0 %v1612
        %1639 = vmatmul.bf16.gmra.mxu0 %v1606
        %v1640 = vpop.f32.mrf.mxu0
        %v1641 = vadd.f32 0.0, %v1640
        %v1642 = vpop.f32.mrf.mxu0
        %v1643 = vadd.f32 0.0, %v1642
        %1644 = vdwg.mxu0
        %1645 = vmatpush.bf16.msra.mxu0 0
        %1646 = vmatpush.bf16.msra.mxu0 0
        %1647 = vmatpush.bf16.msra.mxu0 0
        %1648 = vmatpush.bf16.msra.mxu0 0
        %1649 = vmatpush.bf16.msra.mxu0 0
        %1650 = vmatpush.bf16.msra.mxu0 0
        %1651 = vmatpush.bf16.msra.mxu0 0
        %1652 = vmatpush.bf16.msra.mxu0 %v1615
        %1653 = vmatmul.bf16.gmra.mxu0 %v1606
        %v1654 = vpop.f32.mrf.mxu0
        %v1655 = vadd.f32 0.0, %v1654
        %v1656 = vpop.f32.mrf.mxu0
        %v1657 = vadd.f32 0.0, %v1656
        %1658 = vdwg.mxu0
        %v1659 = vadd.f32 %v1502, %v1627
        %v1660 = vadd.f32 %v1503, %v1641
        %v1661 = vadd.f32 %v1504, %v1655
        %v1662 = vadd.f32 %v1505, %v1629
        %v1663 = vadd.f32 %v1506, %v1643
        %v1664 = vadd.f32 %v1507, %v1657
        %v1665 = vld [vmem:[%s452] sm:$0x3f]
        %s1666 = scalar_lea.vmem %s1, 16
        %v1667 = vld [vmem:[%s1666] sm:$0x3]
        %1669 = vst [vmem:[#allocation1] ss:$4 sm:$0xff] %v1665
        %v1670 = vld.sshfl [vmem:[#allocation1] sm:$0xff pattern:$0x73625140]
        %v1672 = vld.sshfl [vmem:[#allocation1 + $0x8] sm:$0xff pattern:$0x73625140]
        %v1674 = vld.sshfl [vmem:[#allocation1 + $0x10] sm:$0xff pattern:$0x73625140]
        %1676 = vrot.lane.b32.xlu0 %v1670, 90
        %v1677 = vpop.permute.xlu0 %1676
        %1678 = vrot.lane.b32.xlu0 %v1672, 90
        %v1679 = vpop.permute.xlu0 %1678
        %1680 = vrot.lane.b32.xlu0 %v1674, 90
        %v1681 = vpop.permute.xlu0 %1680
        %vm1682 = vcmask 736256
        %v1683 = vsel %vm1682, %v1677, %v1679
        %v1684 = vsel %vm1682, %v1679, %v1681
        %v1686 = vsel %vm481, %v1667, 0
        %v1689 = vsel %vm485, %v1683, 0
        %v1692 = vsel %vm485, %v1684, 0
        %v1695 = vsel %vm485, %v1681, 0
        %1697 = vmatpush.bf16.msra.mxu0 0
        %1698 = vmatpush.bf16.msra.mxu0 0
        %1699 = vmatpush.bf16.msra.mxu0 0
        %1700 = vmatpush.bf16.msra.mxu0 0
        %1701 = vmatpush.bf16.msra.mxu0 0
        %1702 = vmatpush.bf16.msra.mxu0 0
        %1703 = vmatpush.bf16.msra.mxu0 0
        %1704 = vmatpush.bf16.msra.mxu0 %v1689
        %1705 = vmatmul.bf16.gmra.mxu0 %v1686
        %v1706 = vpop.f32.mrf.mxu0
        %v1707 = vadd.f32 0.0, %v1706
        %v1708 = vpop.f32.mrf.mxu0
        %1709 = vdwg.mxu0
        %1710 = vmatpush.bf16.msra.mxu0 0
        %1711 = vmatpush.bf16.msra.mxu0 0
        %1712 = vmatpush.bf16.msra.mxu0 0
        %1713 = vmatpush.bf16.msra.mxu0 0
        %1714 = vmatpush.bf16.msra.mxu0 0
        %1715 = vmatpush.bf16.msra.mxu0 0
        %1716 = vmatpush.bf16.msra.mxu0 0
        %1717 = vmatpush.bf16.msra.mxu0 %v1692
        %1718 = vmatmul.bf16.gmra.mxu0 %v1686
        %v1719 = vpop.f32.mrf.mxu0
        %v1720 = vadd.f32 0.0, %v1719
        %v1721 = vpop.f32.mrf.mxu0
        %1722 = vdwg.mxu0
        %1723 = vmatpush.bf16.msra.mxu0 0
        %1724 = vmatpush.bf16.msra.mxu0 0
        %1725 = vmatpush.bf16.msra.mxu0 0
        %1726 = vmatpush.bf16.msra.mxu0 0
        %1727 = vmatpush.bf16.msra.mxu0 0
        %1728 = vmatpush.bf16.msra.mxu0 0
        %1729 = vmatpush.bf16.msra.mxu0 0
        %1730 = vmatpush.bf16.msra.mxu0 %v1695
        %1731 = vmatmul.bf16.gmra.mxu0 %v1686
        %v1732 = vpop.f32.mrf.mxu0
        %v1733 = vadd.f32 0.0, %v1732
        %v1734 = vpop.f32.mrf.mxu0
        %1735 = vdwg.mxu0
        %v1736 = vadd.f32 %v1579, %v1707
        %v1737 = vadd.f32 %v1580, %v1720
        %v1738 = vadd.f32 %v1581, %v1733
        %s1739 = scalar_lea.vmem %s2, 64
        %v1740 = vld [vmem:[%s1739] sm:$0xf]
        %v1741 = vld [vmem:[%s1739 + $0x4] sm:$0xf]
        %v1744 = vunpack.c.l.b16 %v1740
        %v1745 = vunpack.c.l.b16 %v1741
        %v1746 = vpack.c.b16 %v1745, %v1744
        %1747 = vst [vmem:[#allocation1] ss:$4 sm:$0xff] %v1665
        %v1748 = vld.sshfl [vmem:[#allocation1] sm:$0xff pattern:$0x73625140]
        %v1750 = vld.sshfl [vmem:[#allocation1 + $0x8] sm:$0xff pattern:$0x73625140]
        %v1752 = vld.sshfl [vmem:[#allocation1 + $0x10] sm:$0xff pattern:$0x73625140]
        %1754 = vrot.lane.b32.xlu0 %v1748, 90
        %v1755 = vpop.permute.xlu0 %1754
        %1756 = vrot.lane.b32.xlu0 %v1750, 90
        %v1757 = vpop.permute.xlu0 %1756
        %1758 = vrot.lane.b32.xlu0 %v1752, 90
        %v1759 = vpop.permute.xlu0 %1758
        %v1760 = vsel %vm1682, %v1755, %v1757
        %v1761 = vsel %vm1682, %v1757, %v1759
        %v1763 = vsel %vm481, %v1746, 0
        %v1766 = vsel %vm485, %v1760, 0
        %v1769 = vsel %vm485, %v1761, 0
        %v1772 = vsel %vm485, %v1759, 0
        %1774 = vmatpush.bf16.msra.mxu0 0
        %1775 = vmatpush.bf16.msra.mxu0 0
        %1776 = vmatpush.bf16.msra.mxu0 0
        %1777 = vmatpush.bf16.msra.mxu0 0
        %1778 = vmatpush.bf16.msra.mxu0 0
        %1779 = vmatpush.bf16.msra.mxu0 0
        %1780 = vmatpush.bf16.msra.mxu0 0
        %1781 = vmatpush.bf16.msra.mxu0 %v1766
        %1782 = vmatmul.bf16.gmra.mxu0 %v1763
        %v1783 = vpop.f32.mrf.mxu0
        %v1784 = vadd.f32 0.0, %v1783
        %v1785 = vpop.f32.mrf.mxu0
        %v1786 = vadd.f32 0.0, %v1785
        %1787 = vdwg.mxu0
        %1788 = vmatpush.bf16.msra.mxu0 0
        %1789 = vmatpush.bf16.msra.mxu0 0
        %1790 = vmatpush.bf16.msra.mxu0 0
        %1791 = vmatpush.bf16.msra.mxu0 0
        %1792 = vmatpush.bf16.msra.mxu0 0
        %1793 = vmatpush.bf16.msra.mxu0 0
        %1794 = vmatpush.bf16.msra.mxu0 0
        %1795 = vmatpush.bf16.msra.mxu0 %v1769
        %1796 = vmatmul.bf16.gmra.mxu0 %v1763
        %v1797 = vpop.f32.mrf.mxu0
        %v1798 = vadd.f32 0.0, %v1797
        %v1799 = vpop.f32.mrf.mxu0
        %v1800 = vadd.f32 0.0, %v1799
        %1801 = vdwg.mxu0
        %1802 = vmatpush.bf16.msra.mxu0 0
        %1803 = vmatpush.bf16.msra.mxu0 0
        %1804 = vmatpush.bf16.msra.mxu0 0
        %1805 = vmatpush.bf16.msra.mxu0 0
        %1806 = vmatpush.bf16.msra.mxu0 0
        %1807 = vmatpush.bf16.msra.mxu0 0
        %1808 = vmatpush.bf16.msra.mxu0 0
        %1809 = vmatpush.bf16.msra.mxu0 %v1772
        %1810 = vmatmul.bf16.gmra.mxu0 %v1763
        %v1811 = vpop.f32.mrf.mxu0
        %v1812 = vadd.f32 0.0, %v1811
        %v1813 = vpop.f32.mrf.mxu0
        %v1814 = vadd.f32 0.0, %v1813
        %1815 = vdwg.mxu0
        %v1816 = vadd.f32 %v1659, %v1784
        %v1817 = vadd.f32 %v1660, %v1798
        %v1818 = vadd.f32 %v1661, %v1812
        %v1819 = vadd.f32 %v1662, %v1786
        %v1820 = vadd.f32 %v1663, %v1800
        %v1821 = vadd.f32 %v1664, %v1814
        %v1822 = vld [vmem:[%s3] sm:$0xf]
        %1824 = vset.pattern.permute.xlu0 0
        %1825 = vperm.xlu0 %1824, %v1822
        %v1826 = vpop.permute.xlu0 %1825
        %v1828 = vmul.f32 %v1736, %v1826
        %v1829 = vmul.f32 %v1737, %v1826
        %v1830 = vmul.f32 %v1738, %v1826
        %v1831 = vld [vmem:[%s4] sm:$0xf]
        %1833 = vset.pattern.permute.xlu0 0
        %1834 = vperm.xlu0 %1833, %v1831
        %v1835 = vpop.permute.xlu0 %1834
        %v1837 = vadd.f32 %v1828, %v1835
        %v1838 = vadd.f32 %v1829, %v1835
        %v1839 = vadd.f32 %v1830, %v1835
        %v1840 = vxor.u32 %v1837, 2147483648
        %v1841 = vxor.u32 %v1838, 2147483648
        %v1842 = vxor.u32 %v1839, 2147483648
        %v1843 = vmul.f32 %v1840, 1.442695
        %v1844 = vpow.pop %v1843
        %v1845 = vmul.f32 %v1841, 1.442695
        %v1846 = vpow.pop %v1845
        %v1847 = vmul.f32 %v1842, 1.442695
        %v1848 = vpow.pop %v1847
        %v1849 = vadd.f32 %v1844, 1.0
        %v1850 = vadd.f32 %v1846, 1.0
        %v1851 = vadd.f32 %v1848, 1.0
        %v1852 = vrcp.pop %v1849
        %v1853 = vmul.f32 %v1849, %v1852
        %v1854 = vsub.f32 1.0, %v1853
        %v1855 = vmul.f32 %v1852, %v1854
        %v1856 = vadd.f32 %v1852, %v1855
        %vm1857 = vweird.f32 %v1849
        %vm1858 = vweird.f32 %v1852
        %vm1859 = vmor %vm1857, %vm1858
        %v1860 = vsel %vm1859, %v1852, %v1856
        %v1861 = vand.u32 2147483647, %v1849
        %vm1862 = vcmp.eq.f32.partialorder %v1861, 8.507059e+37
        %v1863 = vand.u32 %v1849, 2147483648
        %v1864 = vor.u32 1.1754944e-38, %v1863
        %v1865 = vsel %vm1862, %v1864, %v1860
        %v1866 = vmul.f32 1.0, %v1865
        %v1867 = vrcp.pop %v1850
        %v1868 = vmul.f32 %v1850, %v1867
        %v1869 = vsub.f32 1.0, %v1868
        %v1870 = vmul.f32 %v1867, %v1869
        %v1871 = vadd.f32 %v1867, %v1870
        %vm1872 = vweird.f32 %v1850
        %vm1873 = vweird.f32 %v1867
        %vm1874 = vmor %vm1872, %vm1873
        %v1875 = vsel %vm1874, %v1867, %v1871
        %v1876 = vand.u32 2147483647, %v1850
        %vm1877 = vcmp.eq.f32.partialorder %v1876, 8.507059e+37
        %v1878 = vand.u32 %v1850, 2147483648
        %v1879 = vor.u32 1.1754944e-38, %v1878
        %v1880 = vsel %vm1877, %v1879, %v1875
        %v1881 = vmul.f32 1.0, %v1880
        %v1882 = vrcp.pop %v1851
        %v1883 = vmul.f32 %v1851, %v1882
        %v1884 = vsub.f32 1.0, %v1883
        %v1885 = vmul.f32 %v1882, %v1884
        %v1886 = vadd.f32 %v1882, %v1885
        %vm1887 = vweird.f32 %v1851
        %vm1888 = vweird.f32 %v1882
        %vm1889 = vmor %vm1887, %vm1888
        %v1890 = vsel %vm1889, %v1882, %v1886
        %v1891 = vand.u32 2147483647, %v1851
        %vm1892 = vcmp.eq.f32.partialorder %v1891, 8.507059e+37
        %v1893 = vand.u32 %v1851, 2147483648
        %v1894 = vor.u32 1.1754944e-38, %v1893
        %v1895 = vsel %vm1892, %v1894, %v1890
        %v1896 = vmul.f32 1.0, %v1895
        %v1897 = vld [vmem:[%s7] sm:$0x7]
        %v1899 = vperm.slane %v1897, 0
        %v1900 = vperm.slane %v1897, 1
        %v1901 = vperm.slane %v1897, 2
        %v1905 = vmul.f32 %v1866, %v1899
        %v1906 = vmul.f32 %v1881, %v1900
        %v1907 = vmul.f32 %v1896, %v1901
        %v1908 = vld [vmem:[%s5] sm:$0xff]
        %v1909 = vld [vmem:[%s5 + $0x8] sm:$0xff]
        %1911 = vset.pattern.permute.xlu0 0
        %1912 = vperm.xlu0 %1911, %v1908
        %v1913 = vpop.permute.xlu0 %1912
        %1916 = vset.pattern.permute.xlu0 0
        %1917 = vperm.xlu0 %1916, %v1909
        %v1918 = vpop.permute.xlu0 %1917
        %v1920 = vmul.f32 %v1816, %v1913
        %v1921 = vmul.f32 %v1817, %v1913
        %v1922 = vmul.f32 %v1818, %v1913
        %v1923 = vmul.f32 %v1819, %v1918
        %v1924 = vmul.f32 %v1820, %v1918
        %v1925 = vmul.f32 %v1821, %v1918
        %v1926 = vld [vmem:[%s6] sm:$0xff]
        %v1927 = vld [vmem:[%s6 + $0x8] sm:$0xff]
        %1929 = vset.pattern.permute.xlu0 0
        %1930 = vperm.xlu0 %1929, %v1926
        %v1931 = vpop.permute.xlu0 %1930
        %1934 = vset.pattern.permute.xlu0 0
        %1935 = vperm.xlu0 %1934, %v1927
        %v1936 = vpop.permute.xlu0 %1935
        %v1938 = vadd.f32 %v1920, %v1931
        %v1939 = vadd.f32 %v1921, %v1931
        %v1940 = vadd.f32 %v1922, %v1931
        %v1941 = vadd.f32 %v1923, %v1936
        %v1942 = vadd.f32 %v1924, %v1936
        %v1943 = vadd.f32 %v1925, %v1936
        %v1944 = vld [vmem:[%s10] sm:$0xff]
        %v1945 = vld [vmem:[%s10 + $0x8] sm:$0xf]
        %v1946 = vld [vmem:[#allocation5] sm:$0xff]
        %v1947 = vld [vmem:[#allocation5 + $0x8] sm:$0xf]
        %v1948 = vperm.slane %v1938, 0
        %v1949 = vperm.slane %v1939, 0
        %v1950 = vperm.slane %v1940, 0
        %v1953 = vrot.slane %v1949, 4
        %vm1954 = vcmask 1043456
        %v1955 = vsel %vm1954, %v1948, %v1953
        %v1957 = vmul.f32 %v1946, %v1955
        %v1958 = vmul.f32 %v1947, %v1950
        %v1959 = vadd.f32 %v1944, %v1957
        %v1960 = vadd.f32 %v1945, %v1958
        %s1961 = scalar_lea.vmem [#allocation5], 12
        %v1962 = vld [vmem:[%s1961] sm:$0xff]
        %v1963 = vld [vmem:[%s1961 + $0x8] sm:$0xf]
        %v1964 = vperm.slane %v1938, 1
        %v1965 = vperm.slane %v1939, 1
        %v1966 = vperm.slane %v1940, 1
        %v1969 = vrot.slane %v1965, 4
        %v1970 = vsel %vm1954, %v1964, %v1969
        %v1972 = vmul.f32 %v1962, %v1970
        %v1973 = vmul.f32 %v1963, %v1966
        %v1974 = vadd.f32 %v1959, %v1972
        %v1975 = vadd.f32 %v1960, %v1973
        %s1976 = scalar_lea.vmem [#allocation5], 24
        %v1977 = vld [vmem:[%s1976] sm:$0xff]
        %v1978 = vld [vmem:[%s1976 + $0x8] sm:$0xf]
        %v1979 = vperm.slane %v1938, 2
        %v1980 = vperm.slane %v1939, 2
        %v1981 = vperm.slane %v1940, 2
        %v1984 = vrot.slane %v1980, 4
        %v1985 = vsel %vm1954, %v1979, %v1984
        %v1987 = vmul.f32 %v1977, %v1985
        %v1988 = vmul.f32 %v1978, %v1981
        %v1989 = vadd.f32 %v1974, %v1987
        %v1990 = vadd.f32 %v1975, %v1988
        %s1991 = scalar_lea.vmem [#allocation5], 36
        %v1992 = vld [vmem:[%s1991] sm:$0xff]
        %v1993 = vld [vmem:[%s1991 + $0x8] sm:$0xf]
        %v1994 = vperm.slane %v1938, 3
        %v1995 = vperm.slane %v1939, 3
        %v1996 = vperm.slane %v1940, 3
        %v1999 = vrot.slane %v1995, 4
        %v2000 = vsel %vm1954, %v1994, %v1999
        %v2002 = vmul.f32 %v1992, %v2000
        %v2003 = vmul.f32 %v1993, %v1996
        %v2004 = vadd.f32 %v1989, %v2002
        %v2005 = vadd.f32 %v1990, %v2003
        %2008 = vst [vmem:[#allocation1] ss:$2 sm:$0xff] %v2004
        %s2009 = scalar_lea.vmem [#allocation1], 16
        %2010 = vst [vmem:[%s2009] ss:$2 sm:$0xff] %v2005
        %v2011 = vld.sshfl [vmem:[#allocation1] sm:$0xff pattern:$0x75316420]
        %v2012 = vld.sshfl [vmem:[#allocation1 + $0x8] sm:$0xff pattern:$0x75316420]
        %v2013 = vld.sshfl [vmem:[#allocation1 + $0x10] sm:$0xff pattern:$0x75316420]
        %v2017 = vsel %vm1954, %v2011, -inf
        %v2018 = vrot.slane %v2017, 4
        %v2019 = vmax.f32 %v2017, %v2018
        %v2020 = vrot.slane %v2019, 2
        %v2021 = vmax.f32 %v2019, %v2020
        %v2022 = vrot.slane %v2021, 1
        %v2023 = vmax.f32 %v2021, %v2022
        %v2024 = vsel %vm1954, %v2012, -inf
        %v2025 = vrot.slane %v2024, 4
        %v2026 = vmax.f32 %v2024, %v2025
        %v2027 = vrot.slane %v2026, 2
        %v2028 = vmax.f32 %v2026, %v2027
        %v2029 = vrot.slane %v2028, 1
        %v2030 = vmax.f32 %v2028, %v2029
        %vm2031 = vcmask 257024
        %v2032 = vsel %vm2031, %v2013, -inf
        %v2033 = vrot.slane %v2032, 4
        %v2034 = vmax.f32 %v2032, %v2033
        %v2035 = vrot.slane %v2034, 2
        %v2036 = vmax.f32 %v2034, %v2035
        %v2037 = vrot.slane %v2036, 1
        %v2038 = vmax.f32 %v2036, %v2037
        %v2041 = vrot.slane %v2030, 4
        %v2042 = vsel %vm1954, %v2023, %v2041
        %v2044 = vsub.f32 %v2004, %v2042
        %v2045 = vsub.f32 %v2005, %v2038
        %v2046 = vmul.f32 %v2044, 1.442695
        %v2047 = vpow.pop %v2046
        %v2048 = vmul.f32 %v2045, 1.442695
        %v2049 = vpow.pop %v2048
        %2052 = vst [vmem:[#allocation1] ss:$2 sm:$0xff] %v2047
        %s2053 = scalar_lea.vmem [#allocation1], 16
        %2054 = vst [vmem:[%s2053] ss:$2 sm:$0xff] %v2049
        %v2055 = vld.sshfl [vmem:[#allocation1] sm:$0xff pattern:$0x75316420]
        %v2056 = vld.sshfl [vmem:[#allocation1 + $0x8] sm:$0xff pattern:$0x75316420]
        %v2057 = vld.sshfl [vmem:[#allocation1 + $0x10] sm:$0xff pattern:$0x75316420]
        %v2061 = vsel %vm1954, %v2055, 0.0
        %v2062 = vrot.slane %v2061, 4
        %v2063 = vadd.f32 %v2061, %v2062
        %v2064 = vrot.slane %v2063, 2
        %v2065 = vadd.f32 %v2063, %v2064
        %v2066 = vrot.slane %v2065, 1
        %v2067 = vadd.f32 %v2065, %v2066
        %v2068 = vsel %vm1954, %v2056, 0.0
        %v2069 = vrot.slane %v2068, 4
        %v2070 = vadd.f32 %v2068, %v2069
        %v2071 = vrot.slane %v2070, 2
        %v2072 = vadd.f32 %v2070, %v2071
        %v2073 = vrot.slane %v2072, 1
        %v2074 = vadd.f32 %v2072, %v2073
        %v2075 = vsel %vm2031, %v2057, 0.0
        %v2076 = vrot.slane %v2075, 4
        %v2077 = vadd.f32 %v2075, %v2076
        %v2078 = vrot.slane %v2077, 2
        %v2079 = vadd.f32 %v2077, %v2078
        %v2080 = vrot.slane %v2079, 1
        %v2081 = vadd.f32 %v2079, %v2080
        %v2082 = vrcp.pop %v2067
        %v2083 = vrcp.pop %v2074
        %v2084 = vrcp.pop %v2081
        %v2087 = vrot.slane %v2083, 4
        %v2088 = vsel %vm1954, %v2082, %v2087
        %v2090 = vmul.f32 %v2047, %v2088
        %v2091 = vmul.f32 %v2049, %v2084
        %v2092 = vperm.slane %v1905, 0
        %v2093 = vperm.slane %v1906, 0
        %v2094 = vperm.slane %v1907, 0
        %2097 = vst [vmem:[#allocation1] ss:$2 sm:$0xff] %v2090
        %s2098 = scalar_lea.vmem [#allocation1], 16
        %2099 = vst [vmem:[%s2098] ss:$2 sm:$0xff] %v2091
        %v2100 = vld.sshfl [vmem:[#allocation1] sm:$0xff pattern:$0x75316420]
        %v2101 = vld.sshfl [vmem:[#allocation1 + $0x8] sm:$0xff pattern:$0x75316420]
        %v2102 = vld.sshfl [vmem:[#allocation1 + $0x10] sm:$0xff pattern:$0x75316420]
        %v2106 = vmul.f32 %v2092, %v2100
        %v2107 = vmul.f32 %v2093, %v2101
        %v2108 = vmul.f32 %v2094, %v2102
        %v2109 = vadd.f32 %v2106, 0.0
        %v2110 = vadd.f32 %v2107, 0.0
        %v2111 = vadd.f32 %v2108, 0.0
        %v2112 = vadd.f32 %v1905, 0.0
        %v2113 = vadd.f32 %v1906, 0.0
        %v2114 = vadd.f32 %v1907, 0.0
        %v2115 = vld [vmem:[#allocation2] sm:$0xff]
        %v2116 = vld [vmem:[#allocation2 + $0x8] sm:$0xf]
        %v2117 = vmul.f32 %v2115, %v1955
        %v2118 = vmul.f32 %v2116, %v1950
        %s2119 = scalar_lea.vmem [#allocation2], 48
        %v2120 = vld [vmem:[%s2119] sm:$0xff]
        %v2121 = vld [vmem:[%s2119 + $0x8] sm:$0xf]
        %v2122 = vmul.f32 %v2120, %v1970
        %v2123 = vmul.f32 %v2121, %v1966
        %v2124 = vadd.f32 %v2117, %v2122
        %v2125 = vadd.f32 %v2118, %v2123
        %s2126 = scalar_lea.vmem [#allocation2], 96
        %v2127 = vld [vmem:[%s2126] sm:$0xff]
        %v2128 = vld [vmem:[%s2126 + $0x8] sm:$0xf]
        %v2129 = vmul.f32 %v2127, %v1985
        %v2130 = vmul.f32 %v2128, %v1981
        %v2131 = vadd.f32 %v2124, %v2129
        %v2132 = vadd.f32 %v2125, %v2130
        %s2133 = scalar_lea.vmem [#allocation2], 144
        %v2134 = vld [vmem:[%s2133] sm:$0xff]
        %v2135 = vld [vmem:[%s2133 + $0x8] sm:$0xf]
        %v2136 = vmul.f32 %v2134, %v2000
        %v2137 = vmul.f32 %v2135, %v1996
        %v2138 = vadd.f32 %v2131, %v2136
        %v2139 = vadd.f32 %v2132, %v2137
        %2142 = vst [vmem:[#allocation1] ss:$2 sm:$0xff] %v2138
        %s2143 = scalar_lea.vmem [#allocation1], 16
        %2144 = vst [vmem:[%s2143] ss:$2 sm:$0xff] %v2139
        %v2145 = vld.sshfl [vmem:[#allocation1] sm:$0xff pattern:$0x75316420]
        %v2146 = vld.sshfl [vmem:[#allocation1 + $0x8] sm:$0xff pattern:$0x75316420]
        %v2147 = vld.sshfl [vmem:[#allocation1 + $0x10] sm:$0xff pattern:$0x75316420]
        %v2151 = vmul.f32 %v2106, %v2145
        %v2152 = vmul.f32 %v2107, %v2146
        %v2153 = vmul.f32 %v2108, %v2147
        %v2154 = vadd.f32 %v2151, 0.0
        %v2155 = vadd.f32 %v2152, 0.0
        %v2156 = vadd.f32 %v2153, 0.0
        %s2157 = scalar_lea.vmem [#allocation2], 12
        %v2158 = vld [vmem:[%s2157] sm:$0xff]
        %v2159 = vld [vmem:[%s2157 + $0x8] sm:$0xf]
        %v2160 = vmul.f32 %v2158, %v1955
        %v2161 = vmul.f32 %v2159, %v1950
        %s2162 = scalar_lea.vmem [#allocation2], 60
        %v2163 = vld [vmem:[%s2162] sm:$0xff]
        %v2164 = vld [vmem:[%s2162 + $0x8] sm:$0xf]
        %v2165 = vmul.f32 %v2163, %v1970
        %v2166 = vmul.f32 %v2164, %v1966
        %v2167 = vadd.f32 %v2160, %v2165
        %v2168 = vadd.f32 %v2161, %v2166
        %s2169 = scalar_lea.vmem [#allocation2], 108
        %v2170 = vld [vmem:[%s2169] sm:$0xff]
        %v2171 = vld [vmem:[%s2169 + $0x8] sm:$0xf]
        %v2172 = vmul.f32 %v2170, %v1985
        %v2173 = vmul.f32 %v2171, %v1981
        %v2174 = vadd.f32 %v2167, %v2172
        %v2175 = vadd.f32 %v2168, %v2173
        %s2176 = scalar_lea.vmem [#allocation2], 156
        %v2177 = vld [vmem:[%s2176] sm:$0xff]
        %v2178 = vld [vmem:[%s2176 + $0x8] sm:$0xf]
        %v2179 = vmul.f32 %v2177, %v2000
        %v2180 = vmul.f32 %v2178, %v1996
        %v2181 = vadd.f32 %v2174, %v2179
        %v2182 = vadd.f32 %v2175, %v2180
        %2185 = vst [vmem:[#allocation1] ss:$2 sm:$0xff] %v2181
        %s2186 = scalar_lea.vmem [#allocation1], 16
        %2187 = vst [vmem:[%s2186] ss:$2 sm:$0xff] %v2182
        %v2188 = vld.sshfl [vmem:[#allocation1] sm:$0xff pattern:$0x75316420]
        %v2189 = vld.sshfl [vmem:[#allocation1 + $0x8] sm:$0xff pattern:$0x75316420]
        %v2190 = vld.sshfl [vmem:[#allocation1 + $0x10] sm:$0xff pattern:$0x75316420]
        %v2194 = vmul.f32 %v2106, %v2188
        %v2195 = vmul.f32 %v2107, %v2189
        %v2196 = vmul.f32 %v2108, %v2190
        %v2197 = vadd.f32 %v2194, 0.0
        %v2198 = vadd.f32 %v2195, 0.0
        %v2199 = vadd.f32 %v2196, 0.0
        %s2200 = scalar_lea.vmem [#allocation2], 24
        %v2201 = vld [vmem:[%s2200] sm:$0xff]
        %v2202 = vld [vmem:[%s2200 + $0x8] sm:$0xf]
        %v2203 = vmul.f32 %v2201, %v1955
        %v2204 = vmul.f32 %v2202, %v1950
        %s2205 = scalar_lea.vmem [#allocation2], 72
        %v2206 = vld [vmem:[%s2205] sm:$0xff]
        %v2207 = vld [vmem:[%s2205 + $0x8] sm:$0xf]
        %v2208 = vmul.f32 %v2206, %v1970
        %v2209 = vmul.f32 %v2207, %v1966
        %v2210 = vadd.f32 %v2203, %v2208
        %v2211 = vadd.f32 %v2204, %v2209
        %s2212 = scalar_lea.vmem [#allocation2], 120
        %v2213 = vld [vmem:[%s2212] sm:$0xff]
        %v2214 = vld [vmem:[%s2212 + $0x8] sm:$0xf]
        %v2215 = vmul.f32 %v2213, %v1985
        %v2216 = vmul.f32 %v2214, %v1981
        %v2217 = vadd.f32 %v2210, %v2215
        %v2218 = vadd.f32 %v2211, %v2216
        %s2219 = scalar_lea.vmem [#allocation2], 168
        %v2220 = vld [vmem:[%s2219] sm:$0xff]
        %v2221 = vld [vmem:[%s2219 + $0x8] sm:$0xf]
        %v2222 = vmul.f32 %v2220, %v2000
        %v2223 = vmul.f32 %v2221, %v1996
        %v2224 = vadd.f32 %v2217, %v2222
        %v2225 = vadd.f32 %v2218, %v2223
        %2228 = vst [vmem:[#allocation1] ss:$2 sm:$0xff] %v2224
        %s2229 = scalar_lea.vmem [#allocation1], 16
        %2230 = vst [vmem:[%s2229] ss:$2 sm:$0xff] %v2225
        %v2231 = vld.sshfl [vmem:[#allocation1] sm:$0xff pattern:$0x75316420]
        %v2232 = vld.sshfl [vmem:[#allocation1 + $0x8] sm:$0xff pattern:$0x75316420]
        %v2233 = vld.sshfl [vmem:[#allocation1 + $0x10] sm:$0xff pattern:$0x75316420]
        %v2237 = vmul.f32 %v2106, %v2231
        %v2238 = vmul.f32 %v2107, %v2232
        %v2239 = vmul.f32 %v2108, %v2233
        %v2240 = vadd.f32 %v2237, 0.0
        %v2241 = vadd.f32 %v2238, 0.0
        %v2242 = vadd.f32 %v2239, 0.0
        %s2243 = scalar_lea.vmem [#allocation2], 36
        %v2244 = vld [vmem:[%s2243] sm:$0xff]
        %v2245 = vld [vmem:[%s2243 + $0x8] sm:$0xf]
        %v2246 = vmul.f32 %v2244, %v1955
        %v2247 = vmul.f32 %v2245, %v1950
        %s2248 = scalar_lea.vmem [#allocation2], 84
        %v2249 = vld [vmem:[%s2248] sm:$0xff]
        %v2250 = vld [vmem:[%s2248 + $0x8] sm:$0xf]
        %v2251 = vmul.f32 %v2249, %v1970
        %v2252 = vmul.f32 %v2250, %v1966
        %v2253 = vadd.f32 %v2246, %v2251
        %v2254 = vadd.f32 %v2247, %v2252
        %s2255 = scalar_lea.vmem [#allocation2], 132
        %v2256 = vld [vmem:[%s2255] sm:$0xff]
        %v2257 = vld [vmem:[%s2255 + $0x8] sm:$0xf]
        %v2258 = vmul.f32 %v2256, %v1985
        %v2259 = vmul.f32 %v2257, %v1981
        %v2260 = vadd.f32 %v2253, %v2258
        %v2261 = vadd.f32 %v2254, %v2259
        %s2262 = scalar_lea.vmem [#allocation2], 180
        %v2263 = vld [vmem:[%s2262] sm:$0xff]
        %v2264 = vld [vmem:[%s2262 + $0x8] sm:$0xf]
        %v2265 = vmul.f32 %v2263, %v2000
        %v2266 = vmul.f32 %v2264, %v1996
        %v2267 = vadd.f32 %v2260, %v2265
        %v2268 = vadd.f32 %v2261, %v2266
        %2271 = vst [vmem:[#allocation1] ss:$2 sm:$0xff] %v2267
        %s2272 = scalar_lea.vmem [#allocation1], 16
        %2273 = vst [vmem:[%s2272] ss:$2 sm:$0xff] %v2268
        %v2274 = vld.sshfl [vmem:[#allocation1] sm:$0xff pattern:$0x75316420]
        %v2275 = vld.sshfl [vmem:[#allocation1 + $0x8] sm:$0xff pattern:$0x75316420]
        %v2276 = vld.sshfl [vmem:[#allocation1 + $0x10] sm:$0xff pattern:$0x75316420]
        %v2280 = vmul.f32 %v2106, %v2274
        %v2281 = vmul.f32 %v2107, %v2275
        %v2282 = vmul.f32 %v2108, %v2276
        %v2283 = vadd.f32 %v2280, 0.0
        %v2284 = vadd.f32 %v2281, 0.0
        %v2285 = vadd.f32 %v2282, 0.0
        %s2286 = scalar_lea.vmem %s10, 12
        %v2287 = vld [vmem:[%s2286] sm:$0xff]
        %v2288 = vld [vmem:[%s2286 + $0x8] sm:$0xf]
        %s2289 = scalar_lea.vmem [#allocation5], 48
        %v2290 = vld [vmem:[%s2289] sm:$0xff]
        %v2291 = vld [vmem:[%s2289 + $0x8] sm:$0xf]
        %v2292 = vperm.slane %v1938, 4
        %v2293 = vperm.slane %v1939, 4
        %v2294 = vperm.slane %v1940, 4
        %v2297 = vrot.slane %v2293, 4
        %v2298 = vsel %vm1954, %v2292, %v2297
        %v2300 = vmul.f32 %v2290, %v2298
        %v2301 = vmul.f32 %v2291, %v2294
        %v2302 = vadd.f32 %v2287, %v2300
        %v2303 = vadd.f32 %v2288, %v2301
        %s2304 = scalar_lea.vmem [#allocation5], 60
        %v2305 = vld [vmem:[%s2304] sm:$0xff]
        %v2306 = vld [vmem:[%s2304 + $0x8] sm:$0xf]
        %v2307 = vperm.slane %v1938, 5
        %v2308 = vperm.slane %v1939, 5
        %v2309 = vperm.slane %v1940, 5
        %v2312 = vrot.slane %v2308, 4
        %v2313 = vsel %vm1954, %v2307, %v2312
        %v2315 = vmul.f32 %v2305, %v2313
        %v2316 = vmul.f32 %v2306, %v2309
        %v2317 = vadd.f32 %v2302, %v2315
        %v2318 = vadd.f32 %v2303, %v2316
        %s2319 = scalar_lea.vmem [#allocation5], 72
        %v2320 = vld [vmem:[%s2319] sm:$0xff]
        %v2321 = vld [vmem:[%s2319 + $0x8] sm:$0xf]
        %v2322 = vperm.slane %v1938, 6
        %v2323 = vperm.slane %v1939, 6
        %v2324 = vperm.slane %v1940, 6
        %v2327 = vrot.slane %v2323, 4
        %v2328 = vsel %vm1954, %v2322, %v2327
        %v2330 = vmul.f32 %v2320, %v2328
        %v2331 = vmul.f32 %v2321, %v2324
        %v2332 = vadd.f32 %v2317, %v2330
        %v2333 = vadd.f32 %v2318, %v2331
        %s2334 = scalar_lea.vmem [#allocation5], 84
        %v2335 = vld [vmem:[%s2334] sm:$0xff]
        %v2336 = vld [vmem:[%s2334 + $0x8] sm:$0xf]
        %v2337 = vperm.slane %v1938, 7
        %v2338 = vperm.slane %v1939, 7
        %v2339 = vperm.slane %v1940, 7
        %v2342 = vrot.slane %v2338, 4
        %v2343 = vsel %vm1954, %v2337, %v2342
        %v2345 = vmul.f32 %v2335, %v2343
        %v2346 = vmul.f32 %v2336, %v2339
        %v2347 = vadd.f32 %v2332, %v2345
        %v2348 = vadd.f32 %v2333, %v2346
        %2351 = vst [vmem:[#allocation1] ss:$2 sm:$0xff] %v2347
        %s2352 = scalar_lea.vmem [#allocation1], 16
        %2353 = vst [vmem:[%s2352] ss:$2 sm:$0xff] %v2348
        %v2354 = vld.sshfl [vmem:[#allocation1] sm:$0xff pattern:$0x75316420]
        %v2355 = vld.sshfl [vmem:[#allocation1 + $0x8] sm:$0xff pattern:$0x75316420]
        %v2356 = vld.sshfl [vmem:[#allocation1 + $0x10] sm:$0xff pattern:$0x75316420]
        %v2360 = vsel %vm1954, %v2354, -inf
        %v2361 = vrot.slane %v2360, 4
        %v2362 = vmax.f32 %v2360, %v2361
        %v2363 = vrot.slane %v2362, 2
        %v2364 = vmax.f32 %v2362, %v2363
        %v2365 = vrot.slane %v2364, 1
        %v2366 = vmax.f32 %v2364, %v2365
        %v2367 = vsel %vm1954, %v2355, -inf
        %v2368 = vrot.slane %v2367, 4
        %v2369 = vmax.f32 %v2367, %v2368
        %v2370 = vrot.slane %v2369, 2
        %v2371 = vmax.f32 %v2369, %v2370
        %v2372 = vrot.slane %v2371, 1
        %v2373 = vmax.f32 %v2371, %v2372
        %v2374 = vsel %vm2031, %v2356, -inf
        %v2375 = vrot.slane %v2374, 4
        %v2376 = vmax.f32 %v2374, %v2375
        %v2377 = vrot.slane %v2376, 2
        %v2378 = vmax.f32 %v2376, %v2377
        %v2379 = vrot.slane %v2378, 1
        %v2380 = vmax.f32 %v2378, %v2379
        %v2383 = vrot.slane %v2373, 4
        %v2384 = vsel %vm1954, %v2366, %v2383
        %v2386 = vsub.f32 %v2347, %v2384
        %v2387 = vsub.f32 %v2348, %v2380
        %v2388 = vmul.f32 %v2386, 1.442695
        %v2389 = vpow.pop %v2388
        %v2390 = vmul.f32 %v2387, 1.442695
        %v2391 = vpow.pop %v2390
        %2394 = vst [vmem:[#allocation1] ss:$2 sm:$0xff] %v2389
        %s2395 = scalar_lea.vmem [#allocation1], 16
        %2396 = vst [vmem:[%s2395] ss:$2 sm:$0xff] %v2391
        %v2397 = vld.sshfl [vmem:[#allocation1] sm:$0xff pattern:$0x75316420]
        %v2398 = vld.sshfl [vmem:[#allocation1 + $0x8] sm:$0xff pattern:$0x75316420]
        %v2399 = vld.sshfl [vmem:[#allocation1 + $0x10] sm:$0xff pattern:$0x75316420]
        %v2403 = vsel %vm1954, %v2397, 0.0
        %v2404 = vrot.slane %v2403, 4
        %v2405 = vadd.f32 %v2403, %v2404
        %v2406 = vrot.slane %v2405, 2
        %v2407 = vadd.f32 %v2405, %v2406
        %v2408 = vrot.slane %v2407, 1
        %v2409 = vadd.f32 %v2407, %v2408
        %v2410 = vsel %vm1954, %v2398, 0.0
        %v2411 = vrot.slane %v2410, 4
        %v2412 = vadd.f32 %v2410, %v2411
        %v2413 = vrot.slane %v2412, 2
        %v2414 = vadd.f32 %v2412, %v2413
        %v2415 = vrot.slane %v2414, 1
        %v2416 = vadd.f32 %v2414, %v2415
        %v2417 = vsel %vm2031, %v2399, 0.0
        %v2418 = vrot.slane %v2417, 4
        %v2419 = vadd.f32 %v2417, %v2418
        %v2420 = vrot.slane %v2419, 2
        %v2421 = vadd.f32 %v2419, %v2420
        %v2422 = vrot.slane %v2421, 1
        %v2423 = vadd.f32 %v2421, %v2422
        %v2424 = vrcp.pop %v2409
        %v2425 = vrcp.pop %v2416
        %v2426 = vrcp.pop %v2423
        %v2429 = vrot.slane %v2425, 4
        %v2430 = vsel %vm1954, %v2424, %v2429
        %v2432 = vmul.f32 %v2389, %v2430
        %v2433 = vmul.f32 %v2391, %v2426
        %v2434 = vperm.slane %v1905, 1
        %v2435 = vperm.slane %v1906, 1
        %v2436 = vperm.slane %v1907, 1
        %2439 = vst [vmem:[#allocation1] ss:$2 sm:$0xff] %v2432
        %s2440 = scalar_lea.vmem [#allocation1], 16
        %2441 = vst [vmem:[%s2440] ss:$2 sm:$0xff] %v2433
        %v2442 = vld.sshfl [vmem:[#allocation1] sm:$0xff pattern:$0x75316420]
        %v2443 = vld.sshfl [vmem:[#allocation1 + $0x8] sm:$0xff pattern:$0x75316420]
        %v2444 = vld.sshfl [vmem:[#allocation1 + $0x10] sm:$0xff pattern:$0x75316420]
        %v2448 = vmul.f32 %v2434, %v2442
        %v2449 = vmul.f32 %v2435, %v2443
        %v2450 = vmul.f32 %v2436, %v2444
        %v2451 = vadd.f32 %v2109, %v2448
        %v2452 = vadd.f32 %v2110, %v2449
        %v2453 = vadd.f32 %v2111, %v2450
        %v2457 = vrot.slane %v1905, 1
        %v2458 = vrot.slane %v1906, 1
        %v2459 = vrot.slane %v1907, 1
        %v2463 = vadd.f32 %v2112, %v2457
        %v2464 = vadd.f32 %v2113, %v2458
        %v2465 = vadd.f32 %v2114, %v2459
        %s2466 = scalar_lea.vmem [#allocation2], 192
        %v2467 = vld [vmem:[%s2466] sm:$0xff]
        %v2468 = vld [vmem:[%s2466 + $0x8] sm:$0xf]
        %v2469 = vmul.f32 %v2467, %v2298
        %v2470 = vmul.f32 %v2468, %v2294
        %s2471 = scalar_lea.vmem [#allocation2], 240
        %v2472 = vld [vmem:[%s2471] sm:$0xff]
        %v2473 = vld [vmem:[%s2471 + $0x8] sm:$0xf]
        %v2474 = vmul.f32 %v2472, %v2313
        %v2475 = vmul.f32 %v2473, %v2309
        %v2476 = vadd.f32 %v2469, %v2474
        %v2477 = vadd.f32 %v2470, %v2475
        %s2478 = scalar_lea.vmem [#allocation2], 288
        %v2479 = vld [vmem:[%s2478] sm:$0xff]
        %v2480 = vld [vmem:[%s2478 + $0x8] sm:$0xf]
        %v2481 = vmul.f32 %v2479, %v2328
        %v2482 = vmul.f32 %v2480, %v2324
        %v2483 = vadd.f32 %v2476, %v2481
        %v2484 = vadd.f32 %v2477, %v2482
        %s2485 = scalar_lea.vmem [#allocation2], 336
        %v2486 = vld [vmem:[%s2485] sm:$0xff]
        %v2487 = vld [vmem:[%s2485 + $0x8] sm:$0xf]
        %v2488 = vmul.f32 %v2486, %v2343
        %v2489 = vmul.f32 %v2487, %v2339
        %v2490 = vadd.f32 %v2483, %v2488
        %v2491 = vadd.f32 %v2484, %v2489
        %2494 = vst [vmem:[#allocation1] ss:$2 sm:$0xff] %v2490
        %s2495 = scalar_lea.vmem [#allocation1], 16
        %2496 = vst [vmem:[%s2495] ss:$2 sm:$0xff] %v2491
        %v2497 = vld.sshfl [vmem:[#allocation1] sm:$0xff pattern:$0x75316420]
        %v2498 = vld.sshfl [vmem:[#allocation1 + $0x8] sm:$0xff pattern:$0x75316420]
        %v2499 = vld.sshfl [vmem:[#allocation1 + $0x10] sm:$0xff pattern:$0x75316420]
        %v2503 = vmul.f32 %v2448, %v2497
        %v2504 = vmul.f32 %v2449, %v2498
        %v2505 = vmul.f32 %v2450, %v2499
        %v2506 = vadd.f32 %v2154, %v2503
        %v2507 = vadd.f32 %v2155, %v2504
        %v2508 = vadd.f32 %v2156, %v2505
        %s2509 = scalar_lea.vmem [#allocation2], 204
        %v2510 = vld [vmem:[%s2509] sm:$0xff]
        %v2511 = vld [vmem:[%s2509 + $0x8] sm:$0xf]
        %v2512 = vmul.f32 %v2510, %v2298
        %v2513 = vmul.f32 %v2511, %v2294
        %s2514 = scalar_lea.vmem [#allocation2], 252
        %v2515 = vld [vmem:[%s2514] sm:$0xff]
        %v2516 = vld [vmem:[%s2514 + $0x8] sm:$0xf]
        %v2517 = vmul.f32 %v2515, %v2313
        %v2518 = vmul.f32 %v2516, %v2309
        %v2519 = vadd.f32 %v2512, %v2517
        %v2520 = vadd.f32 %v2513, %v2518
        %s2521 = scalar_lea.vmem [#allocation2], 300
        %v2522 = vld [vmem:[%s2521] sm:$0xff]
        %v2523 = vld [vmem:[%s2521 + $0x8] sm:$0xf]
        %v2524 = vmul.f32 %v2522, %v2328
        %v2525 = vmul.f32 %v2523, %v2324
        %v2526 = vadd.f32 %v2519, %v2524
        %v2527 = vadd.f32 %v2520, %v2525
        %s2528 = scalar_lea.vmem [#allocation2], 348
        %v2529 = vld [vmem:[%s2528] sm:$0xff]
        %v2530 = vld [vmem:[%s2528 + $0x8] sm:$0xf]
        %v2531 = vmul.f32 %v2529, %v2343
        %v2532 = vmul.f32 %v2530, %v2339
        %v2533 = vadd.f32 %v2526, %v2531
        %v2534 = vadd.f32 %v2527, %v2532
        %2537 = vst [vmem:[#allocation1] ss:$2 sm:$0xff] %v2533
        %s2538 = scalar_lea.vmem [#allocation1], 16
        %2539 = vst [vmem:[%s2538] ss:$2 sm:$0xff] %v2534
        %v2540 = vld.sshfl [vmem:[#allocation1] sm:$0xff pattern:$0x75316420]
        %v2541 = vld.sshfl [vmem:[#allocation1 + $0x8] sm:$0xff pattern:$0x75316420]
        %v2542 = vld.sshfl [vmem:[#allocation1 + $0x10] sm:$0xff pattern:$0x75316420]
        %v2546 = vmul.f32 %v2448, %v2540
        %v2547 = vmul.f32 %v2449, %v2541
        %v2548 = vmul.f32 %v2450, %v2542
        %v2549 = vadd.f32 %v2197, %v2546
        %v2550 = vadd.f32 %v2198, %v2547
        %v2551 = vadd.f32 %v2199, %v2548
        %s2552 = scalar_lea.vmem [#allocation2], 216
        %v2553 = vld [vmem:[%s2552] sm:$0xff]
        %v2554 = vld [vmem:[%s2552 + $0x8] sm:$0xf]
        %v2555 = vmul.f32 %v2553, %v2298
        %v2556 = vmul.f32 %v2554, %v2294
        %s2557 = scalar_lea.vmem [#allocation2], 264
        %v2558 = vld [vmem:[%s2557] sm:$0xff]
        %v2559 = vld [vmem:[%s2557 + $0x8] sm:$0xf]
        %v2560 = vmul.f32 %v2558, %v2313
        %v2561 = vmul.f32 %v2559, %v2309
        %v2562 = vadd.f32 %v2555, %v2560
        %v2563 = vadd.f32 %v2556, %v2561
        %s2564 = scalar_lea.vmem [#allocation2], 312
        %v2565 = vld [vmem:[%s2564] sm:$0xff]
        %v2566 = vld [vmem:[%s2564 + $0x8] sm:$0xf]
        %v2567 = vmul.f32 %v2565, %v2328
        %v2568 = vmul.f32 %v2566, %v2324
        %v2569 = vadd.f32 %v2562, %v2567
        %v2570 = vadd.f32 %v2563, %v2568
        %s2571 = scalar_lea.vmem [#allocation2], 360
        %v2572 = vld [vmem:[%s2571] sm:$0xff]
        %v2573 = vld [vmem:[%s2571 + $0x8] sm:$0xf]
        %v2574 = vmul.f32 %v2572, %v2343
        %v2575 = vmul.f32 %v2573, %v2339
        %v2576 = vadd.f32 %v2569, %v2574
        %v2577 = vadd.f32 %v2570, %v2575
        %2580 = vst [vmem:[#allocation1] ss:$2 sm:$0xff] %v2576
        %s2581 = scalar_lea.vmem [#allocation1], 16
        %2582 = vst [vmem:[%s2581] ss:$2 sm:$0xff] %v2577
        %v2583 = vld.sshfl [vmem:[#allocation1] sm:$0xff pattern:$0x75316420]
        %v2584 = vld.sshfl [vmem:[#allocation1 + $0x8] sm:$0xff pattern:$0x75316420]
        %v2585 = vld.sshfl [vmem:[#allocation1 + $0x10] sm:$0xff pattern:$0x75316420]
        %v2589 = vmul.f32 %v2448, %v2583
        %v2590 = vmul.f32 %v2449, %v2584
        %v2591 = vmul.f32 %v2450, %v2585
        %v2592 = vadd.f32 %v2240, %v2589
        %v2593 = vadd.f32 %v2241, %v2590
        %v2594 = vadd.f32 %v2242, %v2591
        %s2595 = scalar_lea.vmem [#allocation2], 228
        %v2596 = vld [vmem:[%s2595] sm:$0xff]
        %v2597 = vld [vmem:[%s2595 + $0x8] sm:$0xf]
        %v2598 = vmul.f32 %v2596, %v2298
        %v2599 = vmul.f32 %v2597, %v2294
        %s2600 = scalar_lea.vmem [#allocation2], 276
        %v2601 = vld [vmem:[%s2600] sm:$0xff]
        %v2602 = vld [vmem:[%s2600 + $0x8] sm:$0xf]
        %v2603 = vmul.f32 %v2601, %v2313
        %v2604 = vmul.f32 %v2602, %v2309
        %v2605 = vadd.f32 %v2598, %v2603
        %v2606 = vadd.f32 %v2599, %v2604
        %s2607 = scalar_lea.vmem [#allocation2], 324
        %v2608 = vld [vmem:[%s2607] sm:$0xff]
        %v2609 = vld [vmem:[%s2607 + $0x8] sm:$0xf]
        %v2610 = vmul.f32 %v2608, %v2328
        %v2611 = vmul.f32 %v2609, %v2324
        %v2612 = vadd.f32 %v2605, %v2610
        %v2613 = vadd.f32 %v2606, %v2611
        %s2614 = scalar_lea.vmem [#allocation2], 372
        %v2615 = vld [vmem:[%s2614] sm:$0xff]
        %v2616 = vld [vmem:[%s2614 + $0x8] sm:$0xf]
        %v2617 = vmul.f32 %v2615, %v2343
        %v2618 = vmul.f32 %v2616, %v2339
        %v2619 = vadd.f32 %v2612, %v2617
        %v2620 = vadd.f32 %v2613, %v2618
        %2623 = vst [vmem:[#allocation1] ss:$2 sm:$0xff] %v2619
        %s2624 = scalar_lea.vmem [#allocation1], 16
        %2625 = vst [vmem:[%s2624] ss:$2 sm:$0xff] %v2620
        %v2626 = vld.sshfl [vmem:[#allocation1] sm:$0xff pattern:$0x75316420]
        %v2627 = vld.sshfl [vmem:[#allocation1 + $0x8] sm:$0xff pattern:$0x75316420]
        %v2628 = vld.sshfl [vmem:[#allocation1 + $0x10] sm:$0xff pattern:$0x75316420]
        %v2632 = vmul.f32 %v2448, %v2626
        %v2633 = vmul.f32 %v2449, %v2627
        %v2634 = vmul.f32 %v2450, %v2628
        %v2635 = vadd.f32 %v2283, %v2632
        %v2636 = vadd.f32 %v2284, %v2633
        %v2637 = vadd.f32 %v2285, %v2634
        %s2638 = scalar_lea.vmem %s10, 24
        %v2639 = vld [vmem:[%s2638] sm:$0xff]
        %v2640 = vld [vmem:[%s2638 + $0x8] sm:$0xf]
        %s2641 = scalar_lea.vmem [#allocation5], 96
        %v2642 = vld [vmem:[%s2641] sm:$0xff]
        %v2643 = vld [vmem:[%s2641 + $0x8] sm:$0xf]
        %v2644 = vperm.slane %v1941, 0
        %v2645 = vperm.slane %v1942, 0
        %v2646 = vperm.slane %v1943, 0
        %v2649 = vrot.slane %v2645, 4
        %v2650 = vsel %vm1954, %v2644, %v2649
        %v2652 = vmul.f32 %v2642, %v2650
        %v2653 = vmul.f32 %v2643, %v2646
        %v2654 = vadd.f32 %v2639, %v2652
        %v2655 = vadd.f32 %v2640, %v2653
        %s2656 = scalar_lea.vmem [#allocation5], 108
        %v2657 = vld [vmem:[%s2656] sm:$0xff]
        %v2658 = vld [vmem:[%s2656 + $0x8] sm:$0xf]
        %v2659 = vperm.slane %v1941, 1
        %v2660 = vperm.slane %v1942, 1
        %v2661 = vperm.slane %v1943, 1
        %v2664 = vrot.slane %v2660, 4
        %v2665 = vsel %vm1954, %v2659, %v2664
        %v2667 = vmul.f32 %v2657, %v2665
        %v2668 = vmul.f32 %v2658, %v2661
        %v2669 = vadd.f32 %v2654, %v2667
        %v2670 = vadd.f32 %v2655, %v2668
        %s2671 = scalar_lea.vmem [#allocation5], 120
        %v2672 = vld [vmem:[%s2671] sm:$0xff]
        %v2673 = vld [vmem:[%s2671 + $0x8] sm:$0xf]
        %v2674 = vperm.slane %v1941, 2
        %v2675 = vperm.slane %v1942, 2
        %v2676 = vperm.slane %v1943, 2
        %v2679 = vrot.slane %v2675, 4
        %v2680 = vsel %vm1954, %v2674, %v2679
        %v2682 = vmul.f32 %v2672, %v2680
        %v2683 = vmul.f32 %v2673, %v2676
        %v2684 = vadd.f32 %v2669, %v2682
        %v2685 = vadd.f32 %v2670, %v2683
        %s2686 = scalar_lea.vmem [#allocation5], 132
        %v2687 = vld [vmem:[%s2686] sm:$0xff]
        %v2688 = vld [vmem:[%s2686 + $0x8] sm:$0xf]
        %v2689 = vperm.slane %v1941, 3
        %v2690 = vperm.slane %v1942, 3
        %v2691 = vperm.slane %v1943, 3
        %v2694 = vrot.slane %v2690, 4
        %v2695 = vsel %vm1954, %v2689, %v2694
        %v2697 = vmul.f32 %v2687, %v2695
        %v2698 = vmul.f32 %v2688, %v2691
        %v2699 = vadd.f32 %v2684, %v2697
        %v2700 = vadd.f32 %v2685, %v2698
        %2703 = vst [vmem:[#allocation1] ss:$2 sm:$0xff] %v2699
        %s2704 = scalar_lea.vmem [#allocation1], 16
        %2705 = vst [vmem:[%s2704] ss:$2 sm:$0xff] %v2700
        %v2706 = vld.sshfl [vmem:[#allocation1] sm:$0xff pattern:$0x75316420]
        %v2707 = vld.sshfl [vmem:[#allocation1 + $0x8] sm:$0xff pattern:$0x75316420]
        %v2708 = vld.sshfl [vmem:[#allocation1 + $0x10] sm:$0xff pattern:$0x75316420]
        %v2712 = vsel %vm1954, %v2706, -inf
        %v2713 = vrot.slane %v2712, 4
        %v2714 = vmax.f32 %v2712, %v2713
        %v2715 = vrot.slane %v2714, 2
        %v2716 = vmax.f32 %v2714, %v2715
        %v2717 = vrot.slane %v2716, 1
        %v2718 = vmax.f32 %v2716, %v2717
        %v2719 = vsel %vm1954, %v2707, -inf
        %v2720 = vrot.slane %v2719, 4
        %v2721 = vmax.f32 %v2719, %v2720
        %v2722 = vrot.slane %v2721, 2
        %v2723 = vmax.f32 %v2721, %v2722
        %v2724 = vrot.slane %v2723, 1
        %v2725 = vmax.f32 %v2723, %v2724
        %v2726 = vsel %vm2031, %v2708, -inf
        %v2727 = vrot.slane %v2726, 4
        %v2728 = vmax.f32 %v2726, %v2727
        %v2729 = vrot.slane %v2728, 2
        %v2730 = vmax.f32 %v2728, %v2729
        %v2731 = vrot.slane %v2730, 1
        %v2732 = vmax.f32 %v2730, %v2731
        %v2735 = vrot.slane %v2725, 4
        %v2736 = vsel %vm1954, %v2718, %v2735
        %v2738 = vsub.f32 %v2699, %v2736
        %v2739 = vsub.f32 %v2700, %v2732
        %v2740 = vmul.f32 %v2738, 1.442695
        %v2741 = vpow.pop %v2740
        %v2742 = vmul.f32 %v2739, 1.442695
        %v2743 = vpow.pop %v2742
        %2746 = vst [vmem:[#allocation1] ss:$2 sm:$0xff] %v2741
        %s2747 = scalar_lea.vmem [#allocation1], 16
        %2748 = vst [vmem:[%s2747] ss:$2 sm:$0xff] %v2743
        %v2749 = vld.sshfl [vmem:[#allocation1] sm:$0xff pattern:$0x75316420]
        %v2750 = vld.sshfl [vmem:[#allocation1 + $0x8] sm:$0xff pattern:$0x75316420]
        %v2751 = vld.sshfl [vmem:[#allocation1 + $0x10] sm:$0xff pattern:$0x75316420]
        %v2755 = vsel %vm1954, %v2749, 0.0
        %v2756 = vrot.slane %v2755, 4
        %v2757 = vadd.f32 %v2755, %v2756
        %v2758 = vrot.slane %v2757, 2
        %v2759 = vadd.f32 %v2757, %v2758
        %v2760 = vrot.slane %v2759, 1
        %v2761 = vadd.f32 %v2759, %v2760
        %v2762 = vsel %vm1954, %v2750, 0.0
        %v2763 = vrot.slane %v2762, 4
        %v2764 = vadd.f32 %v2762, %v2763
        %v2765 = vrot.slane %v2764, 2
        %v2766 = vadd.f32 %v2764, %v2765
        %v2767 = vrot.slane %v2766, 1
        %v2768 = vadd.f32 %v2766, %v2767
        %v2769 = vsel %vm2031, %v2751, 0.0
        %v2770 = vrot.slane %v2769, 4
        %v2771 = vadd.f32 %v2769, %v2770
        %v2772 = vrot.slane %v2771, 2
        %v2773 = vadd.f32 %v2771, %v2772
        %v2774 = vrot.slane %v2773, 1
        %v2775 = vadd.f32 %v2773, %v2774
        %v2776 = vrcp.pop %v2761
        %v2777 = vrcp.pop %v2768
        %v2778 = vrcp.pop %v2775
        %v2781 = vrot.slane %v2777, 4
        %v2782 = vsel %vm1954, %v2776, %v2781
        %v2784 = vmul.f32 %v2741, %v2782
        %v2785 = vmul.f32 %v2743, %v2778
        %v2786 = vperm.slane %v1905, 2
        %v2787 = vperm.slane %v1906, 2
        %v2788 = vperm.slane %v1907, 2
        %2791 = vst [vmem:[#allocation1] ss:$2 sm:$0xff] %v2784
        %s2792 = scalar_lea.vmem [#allocation1], 16
        %2793 = vst [vmem:[%s2792] ss:$2 sm:$0xff] %v2785
        %v2794 = vld.sshfl [vmem:[#allocation1] sm:$0xff pattern:$0x75316420]
        %v2795 = vld.sshfl [vmem:[#allocation1 + $0x8] sm:$0xff pattern:$0x75316420]
        %v2796 = vld.sshfl [vmem:[#allocation1 + $0x10] sm:$0xff pattern:$0x75316420]
        %v2800 = vmul.f32 %v2786, %v2794
        %v2801 = vmul.f32 %v2787, %v2795
        %v2802 = vmul.f32 %v2788, %v2796
        %v2803 = vadd.f32 %v2451, %v2800
        %v2804 = vadd.f32 %v2452, %v2801
        %v2805 = vadd.f32 %v2453, %v2802
        %v2806 = vrot.slane %v1905, 2
        %v2807 = vrot.slane %v1906, 2
        %v2808 = vrot.slane %v1907, 2
        %v2812 = vadd.f32 %v2463, %v2806
        %v2813 = vadd.f32 %v2464, %v2807
        %v2814 = vadd.f32 %v2465, %v2808
        %s2815 = scalar_lea.vmem [#allocation2], 384
        %v2816 = vld [vmem:[%s2815] sm:$0xff]
        %v2817 = vld [vmem:[%s2815 + $0x8] sm:$0xf]
        %v2818 = vmul.f32 %v2816, %v2650
        %v2819 = vmul.f32 %v2817, %v2646
        %s2820 = scalar_lea.vmem [#allocation2], 432
        %v2821 = vld [vmem:[%s2820] sm:$0xff]
        %v2822 = vld [vmem:[%s2820 + $0x8] sm:$0xf]
        %v2823 = vmul.f32 %v2821, %v2665
        %v2824 = vmul.f32 %v2822, %v2661
        %v2825 = vadd.f32 %v2818, %v2823
        %v2826 = vadd.f32 %v2819, %v2824
        %s2827 = scalar_lea.vmem [#allocation2], 480
        %v2828 = vld [vmem:[%s2827] sm:$0xff]
        %v2829 = vld [vmem:[%s2827 + $0x8] sm:$0xf]
        %v2830 = vmul.f32 %v2828, %v2680
        %v2831 = vmul.f32 %v2829, %v2676
        %v2832 = vadd.f32 %v2825, %v2830
        %v2833 = vadd.f32 %v2826, %v2831
        %s2834 = scalar_lea.vmem [#allocation2], 528
        %v2835 = vld [vmem:[%s2834] sm:$0xff]
        %v2836 = vld [vmem:[%s2834 + $0x8] sm:$0xf]
        %v2837 = vmul.f32 %v2835, %v2695
        %v2838 = vmul.f32 %v2836, %v2691
        %v2839 = vadd.f32 %v2832, %v2837
        %v2840 = vadd.f32 %v2833, %v2838
        %2843 = vst [vmem:[#allocation1] ss:$2 sm:$0xff] %v2839
        %s2844 = scalar_lea.vmem [#allocation1], 16
        %2845 = vst [vmem:[%s2844] ss:$2 sm:$0xff] %v2840
        %v2846 = vld.sshfl [vmem:[#allocation1] sm:$0xff pattern:$0x75316420]
        %v2847 = vld.sshfl [vmem:[#allocation1 + $0x8] sm:$0xff pattern:$0x75316420]
        %v2848 = vld.sshfl [vmem:[#allocation1 + $0x10] sm:$0xff pattern:$0x75316420]
        %v2852 = vmul.f32 %v2800, %v2846
        %v2853 = vmul.f32 %v2801, %v2847
        %v2854 = vmul.f32 %v2802, %v2848
        %v2855 = vadd.f32 %v2506, %v2852
        %v2856 = vadd.f32 %v2507, %v2853
        %v2857 = vadd.f32 %v2508, %v2854
        %s2858 = scalar_lea.vmem [#allocation2], 396
        %v2859 = vld [vmem:[%s2858] sm:$0xff]
        %v2860 = vld [vmem:[%s2858 + $0x8] sm:$0xf]
        %v2861 = vmul.f32 %v2859, %v2650
        %v2862 = vmul.f32 %v2860, %v2646
        %s2863 = scalar_lea.vmem [#allocation2], 444
        %v2864 = vld [vmem:[%s2863] sm:$0xff]
        %v2865 = vld [vmem:[%s2863 + $0x8] sm:$0xf]
        %v2866 = vmul.f32 %v2864, %v2665
        %v2867 = vmul.f32 %v2865, %v2661
        %v2868 = vadd.f32 %v2861, %v2866
        %v2869 = vadd.f32 %v2862, %v2867
        %s2870 = scalar_lea.vmem [#allocation2], 492
        %v2871 = vld [vmem:[%s2870] sm:$0xff]
        %v2872 = vld [vmem:[%s2870 + $0x8] sm:$0xf]
        %v2873 = vmul.f32 %v2871, %v2680
        %v2874 = vmul.f32 %v2872, %v2676
        %v2875 = vadd.f32 %v2868, %v2873
        %v2876 = vadd.f32 %v2869, %v2874
        %s2877 = scalar_lea.vmem [#allocation2], 540
        %v2878 = vld [vmem:[%s2877] sm:$0xff]
        %v2879 = vld [vmem:[%s2877 + $0x8] sm:$0xf]
        %v2880 = vmul.f32 %v2878, %v2695
        %v2881 = vmul.f32 %v2879, %v2691
        %v2882 = vadd.f32 %v2875, %v2880
        %v2883 = vadd.f32 %v2876, %v2881
        %2886 = vst [vmem:[#allocation1] ss:$2 sm:$0xff] %v2882
        %s2887 = scalar_lea.vmem [#allocation1], 16
        %2888 = vst [vmem:[%s2887] ss:$2 sm:$0xff] %v2883
        %v2889 = vld.sshfl [vmem:[#allocation1] sm:$0xff pattern:$0x75316420]
        %v2890 = vld.sshfl [vmem:[#allocation1 + $0x8] sm:$0xff pattern:$0x75316420]
        %v2891 = vld.sshfl [vmem:[#allocation1 + $0x10] sm:$0xff pattern:$0x75316420]
        %v2895 = vmul.f32 %v2800, %v2889
        %v2896 = vmul.f32 %v2801, %v2890
        %v2897 = vmul.f32 %v2802, %v2891
        %v2898 = vadd.f32 %v2549, %v2895
        %v2899 = vadd.f32 %v2550, %v2896
        %v2900 = vadd.f32 %v2551, %v2897
        %s2901 = scalar_lea.vmem [#allocation2], 408
        %v2902 = vld [vmem:[%s2901] sm:$0xff]
        %v2903 = vld [vmem:[%s2901 + $0x8] sm:$0xf]
        %v2904 = vmul.f32 %v2902, %v2650
        %v2905 = vmul.f32 %v2903, %v2646
        %s2906 = scalar_lea.vmem [#allocation2], 456
        %v2907 = vld [vmem:[%s2906] sm:$0xff]
        %v2908 = vld [vmem:[%s2906 + $0x8] sm:$0xf]
        %v2909 = vmul.f32 %v2907, %v2665
        %v2910 = vmul.f32 %v2908, %v2661
        %v2911 = vadd.f32 %v2904, %v2909
        %v2912 = vadd.f32 %v2905, %v2910
        %s2913 = scalar_lea.vmem [#allocation2], 504
        %v2914 = vld [vmem:[%s2913] sm:$0xff]
        %v2915 = vld [vmem:[%s2913 + $0x8] sm:$0xf]
        %v2916 = vmul.f32 %v2914, %v2680
        %v2917 = vmul.f32 %v2915, %v2676
        %v2918 = vadd.f32 %v2911, %v2916
        %v2919 = vadd.f32 %v2912, %v2917
        %s2920 = scalar_lea.vmem [#allocation2], 552
        %v2921 = vld [vmem:[%s2920] sm:$0xff]
        %v2922 = vld [vmem:[%s2920 + $0x8] sm:$0xf]
        %v2923 = vmul.f32 %v2921, %v2695
        %v2924 = vmul.f32 %v2922, %v2691
        %v2925 = vadd.f32 %v2918, %v2923
        %v2926 = vadd.f32 %v2919, %v2924
        %2929 = vst [vmem:[#allocation1] ss:$2 sm:$0xff] %v2925
        %s2930 = scalar_lea.vmem [#allocation1], 16
        %2931 = vst [vmem:[%s2930] ss:$2 sm:$0xff] %v2926
        %v2932 = vld.sshfl [vmem:[#allocation1] sm:$0xff pattern:$0x75316420]
        %v2933 = vld.sshfl [vmem:[#allocation1 + $0x8] sm:$0xff pattern:$0x75316420]
        %v2934 = vld.sshfl [vmem:[#allocation1 + $0x10] sm:$0xff pattern:$0x75316420]
        %v2938 = vmul.f32 %v2800, %v2932
        %v2939 = vmul.f32 %v2801, %v2933
        %v2940 = vmul.f32 %v2802, %v2934
        %v2941 = vadd.f32 %v2592, %v2938
        %v2942 = vadd.f32 %v2593, %v2939
        %v2943 = vadd.f32 %v2594, %v2940
        %s2944 = scalar_lea.vmem [#allocation2], 420
        %v2945 = vld [vmem:[%s2944] sm:$0xff]
        %v2946 = vld [vmem:[%s2944 + $0x8] sm:$0xf]
        %v2947 = vmul.f32 %v2945, %v2650
        %v2948 = vmul.f32 %v2946, %v2646
        %s2949 = scalar_lea.vmem [#allocation2], 468
        %v2950 = vld [vmem:[%s2949] sm:$0xff]
        %v2951 = vld [vmem:[%s2949 + $0x8] sm:$0xf]
        %v2952 = vmul.f32 %v2950, %v2665
        %v2953 = vmul.f32 %v2951, %v2661
        %v2954 = vadd.f32 %v2947, %v2952
        %v2955 = vadd.f32 %v2948, %v2953
        %s2956 = scalar_lea.vmem [#allocation2], 516
        %v2957 = vld [vmem:[%s2956] sm:$0xff]
        %v2958 = vld [vmem:[%s2956 + $0x8] sm:$0xf]
        %v2959 = vmul.f32 %v2957, %v2680
        %v2960 = vmul.f32 %v2958, %v2676
        %v2961 = vadd.f32 %v2954, %v2959
        %v2962 = vadd.f32 %v2955, %v2960
        %s2963 = scalar_lea.vmem [#allocation2], 564
        %v2964 = vld [vmem:[%s2963] sm:$0xff]
        %v2965 = vld [vmem:[%s2963 + $0x8] sm:$0xf]
        %v2966 = vmul.f32 %v2964, %v2695
        %v2967 = vmul.f32 %v2965, %v2691
        %v2968 = vadd.f32 %v2961, %v2966
        %v2969 = vadd.f32 %v2962, %v2967
        %2972 = vst [vmem:[#allocation1] ss:$2 sm:$0xff] %v2968
        %s2973 = scalar_lea.vmem [#allocation1], 16
        %2974 = vst [vmem:[%s2973] ss:$2 sm:$0xff] %v2969
        %v2975 = vld.sshfl [vmem:[#allocation1] sm:$0xff pattern:$0x75316420]
        %v2976 = vld.sshfl [vmem:[#allocation1 + $0x8] sm:$0xff pattern:$0x75316420]
        %v2977 = vld.sshfl [vmem:[#allocation1 + $0x10] sm:$0xff pattern:$0x75316420]
        %v2981 = vmul.f32 %v2800, %v2975
        %v2982 = vmul.f32 %v2801, %v2976
        %v2983 = vmul.f32 %v2802, %v2977
        %v2984 = vadd.f32 %v2635, %v2981
        %v2985 = vadd.f32 %v2636, %v2982
        %v2986 = vadd.f32 %v2637, %v2983
        %s2987 = scalar_lea.vmem %s10, 36
        %v2988 = vld [vmem:[%s2987] sm:$0xff]
        %v2989 = vld [vmem:[%s2987 + $0x8] sm:$0xf]
        %s2990 = scalar_lea.vmem [#allocation5], 144
        %v2991 = vld [vmem:[%s2990] sm:$0xff]
        %v2992 = vld [vmem:[%s2990 + $0x8] sm:$0xf]
        %v2993 = vperm.slane %v1941, 4
        %v2994 = vperm.slane %v1942, 4
        %v2995 = vperm.slane %v1943, 4
        %v2998 = vrot.slane %v2994, 4
        %v2999 = vsel %vm1954, %v2993, %v2998
        %v3001 = vmul.f32 %v2991, %v2999
        %v3002 = vmul.f32 %v2992, %v2995
        %v3003 = vadd.f32 %v2988, %v3001
        %v3004 = vadd.f32 %v2989, %v3002
        %s3005 = scalar_lea.vmem [#allocation5], 156
        %v3006 = vld [vmem:[%s3005] sm:$0xff]
        %v3007 = vld [vmem:[%s3005 + $0x8] sm:$0xf]
        %v3008 = vperm.slane %v1941, 5
        %v3009 = vperm.slane %v1942, 5
        %v3010 = vperm.slane %v1943, 5
        %v3013 = vrot.slane %v3009, 4
        %v3014 = vsel %vm1954, %v3008, %v3013
        %v3016 = vmul.f32 %v3006, %v3014
        %v3017 = vmul.f32 %v3007, %v3010
        %v3018 = vadd.f32 %v3003, %v3016
        %v3019 = vadd.f32 %v3004, %v3017
        %s3020 = scalar_lea.vmem [#allocation5], 168
        %v3021 = vld [vmem:[%s3020] sm:$0xff]
        %v3022 = vld [vmem:[%s3020 + $0x8] sm:$0xf]
        %v3023 = vperm.slane %v1941, 6
        %v3024 = vperm.slane %v1942, 6
        %v3025 = vperm.slane %v1943, 6
        %v3028 = vrot.slane %v3024, 4
        %v3029 = vsel %vm1954, %v3023, %v3028
        %v3031 = vmul.f32 %v3021, %v3029
        %v3032 = vmul.f32 %v3022, %v3025
        %v3033 = vadd.f32 %v3018, %v3031
        %v3034 = vadd.f32 %v3019, %v3032
        %s3035 = scalar_lea.vmem [#allocation5], 180
        %v3036 = vld [vmem:[%s3035] sm:$0xff]
        %v3037 = vld [vmem:[%s3035 + $0x8] sm:$0xf]
        %v3038 = vperm.slane %v1941, 7
        %v3039 = vperm.slane %v1942, 7
        %v3040 = vperm.slane %v1943, 7
        %v3043 = vrot.slane %v3039, 4
        %v3044 = vsel %vm1954, %v3038, %v3043
        %v3046 = vmul.f32 %v3036, %v3044
        %v3047 = vmul.f32 %v3037, %v3040
        %v3048 = vadd.f32 %v3033, %v3046
        %v3049 = vadd.f32 %v3034, %v3047
        %3052 = vst [vmem:[#allocation1] ss:$2 sm:$0xff] %v3048
        %s3053 = scalar_lea.vmem [#allocation1], 16
        %3054 = vst [vmem:[%s3053] ss:$2 sm:$0xff] %v3049
        %v3055 = vld.sshfl [vmem:[#allocation1] sm:$0xff pattern:$0x75316420]
        %v3056 = vld.sshfl [vmem:[#allocation1 + $0x8] sm:$0xff pattern:$0x75316420]
        %v3057 = vld.sshfl [vmem:[#allocation1 + $0x10] sm:$0xff pattern:$0x75316420]
        %v3061 = vsel %vm1954, %v3055, -inf
        %v3062 = vrot.slane %v3061, 4
        %v3063 = vmax.f32 %v3061, %v3062
        %v3064 = vrot.slane %v3063, 2
        %v3065 = vmax.f32 %v3063, %v3064
        %v3066 = vrot.slane %v3065, 1
        %v3067 = vmax.f32 %v3065, %v3066
        %v3068 = vsel %vm1954, %v3056, -inf
        %v3069 = vrot.slane %v3068, 4
        %v3070 = vmax.f32 %v3068, %v3069
        %v3071 = vrot.slane %v3070, 2
        %v3072 = vmax.f32 %v3070, %v3071
        %v3073 = vrot.slane %v3072, 1
        %v3074 = vmax.f32 %v3072, %v3073
        %v3075 = vsel %vm2031, %v3057, -inf
        %v3076 = vrot.slane %v3075, 4
        %v3077 = vmax.f32 %v3075, %v3076
        %v3078 = vrot.slane %v3077, 2
        %v3079 = vmax.f32 %v3077, %v3078
        %v3080 = vrot.slane %v3079, 1
        %v3081 = vmax.f32 %v3079, %v3080
        %v3084 = vrot.slane %v3074, 4
        %v3085 = vsel %vm1954, %v3067, %v3084
        %v3087 = vsub.f32 %v3048, %v3085
        %v3088 = vsub.f32 %v3049, %v3081
        %v3089 = vmul.f32 %v3087, 1.442695
        %v3090 = vpow.pop %v3089
        %v3091 = vmul.f32 %v3088, 1.442695
        %v3092 = vpow.pop %v3091
        %3095 = vst [vmem:[#allocation1] ss:$2 sm:$0xff] %v3090
        %s3096 = scalar_lea.vmem [#allocation1], 16
        %3097 = vst [vmem:[%s3096] ss:$2 sm:$0xff] %v3092
        %v3098 = vld.sshfl [vmem:[#allocation1] sm:$0xff pattern:$0x75316420]
        %v3099 = vld.sshfl [vmem:[#allocation1 + $0x8] sm:$0xff pattern:$0x75316420]
        %v3100 = vld.sshfl [vmem:[#allocation1 + $0x10] sm:$0xff pattern:$0x75316420]
        %v3104 = vsel %vm1954, %v3098, 0.0
        %v3105 = vrot.slane %v3104, 4
        %v3106 = vadd.f32 %v3104, %v3105
        %v3107 = vrot.slane %v3106, 2
        %v3108 = vadd.f32 %v3106, %v3107
        %v3109 = vrot.slane %v3108, 1
        %v3110 = vadd.f32 %v3108, %v3109
        %v3111 = vsel %vm1954, %v3099, 0.0
        %v3112 = vrot.slane %v3111, 4
        %v3113 = vadd.f32 %v3111, %v3112
        %v3114 = vrot.slane %v3113, 2
        %v3115 = vadd.f32 %v3113, %v3114
        %v3116 = vrot.slane %v3115, 1
        %v3117 = vadd.f32 %v3115, %v3116
        %v3118 = vsel %vm2031, %v3100, 0.0
        %v3119 = vrot.slane %v3118, 4
        %v3120 = vadd.f32 %v3118, %v3119
        %v3121 = vrot.slane %v3120, 2
        %v3122 = vadd.f32 %v3120, %v3121
        %v3123 = vrot.slane %v3122, 1
        %v3124 = vadd.f32 %v3122, %v3123
        %v3125 = vrcp.pop %v3110
        %v3126 = vrcp.pop %v3117
        %v3127 = vrcp.pop %v3124
        %v3130 = vrot.slane %v3126, 4
        %v3131 = vsel %vm1954, %v3125, %v3130
        %v3133 = vmul.f32 %v3090, %v3131
        %v3134 = vmul.f32 %v3092, %v3127
        %v3135 = vperm.slane %v1905, 3
        %v3136 = vperm.slane %v1906, 3
        %v3137 = vperm.slane %v1907, 3
        %3140 = vst [vmem:[#allocation1] ss:$2 sm:$0xff] %v3133
        %s3141 = scalar_lea.vmem [#allocation1], 16
        %3142 = vst [vmem:[%s3141] ss:$2 sm:$0xff] %v3134
        %v3143 = vld.sshfl [vmem:[#allocation1] sm:$0xff pattern:$0x75316420]
        %v3144 = vld.sshfl [vmem:[#allocation1 + $0x8] sm:$0xff pattern:$0x75316420]
        %v3145 = vld.sshfl [vmem:[#allocation1 + $0x10] sm:$0xff pattern:$0x75316420]
        %v3149 = vmul.f32 %v3135, %v3143
        %v3150 = vmul.f32 %v3136, %v3144
        %v3151 = vmul.f32 %v3137, %v3145
        %v3152 = vadd.f32 %v2803, %v3149
        %v3153 = vadd.f32 %v2804, %v3150
        %v3154 = vadd.f32 %v2805, %v3151
        %v3155 = vrot.slane %v1905, 3
        %v3156 = vrot.slane %v1906, 3
        %v3157 = vrot.slane %v1907, 3
        %v3161 = vadd.f32 %v2812, %v3155
        %v3162 = vadd.f32 %v2813, %v3156
        %v3163 = vadd.f32 %v2814, %v3157
        %s3164 = scalar_lea.vmem [#allocation2], 576
        %v3165 = vld [vmem:[%s3164] sm:$0xff]
        %v3166 = vld [vmem:[%s3164 + $0x8] sm:$0xf]
        %v3167 = vmul.f32 %v3165, %v2999
        %v3168 = vmul.f32 %v3166, %v2995
        %s3169 = scalar_lea.vmem [#allocation2], 624
        %v3170 = vld [vmem:[%s3169] sm:$0xff]
        %v3171 = vld [vmem:[%s3169 + $0x8] sm:$0xf]
        %v3172 = vmul.f32 %v3170, %v3014
        %v3173 = vmul.f32 %v3171, %v3010
        %v3174 = vadd.f32 %v3167, %v3172
        %v3175 = vadd.f32 %v3168, %v3173
        %s3176 = scalar_lea.vmem [#allocation2], 672
        %v3177 = vld [vmem:[%s3176] sm:$0xff]
        %v3178 = vld [vmem:[%s3176 + $0x8] sm:$0xf]
        %v3179 = vmul.f32 %v3177, %v3029
        %v3180 = vmul.f32 %v3178, %v3025
        %v3181 = vadd.f32 %v3174, %v3179
        %v3182 = vadd.f32 %v3175, %v3180
        %s3183 = scalar_lea.vmem [#allocation2], 720
        %v3184 = vld [vmem:[%s3183] sm:$0xff]
        %v3185 = vld [vmem:[%s3183 + $0x8] sm:$0xf]
        %v3186 = vmul.f32 %v3184, %v3044
        %v3187 = vmul.f32 %v3185, %v3040
        %v3188 = vadd.f32 %v3181, %v3186
        %v3189 = vadd.f32 %v3182, %v3187
        %3192 = vst [vmem:[#allocation1] ss:$2 sm:$0xff] %v3188
        %s3193 = scalar_lea.vmem [#allocation1], 16
        %3194 = vst [vmem:[%s3193] ss:$2 sm:$0xff] %v3189
        %v3195 = vld.sshfl [vmem:[#allocation1] sm:$0xff pattern:$0x75316420]
        %v3196 = vld.sshfl [vmem:[#allocation1 + $0x8] sm:$0xff pattern:$0x75316420]
        %v3197 = vld.sshfl [vmem:[#allocation1 + $0x10] sm:$0xff pattern:$0x75316420]
        %v3201 = vmul.f32 %v3149, %v3195
        %v3202 = vmul.f32 %v3150, %v3196
        %v3203 = vmul.f32 %v3151, %v3197
        %v3204 = vadd.f32 %v2855, %v3201
        %v3205 = vadd.f32 %v2856, %v3202
        %v3206 = vadd.f32 %v2857, %v3203
        %s3207 = scalar_lea.vmem [#allocation2], 588
        %v3208 = vld [vmem:[%s3207] sm:$0xff]
        %v3209 = vld [vmem:[%s3207 + $0x8] sm:$0xf]
        %v3210 = vmul.f32 %v3208, %v2999
        %v3211 = vmul.f32 %v3209, %v2995
        %s3212 = scalar_lea.vmem [#allocation2], 636
        %v3213 = vld [vmem:[%s3212] sm:$0xff]
        %v3214 = vld [vmem:[%s3212 + $0x8] sm:$0xf]
        %v3215 = vmul.f32 %v3213, %v3014
        %v3216 = vmul.f32 %v3214, %v3010
        %v3217 = vadd.f32 %v3210, %v3215
        %v3218 = vadd.f32 %v3211, %v3216
        %s3219 = scalar_lea.vmem [#allocation2], 684
        %v3220 = vld [vmem:[%s3219] sm:$0xff]
        %v3221 = vld [vmem:[%s3219 + $0x8] sm:$0xf]
        %v3222 = vmul.f32 %v3220, %v3029
        %v3223 = vmul.f32 %v3221, %v3025
        %v3224 = vadd.f32 %v3217, %v3222
        %v3225 = vadd.f32 %v3218, %v3223
        %s3226 = scalar_lea.vmem [#allocation2], 732
        %v3227 = vld [vmem:[%s3226] sm:$0xff]
        %v3228 = vld [vmem:[%s3226 + $0x8] sm:$0xf]
        %v3229 = vmul.f32 %v3227, %v3044
        %v3230 = vmul.f32 %v3228, %v3040
        %v3231 = vadd.f32 %v3224, %v3229
        %v3232 = vadd.f32 %v3225, %v3230
        %3235 = vst [vmem:[#allocation1] ss:$2 sm:$0xff] %v3231
        %s3236 = scalar_lea.vmem [#allocation1], 16
        %3237 = vst [vmem:[%s3236] ss:$2 sm:$0xff] %v3232
        %v3238 = vld.sshfl [vmem:[#allocation1] sm:$0xff pattern:$0x75316420]
        %v3239 = vld.sshfl [vmem:[#allocation1 + $0x8] sm:$0xff pattern:$0x75316420]
        %v3240 = vld.sshfl [vmem:[#allocation1 + $0x10] sm:$0xff pattern:$0x75316420]
        %v3244 = vmul.f32 %v3149, %v3238
        %v3245 = vmul.f32 %v3150, %v3239
        %v3246 = vmul.f32 %v3151, %v3240
        %v3247 = vadd.f32 %v2898, %v3244
        %v3248 = vadd.f32 %v2899, %v3245
        %v3249 = vadd.f32 %v2900, %v3246
        %s3250 = scalar_lea.vmem [#allocation2], 600
        %v3251 = vld [vmem:[%s3250] sm:$0xff]
        %v3252 = vld [vmem:[%s3250 + $0x8] sm:$0xf]
        %v3253 = vmul.f32 %v3251, %v2999
        %v3254 = vmul.f32 %v3252, %v2995
        %s3255 = scalar_lea.vmem [#allocation2], 648
        %v3256 = vld [vmem:[%s3255] sm:$0xff]
        %v3257 = vld [vmem:[%s3255 + $0x8] sm:$0xf]
        %v3258 = vmul.f32 %v3256, %v3014
        %v3259 = vmul.f32 %v3257, %v3010
        %v3260 = vadd.f32 %v3253, %v3258
        %v3261 = vadd.f32 %v3254, %v3259
        %s3262 = scalar_lea.vmem [#allocation2], 696
        %v3263 = vld [vmem:[%s3262] sm:$0xff]
        %v3264 = vld [vmem:[%s3262 + $0x8] sm:$0xf]
        %v3265 = vmul.f32 %v3263, %v3029
        %v3266 = vmul.f32 %v3264, %v3025
        %v3267 = vadd.f32 %v3260, %v3265
        %v3268 = vadd.f32 %v3261, %v3266
        %s3269 = scalar_lea.vmem [#allocation2], 744
        %v3270 = vld [vmem:[%s3269] sm:$0xff]
        %v3271 = vld [vmem:[%s3269 + $0x8] sm:$0xf]
        %v3272 = vmul.f32 %v3270, %v3044
        %v3273 = vmul.f32 %v3271, %v3040
        %v3274 = vadd.f32 %v3267, %v3272
        %v3275 = vadd.f32 %v3268, %v3273
        %3278 = vst [vmem:[#allocation1] ss:$2 sm:$0xff] %v3274
        %s3279 = scalar_lea.vmem [#allocation1], 16
        %3280 = vst [vmem:[%s3279] ss:$2 sm:$0xff] %v3275
        %v3281 = vld.sshfl [vmem:[#allocation1] sm:$0xff pattern:$0x75316420]
        %v3282 = vld.sshfl [vmem:[#allocation1 + $0x8] sm:$0xff pattern:$0x75316420]
        %v3283 = vld.sshfl [vmem:[#allocation1 + $0x10] sm:$0xff pattern:$0x75316420]
        %v3287 = vmul.f32 %v3149, %v3281
        %v3288 = vmul.f32 %v3150, %v3282
        %v3289 = vmul.f32 %v3151, %v3283
        %v3290 = vadd.f32 %v2941, %v3287
        %v3291 = vadd.f32 %v2942, %v3288
        %v3292 = vadd.f32 %v2943, %v3289
        %s3293 = scalar_lea.vmem [#allocation2], 612
        %v3294 = vld [vmem:[%s3293] sm:$0xff]
        %v3295 = vld [vmem:[%s3293 + $0x8] sm:$0xf]
        %v3296 = vmul.f32 %v3294, %v2999
        %v3297 = vmul.f32 %v3295, %v2995
        %s3298 = scalar_lea.vmem [#allocation2], 660
        %v3299 = vld [vmem:[%s3298] sm:$0xff]
        %v3300 = vld [vmem:[%s3298 + $0x8] sm:$0xf]
        %v3301 = vmul.f32 %v3299, %v3014
        %v3302 = vmul.f32 %v3300, %v3010
        %v3303 = vadd.f32 %v3296, %v3301
        %v3304 = vadd.f32 %v3297, %v3302
        %s3305 = scalar_lea.vmem [#allocation2], 708
        %v3306 = vld [vmem:[%s3305] sm:$0xff]
        %v3307 = vld [vmem:[%s3305 + $0x8] sm:$0xf]
        %v3308 = vmul.f32 %v3306, %v3029
        %v3309 = vmul.f32 %v3307, %v3025
        %v3310 = vadd.f32 %v3303, %v3308
        %v3311 = vadd.f32 %v3304, %v3309
        %s3312 = scalar_lea.vmem [#allocation2], 756
        %v3313 = vld [vmem:[%s3312] sm:$0xff]
        %v3314 = vld [vmem:[%s3312 + $0x8] sm:$0xf]
        %v3315 = vmul.f32 %v3313, %v3044
        %v3316 = vmul.f32 %v3314, %v3040
        %v3317 = vadd.f32 %v3310, %v3315
        %v3318 = vadd.f32 %v3311, %v3316
        %3321 = vst [vmem:[#allocation1] ss:$2 sm:$0xff] %v3317
        %s3322 = scalar_lea.vmem [#allocation1], 16
        %3323 = vst [vmem:[%s3322] ss:$2 sm:$0xff] %v3318
        %v3324 = vld.sshfl [vmem:[#allocation1] sm:$0xff pattern:$0x75316420]
        %v3325 = vld.sshfl [vmem:[#allocation1 + $0x8] sm:$0xff pattern:$0x75316420]
        %v3326 = vld.sshfl [vmem:[#allocation1 + $0x10] sm:$0xff pattern:$0x75316420]
        %v3330 = vmul.f32 %v3149, %v3324
        %v3331 = vmul.f32 %v3150, %v3325
        %v3332 = vmul.f32 %v3151, %v3326
        %v3333 = vadd.f32 %v2984, %v3330
        %v3334 = vadd.f32 %v2985, %v3331
        %v3335 = vadd.f32 %v2986, %v3332
        %v3336 = vsel %vm1954, %v3152, 0.0
        %v3337 = vsel %vm1954, %v3153, 0.0
        %v3338 = vadd.f32 %v3336, %v3337
        %v3339 = vsel %vm2031, %v3154, 0.0
        %v3340 = vadd.f32 %v3338, %v3339
        %3341 = vadd.xlane.f32.xlu0 %v3340
        %v3342 = vpop.xlane.xlu0 %3341
        %vm3343 = vcmask 1040384
        %v3344 = vsel %vm3343, %v3161, 0.0
        %v3345 = vsel %vm3343, %v3162, 0.0
        %v3346 = vadd.f32 %v3344, %v3345
        %vm3347 = vcmask 253952
        %v3348 = vsel %vm3347, %v3163, 0.0
        %v3349 = vadd.f32 %v3346, %v3348
        %3350 = vadd.xlane.f32.xlu0 %v3349
        %v3351 = vpop.xlane.xlu0 %3350
        %v3352 = vrcp.pop %v3342
        %v3353 = vrcp.pop %v3351
        %v3354 = vperm.slane %v3353, 0
        %v3355 = vmul.f32 %v3342, %v3354
        %vm3356 = vcmask 3072
        %3357 = vst.msk [vmem:[%s456] sm:$0xf] %vm3356, %v3355
        %v3358 = vsel %vm1954, %v3204, 0.0
        %v3359 = vsel %vm1954, %v3205, 0.0
        %v3360 = vadd.f32 %v3358, %v3359
        %v3361 = vsel %vm2031, %v3206, 0.0
        %v3362 = vadd.f32 %v3360, %v3361
        %3363 = vadd.xlane.f32.xlu0 %v3362
        %v3364 = vpop.xlane.xlu0 %3363
        %v3365 = vmul.f32 %v3364, %v3352
        %v3366 = vsel %vm1954, %v3247, 0.0
        %v3367 = vsel %vm1954, %v3248, 0.0
        %v3368 = vadd.f32 %v3366, %v3367
        %v3369 = vsel %vm2031, %v3249, 0.0
        %v3370 = vadd.f32 %v3368, %v3369
        %3371 = vadd.xlane.f32.xlu0 %v3370
        %v3372 = vpop.xlane.xlu0 %3371
        %v3373 = vmul.f32 %v3372, %v3352
        %v3374 = vsel %vm1954, %v3290, 0.0
        %v3375 = vsel %vm1954, %v3291, 0.0
        %v3376 = vadd.f32 %v3374, %v3375
        %v3377 = vsel %vm2031, %v3292, 0.0
        %v3378 = vadd.f32 %v3376, %v3377
        %3379 = vadd.xlane.f32.xlu0 %v3378
        %v3380 = vpop.xlane.xlu0 %3379
        %v3381 = vmul.f32 %v3380, %v3352
        %v3382 = vsel %vm1954, %v3333, 0.0
        %v3383 = vsel %vm1954, %v3334, 0.0
        %v3384 = vadd.f32 %v3382, %v3383
        %v3385 = vsel %vm2031, %v3335, 0.0
        %v3386 = vadd.f32 %v3384, %v3385
        %3387 = vadd.xlane.f32.xlu0 %v3386
        %v3388 = vpop.xlane.xlu0 %3387
        %v3389 = vmul.f32 %v3388, %v3352
        %vm3390 = vcmask 7168
        %v3391 = vsel %vm3390, %v3365, %v3373
        %vm3392 = vcmask 15360
        %v3393 = vsel %vm3392, %v3391, %v3381
        %vm3394 = vcmask 23552
        %v3395 = vsel %vm3394, %v3393, %v3389
        %vm3396 = vcmask 27648
        %3397 = vst.msk [vmem:[%s447] sm:$0xf] %vm3396, %v3395
        %p3398 = scmp.lt.s32.totalorder %s29, 1
        %s3399 = scalar_select %p3398, %s29, 1
        %s3400 = smul.addr %s3399, 4
        %s3401 = scalar_lea.vmem %s11, %s3400
        %s3402 = sand.u32 %s299, 1
        %s3403 = scalar_lea.sflag [#allocation4], %s3402
        %s3404 = sand.u32 %s299, 1
        %s3405 = smul.addr %s3404, 4
        %s3406 = scalar_lea.vmem [#allocation7], %s3405
        // Predicated region
        $region73: #{tpu_custom_call.1} parent=63 // pred_check
          %p3407 = pneg %p283
        $region74: #{tpu_custom_call.1} parent=63 // pred_check_branch
          %3409 = sbr.rel (%p3407) target = $region76
        $region75: #{tpu_custom_call.1} parent=63 // pred_region
          _
        $region76: #{tpu_custom_call.1} parent=63 // pred_fallthru
          _
        // Predicated region
        $region77: #{tpu_custom_call.1} parent=63 // pred_check
          %p3410 = pneg %p309
        $region78: #{tpu_custom_call.1} parent=63 // pred_check_branch
          %3412 = sbr.rel (%p3410) target = $region80
        $region79: #{tpu_custom_call.1} parent=63 // pred_region
          %3414 = vsyncadd %s3403, 0
          %s3415 = smul.addr %s29, 4
          %s3416 = scalar_lea.hbm %s12, %s3415
          %s3418 = sshll.u32 %s3406, 4
          %s3419 = int_to_ptr.vmem [resolvable:$true] %s3418
          %s3420 = sshll.u32 %s3416, 4
          %s3421 = int_to_ptr.hbm [resolvable:$true] %s3420
          %3423 = dma.vmem_to_hbm [thread:$0]  %s3419, 64, %s3421, %s3403
        $region80: #{tpu_custom_call.1} parent=63 // pred_fallthru
          _
      $region64: #{tpu_custom_call.1} parent=5 // pred_fallthru
        _
      %p3424 = scmp.le.s32.totalorder 2, %s24
      // Predicated region
      $region81: #{tpu_custom_call.1} parent=5 // pred_check
        %p3425 = pneg %p3424
      $region82: #{tpu_custom_call.1} parent=5 // pred_check_branch
        %3427 = sbr.rel (%p3425) target = $region84
      $region83: #{tpu_custom_call.1} parent=5 // pred_region
        %s3428 = ssub.s32 %s24, 2
        // Predicated region
        $region85: #{tpu_custom_call.1} parent=83 // pred_check
          %p3429 = pneg %p289
        $region86: #{tpu_custom_call.1} parent=83 // pred_check_branch
          %3431 = sbr.rel (%p3429) target = $region88
        $region87: #{tpu_custom_call.1} parent=83 // pred_region
          %p3432 = scmp.lt.s32.totalorder %s30, 1
          %s3433 = scalar_select %p3432, %s30, 1
          %s3434 = smul.addr %s3433, 4
          %s3435 = scalar_lea.vmem %s11, %s3434
        $region88: #{tpu_custom_call.1} parent=83 // pred_fallthru
          _
        // Predicated region
        $region89: #{tpu_custom_call.1} parent=83 // pred_check
          %p3436 = pneg %p315
        $region90: #{tpu_custom_call.1} parent=83 // pred_check_branch
          %3438 = sbr.rel (%p3436) target = $region92
        $region91: #{tpu_custom_call.1} parent=83 // pred_region
          %s3439 = sand.u32 %s300, 1
          %s3440 = scalar_lea.sflag [#allocation4], %s3439
          %s3441 = sand.u32 %s300, 1
          %s3442 = smul.addr %s3441, 4
          %s3443 = scalar_lea.vmem [#allocation7], %s3442
          %3445 = dma.done %s3440, 64
        $region92: #{tpu_custom_call.1} parent=83 // pred_fallthru
          _
      $region84: #{tpu_custom_call.1} parent=5 // pred_fallthru
        _
    $region6: #{tpu_custom_call.1} parent=1 // loop_footer
      %s28 = sadd.s32 1, %s24
    $region7: #{tpu_custom_call.1} parent=1 // loop_footer_branch
      %23 = sbr.rel target = $region3
    $region8: #{tpu_custom_call.1} parent=1 // loop_exit
      _
    %3446 = vsyncpa [#allocation3], 1
    %s3447 = scalar_lea.sflag [#allocation3], 1
    %3448 = vsyncpa %s3447, 1
    %3449 = vsyncpa [#allocation6], 1
    %3450 = vsyncpa [#allocation4], 1
    %s3451 = scalar_lea.sflag [#allocation4], 1
    %3452 = vsyncpa %s3451, 1

</llo_original>
